<compile_context>
chip_gen: v7x
topology: tpu7x:2x2x1
jax: 0.10.0
libtpu: 0.0.40
codegen_flags: <defaults>
</compile_context>

<pallas_src>
import jax
import jax.numpy as jnp
from jax.experimental import pallas as pl
from jax.experimental.pallas import tpu as pltpu

IN_FEATURES = 32
OUT_FEATURES = 16
ACT_SIZE = 8                      # act_fun.get_size()
BATCH = 512

_KP1 = ACT_SIZE + 1
_KDIM = _KP1 * IN_FEATURES        # fused contraction dim = 288

# Concrete ActivationFunction: Gaussian RBF basis, centers in [-1, 1].
_CENTERS = [(-1.0 + 2.0 * k / (ACT_SIZE - 1)) for k in range(ACT_SIZE)]
_SIGMA = 2.0 / (ACT_SIZE - 1)
_INV_2SIG2 = 1.0 / (2.0 * _SIGMA * _SIGMA)


def _kan_linear_kernel(x_ref, weff_ref, o_ref, phi_ref):
    """One batch tile, natural layout:
         Phi (TB, 288) built in a VMEM scratch, then
         out (TB, OUT) = Phi @ W_eff (288, OUT)   -- one fused MXU matmul.
    """
    x = x_ref[...].astype(jnp.float32)                    # (TB, IN)

    # Residual branch (SiLU): rows of Phi at lane offset 0.
    phi_ref[:, pl.ds(0, IN_FEATURES)] = x * jax.nn.sigmoid(x)

    # Basis branch: Gaussian RBF, static unroll over the K centers (EUP exp).
    for k in range(ACT_SIZE):
        d = x - _CENTERS[k]
        phi_ref[:, pl.ds((k + 1) * IN_FEATURES, IN_FEATURES)] = (
            jnp.exp(-(d * d) * _INV_2SIG2))

    # Single fused matmul, f32 operands, f32 accumulate.
    o_ref[...] = jnp.dot(
        phi_ref[...], weff_ref[...],
        preferred_element_type=jnp.float32).astype(o_ref.dtype)


def precompute_w_eff(w, c):
    """Build the effective weight once per parameter update (NOT per forward).

    Rows [0, IN)              -> w              (residual branch)
    Rows [(k+1)*IN,(k+2)*IN)  -> w * c[:, :, k]  (basis-k branch)
    """
    wc = jnp.transpose(c, (2, 0, 1)) * w[None, :, :]       # (K, IN, OUT)
    w_eff = jnp.concatenate([w[None, :, :], wc], axis=0)   # (K+1, IN, OUT)
    return w_eff.reshape(_KDIM, OUT_FEATURES).astype(jnp.float32)


def _pick_batch_tile(batch):
    # Two (or more) parallel steps at TB=256 keep both v7x TensorCores busy
    # while amortizing per-step overhead; otherwise one full-extent tile.
    if batch % 256 == 0 and batch >= 512:
        return 256
    return batch


def linear_kan(x, w_eff):
    """x: (B, IN) f32, w_eff: (288, OUT) f32 (from precompute_w_eff) -> (B, OUT)."""
    batch, in_f = x.shape
    assert in_f == IN_FEATURES
    kdim, out_f = w_eff.shape
    assert kdim == _KDIM and out_f == OUT_FEATURES

    tb = _pick_batch_tile(batch)
    grid = (batch // tb,)

    cost = pl.CostEstimate(
        flops=2 * batch * _KDIM * out_f,
        transcendentals=batch * IN_FEATURES * _KP1,
        bytes_accessed=4 * (batch * IN_FEATURES + batch * out_f
                            + _KDIM * out_f),
    )

    return pl.pallas_call(
        _kan_linear_kernel,
        out_shape=jax.ShapeDtypeStruct((batch, out_f), x.dtype),
        grid=grid,
        in_specs=[
            pl.BlockSpec((tb, IN_FEATURES), lambda i: (i, 0)),       # natural x
            pl.BlockSpec((_KDIM, OUT_FEATURES), lambda i: (0, 0)),   # invariant
        ],
        out_specs=pl.BlockSpec((tb, OUT_FEATURES), lambda i: (i, 0)),
        scratch_shapes=[pltpu.VMEM((tb, _KDIM), jnp.float32)],
        compiler_params=pltpu.CompilerParams(
            dimension_semantics=("parallel",)),
        cost_estimate=cost,
    )(x, w_eff)


def _reference(x, w, c):
    """Pure-JAX mirror of the torch forward (for correctness check)."""
    xe = x[:, :, None]                                             # (B, IN, 1)
    centers = jnp.asarray(_CENTERS, jnp.float32)                   # (K,)
    phi = jnp.exp(-((xe[..., None] - centers) ** 2) * _INV_2SIG2)  # (B, IN, 1, K)
    res = xe * jax.nn.sigmoid(xe)                                  # (B, IN, 1)
    return jnp.sum(w * (res + jnp.sum(c * phi, axis=-1)), axis=1)  # (B, OUT)


if __name__ == "__main__":
    key = jax.random.PRNGKey(0)
    kx, kw, kc = jax.random.split(key, 3)

    # Deterministic parameter init mirroring the module's __init__:
    #   xavier_normal_(w): std = sqrt(2 / (fan_in + fan_out));  normal_(c, 0, 0.1)
    w_std = (2.0 / (IN_FEATURES + OUT_FEATURES)) ** 0.5
    w = jax.random.normal(kw, (IN_FEATURES, OUT_FEATURES), jnp.float32) * w_std
    c = jax.random.normal(kc, (IN_FEATURES, OUT_FEATURES, ACT_SIZE),
                          jnp.float32) * 0.1

    # Built once (cached across forwards); not part of the per-call hot path.
    w_eff = jax.block_until_ready(precompute_w_eff(w, c))

    fwd = jax.jit(linear_kan)

    # Main case (tiled, grid=(2,)) and a small full-extent-tile case.
    for batch in (BATCH, 64):
        x = jax.random.normal(jax.random.fold_in(kx, batch),
                              (batch, IN_FEATURES), jnp.float32)
        out = jax.block_until_ready(fwd(x, w_eff))
        ref = _reference(x, w, c)
        assert out.shape == (batch, OUT_FEATURES)
        max_err = jnp.max(jnp.abs(out - ref))
        # f32 operands + f32 accumulation -> tight tolerance.
        assert jnp.allclose(out, ref, atol=2e-3, rtol=2e-3), (
            f"batch={batch} max abs err = {max_err}")

    print("KERNEL_OK")
</pallas_src>

<mosaic_0001>
module attributes {stable_mosaic.version = 11 : i64} {
  func.func @_kan_linear_kernel(%arg0: i32, %arg1: memref<256x32xf32, #tpu.memory_space<vmem>>, %arg2: memref<288x16xf32, #tpu.memory_space<vmem>>, %arg3: memref<256x16xf32, #tpu.memory_space<vmem>>, %arg4: memref<256x288xf32, #tpu.memory_space<vmem>>) attributes {dimension_semantics = [#tpu.dimension_semantics<parallel>], iteration_bounds = array<i64: 2>, scalar_prefetch = 0 : i64, scratch_operands = 1 : i64, tpu.core_type = #tpu.core_type<tc>, window_params = [{transform_indices = @transform_0, window_bounds = array<i64: 256, 32>}, {pipeline_mode = #tpu.pipeline_mode<synchronous>, transform_indices = @transform_1, window_bounds = array<i64: 288, 16>}, {transform_indices = @transform_2, window_bounds = array<i64: 256, 16>}]} {
    %c0 = arith.constant 0 : index
    %c0_0 = arith.constant 0 : index
    %0 = vector.load %arg1[%c0, %c0_0] : memref<256x32xf32, #tpu.memory_space<vmem>>, vector<256x32xf32>
    %1 = arith.negf %0 : vector<256x32xf32>
    %2 = math.exp %1 : vector<256x32xf32>
    %cst = arith.constant 1.000000e+00 : f32
    %3 = vector.broadcast %cst : f32 to vector<256x32xf32>
    %4 = arith.addf %3, %2 : vector<256x32xf32>
    %5 = arith.divf %3, %4 : vector<256x32xf32>
    %6 = arith.mulf %0, %5 : vector<256x32xf32>
    %c0_1 = arith.constant 0 : index
    %c0_2 = arith.constant 0 : index
    %7 = vector.load %arg4[%c0_1, %c0_2] : memref<256x288xf32, #tpu.memory_space<vmem>>, vector<256x32xf32>
    tpu.vector_store %arg4[%c0_1, %c0_2], %6 {strides = array<i32>} : memref<256x288xf32, #tpu.memory_space<vmem>>, vector<256x32xf32>,
    %cst_3 = arith.constant -1.000000e+00 : f32
    %8 = vector.broadcast %cst_3 : f32 to vector<256x32xf32>
    %9 = arith.subf %0, %8 : vector<256x32xf32>
    %10 = arith.mulf %9, %9 : vector<256x32xf32>
    %cst_4 = arith.constant 0.000000e+00 : f32
    %11 = vector.broadcast %cst_4 : f32 to vector<256x32xf32>
    %12 = arith.subf %11, %10 : vector<256x32xf32>
    %cst_5 = arith.constant 6.125000e+00 : f32
    %13 = vector.broadcast %cst_5 : f32 to vector<256x32xf32>
    %14 = arith.mulf %12, %13 : vector<256x32xf32>
    %15 = math.exp %14 : vector<256x32xf32>
    %c0_6 = arith.constant 0 : index
    %c32 = arith.constant 32 : index
    %16 = vector.load %arg4[%c0_6, %c32] : memref<256x288xf32, #tpu.memory_space<vmem>>, vector<256x32xf32>
    tpu.vector_store %arg4[%c0_6, %c32], %15 {strides = array<i32>} : memref<256x288xf32, #tpu.memory_space<vmem>>, vector<256x32xf32>,
    %cst_7 = arith.constant -0.714285731 : f32
    %17 = vector.broadcast %cst_7 : f32 to vector<256x32xf32>
    %18 = arith.subf %0, %17 : vector<256x32xf32>
    %19 = arith.mulf %18, %18 : vector<256x32xf32>
    %cst_8 = arith.constant 0.000000e+00 : f32
    %20 = vector.broadcast %cst_8 : f32 to vector<256x32xf32>
    %21 = arith.subf %20, %19 : vector<256x32xf32>
    %cst_9 = arith.constant 6.125000e+00 : f32
    %22 = vector.broadcast %cst_9 : f32 to vector<256x32xf32>
    %23 = arith.mulf %21, %22 : vector<256x32xf32>
    %24 = math.exp %23 : vector<256x32xf32>
    %c0_10 = arith.constant 0 : index
    %c64 = arith.constant 64 : index
    %25 = vector.load %arg4[%c0_10, %c64] : memref<256x288xf32, #tpu.memory_space<vmem>>, vector<256x32xf32>
    tpu.vector_store %arg4[%c0_10, %c64], %24 {strides = array<i32>} : memref<256x288xf32, #tpu.memory_space<vmem>>, vector<256x32xf32>,
    %cst_11 = arith.constant -0.428571433 : f32
    %26 = vector.broadcast %cst_11 : f32 to vector<256x32xf32>
    %27 = arith.subf %0, %26 : vector<256x32xf32>
    %28 = arith.mulf %27, %27 : vector<256x32xf32>
    %cst_12 = arith.constant 0.000000e+00 : f32
    %29 = vector.broadcast %cst_12 : f32 to vector<256x32xf32>
    %30 = arith.subf %29, %28 : vector<256x32xf32>
    %cst_13 = arith.constant 6.125000e+00 : f32
    %31 = vector.broadcast %cst_13 : f32 to vector<256x32xf32>
    %32 = arith.mulf %30, %31 : vector<256x32xf32>
    %33 = math.exp %32 : vector<256x32xf32>
    %c0_14 = arith.constant 0 : index
    %c96 = arith.constant 96 : index
    %34 = vector.load %arg4[%c0_14, %c96] : memref<256x288xf32, #tpu.memory_space<vmem>>, vector<256x32xf32>
    tpu.vector_store %arg4[%c0_14, %c96], %33 {strides = array<i32>} : memref<256x288xf32, #tpu.memory_space<vmem>>, vector<256x32xf32>,
    %cst_15 = arith.constant -0.142857149 : f32
    %35 = vector.broadcast %cst_15 : f32 to vector<256x32xf32>
    %36 = arith.subf %0, %35 : vector<256x32xf32>
    %37 = arith.mulf %36, %36 : vector<256x32xf32>
    %cst_16 = arith.constant 0.000000e+00 : f32
    %38 = vector.broadcast %cst_16 : f32 to vector<256x32xf32>
    %39 = arith.subf %38, %37 : vector<256x32xf32>
    %cst_17 = arith.constant 6.125000e+00 : f32
    %40 = vector.broadcast %cst_17 : f32 to vector<256x32xf32>
    %41 = arith.mulf %39, %40 : vector<256x32xf32>
    %42 = math.exp %41 : vector<256x32xf32>
    %c0_18 = arith.constant 0 : index
    %c128 = arith.constant 128 : index
    %43 = vector.load %arg4[%c0_18, %c128] : memref<256x288xf32, #tpu.memory_space<vmem>>, vector<256x32xf32>
    tpu.vector_store %arg4[%c0_18, %c128], %42 {strides = array<i32>} : memref<256x288xf32, #tpu.memory_space<vmem>>, vector<256x32xf32>,
    %cst_19 = arith.constant 0.142857149 : f32
    %44 = vector.broadcast %cst_19 : f32 to vector<256x32xf32>
    %45 = arith.subf %0, %44 : vector<256x32xf32>
    %46 = arith.mulf %45, %45 : vector<256x32xf32>
    %cst_20 = arith.constant 0.000000e+00 : f32
    %47 = vector.broadcast %cst_20 : f32 to vector<256x32xf32>
    %48 = arith.subf %47, %46 : vector<256x32xf32>
    %cst_21 = arith.constant 6.125000e+00 : f32
    %49 = vector.broadcast %cst_21 : f32 to vector<256x32xf32>
    %50 = arith.mulf %48, %49 : vector<256x32xf32>
    %51 = math.exp %50 : vector<256x32xf32>
    %c0_22 = arith.constant 0 : index
    %c160 = arith.constant 160 : index
    %52 = vector.load %arg4[%c0_22, %c160] : memref<256x288xf32, #tpu.memory_space<vmem>>, vector<256x32xf32>
    tpu.vector_store %arg4[%c0_22, %c160], %51 {strides = array<i32>} : memref<256x288xf32, #tpu.memory_space<vmem>>, vector<256x32xf32>,
    %cst_23 = arith.constant 0.428571433 : f32
    %53 = vector.broadcast %cst_23 : f32 to vector<256x32xf32>
    %54 = arith.subf %0, %53 : vector<256x32xf32>
    %55 = arith.mulf %54, %54 : vector<256x32xf32>
    %cst_24 = arith.constant 0.000000e+00 : f32
    %56 = vector.broadcast %cst_24 : f32 to vector<256x32xf32>
    %57 = arith.subf %56, %55 : vector<256x32xf32>
    %cst_25 = arith.constant 6.125000e+00 : f32
    %58 = vector.broadcast %cst_25 : f32 to vector<256x32xf32>
    %59 = arith.mulf %57, %58 : vector<256x32xf32>
    %60 = math.exp %59 : vector<256x32xf32>
    %c0_26 = arith.constant 0 : index
    %c192 = arith.constant 192 : index
    %61 = vector.load %arg4[%c0_26, %c192] : memref<256x288xf32, #tpu.memory_space<vmem>>, vector<256x32xf32>
    tpu.vector_store %arg4[%c0_26, %c192], %60 {strides = array<i32>} : memref<256x288xf32, #tpu.memory_space<vmem>>, vector<256x32xf32>,
    %cst_27 = arith.constant 0.714285731 : f32
    %62 = vector.broadcast %cst_27 : f32 to vector<256x32xf32>
    %63 = arith.subf %0, %62 : vector<256x32xf32>
    %64 = arith.mulf %63, %63 : vector<256x32xf32>
    %cst_28 = arith.constant 0.000000e+00 : f32
    %65 = vector.broadcast %cst_28 : f32 to vector<256x32xf32>
    %66 = arith.subf %65, %64 : vector<256x32xf32>
    %cst_29 = arith.constant 6.125000e+00 : f32
    %67 = vector.broadcast %cst_29 : f32 to vector<256x32xf32>
    %68 = arith.mulf %66, %67 : vector<256x32xf32>
    %69 = math.exp %68 : vector<256x32xf32>
    %c0_30 = arith.constant 0 : index
    %c224 = arith.constant 224 : index
    %70 = vector.load %arg4[%c0_30, %c224] : memref<256x288xf32, #tpu.memory_space<vmem>>, vector<256x32xf32>
    tpu.vector_store %arg4[%c0_30, %c224], %69 {strides = array<i32>} : memref<256x288xf32, #tpu.memory_space<vmem>>, vector<256x32xf32>,
    %cst_31 = arith.constant 1.000000e+00 : f32
    %71 = vector.broadcast %cst_31 : f32 to vector<256x32xf32>
    %72 = arith.subf %0, %71 : vector<256x32xf32>
    %73 = arith.mulf %72, %72 : vector<256x32xf32>
    %cst_32 = arith.constant 0.000000e+00 : f32
    %74 = vector.broadcast %cst_32 : f32 to vector<256x32xf32>
    %75 = arith.subf %74, %73 : vector<256x32xf32>
    %cst_33 = arith.constant 6.125000e+00 : f32
    %76 = vector.broadcast %cst_33 : f32 to vector<256x32xf32>
    %77 = arith.mulf %75, %76 : vector<256x32xf32>
    %78 = math.exp %77 : vector<256x32xf32>
    %c0_34 = arith.constant 0 : index
    %c256 = arith.constant 256 : index
    %79 = vector.load %arg4[%c0_34, %c256] : memref<256x288xf32, #tpu.memory_space<vmem>>, vector<256x32xf32>
    tpu.vector_store %arg4[%c0_34, %c256], %78 {strides = array<i32>} : memref<256x288xf32, #tpu.memory_space<vmem>>, vector<256x32xf32>,
    %c0_35 = arith.constant 0 : index
    %c0_36 = arith.constant 0 : index
    %80 = vector.load %arg4[%c0_35, %c0_36] : memref<256x288xf32, #tpu.memory_space<vmem>>, vector<256x288xf32>
    %c0_37 = arith.constant 0 : index
    %c0_38 = arith.constant 0 : index
    %81 = vector.load %arg2[%c0_37, %c0_38] : memref<288x16xf32, #tpu.memory_space<vmem>>, vector<288x16xf32>
    %cst_39 = arith.constant dense<0.000000e+00> : vector<256x16xf32>
    %82 = tpu.matmul %80, %81, %cst_39 {dimension_numbers = #tpu.dot_dimension_numbers<[1], [0], [0], [1], [0, 0, 1, 1], [], []>} : vector<256x288xf32>, vector<288x16xf32>, vector<256x16xf32> -> vector<256x16xf32>
    %c0_40 = arith.constant 0 : index
    %c0_41 = arith.constant 0 : index
    %83 = vector.load %arg3[%c0_40, %c0_41] : memref<256x16xf32, #tpu.memory_space<vmem>>, vector<256x16xf32>
    tpu.vector_store %arg3[%c0_40, %c0_41], %82 {strides = array<i32>} : memref<256x16xf32, #tpu.memory_space<vmem>>, vector<256x16xf32>,
    return
  }
  func.func @transform_0(%arg0: i32) -> (i32, i32) {
    %c0_i32 = arith.constant 0 : i32
    %c0_i32_0 = arith.constant 0 : i32
    return %arg0, %c0_i32 : i32, i32
  }
  func.func @transform_1(%arg0: i32) -> (i32, i32) {
    %c0_i32 = arith.constant 0 : i32
    %c0_i32_0 = arith.constant 0 : i32
    %c0_i32_1 = arith.constant 0 : i32
    return %c0_i32, %c0_i32_0 : i32, i32
  }
  func.func @transform_2(%arg0: i32) -> (i32, i32) {
    %c0_i32 = arith.constant 0 : i32
    %c0_i32_0 = arith.constant 0 : i32
    return %arg0, %c0_i32 : i32, i32
  }
}

</mosaic_0001>

<llo_original>
// kernel: linear_kan.1
$region0: #{linear_kan.1}
  #allocation0 [shape = 'u32[]', space=smem, size = 0x4, offset = 0x4, fixed_abs, tag = 'smem constant byte address 0x4 - core index']
  #allocation1 [shape = 'u32[144,128]{1,0:T(1,128)}', space=vmem, size = 0x12000, scoped, tag = 'internal scratch']
  #allocation2 [shape = 'f32[256,288]{1,0:T(8,128)}', space=vmem, size = 0x60000, scoped, tag = 'scratch operand']
  %s0 = inlined_call_operand.vmem [shape: f32[512,32], index: 0, kind: input, shape index: {}]
  %s1 = inlined_call_operand.vmem [shape: f32[288,16], index: 1, kind: input, shape index: {}]
  %s2 = inlined_call_operand.vmem [shape: f32[512,16], index: 2, kind: output, shape index: {}]
  %s3 = sld [smem:[#allocation0]]
  $region41: #{linear_kan.1} parent=0
    _
  %s5 = ssub.s32 1, %s3
  %s6 = scalar_select 0, %s5, %s3
  loop: start=0, step=1, limit=4
  $region2: #{linear_kan.1} parent=0 // loop_pre_header
    _
  $region3: #{linear_kan.1} parent=0 // loop_header
    %s8 = sphi 0, %s12
    %p9 = scmp.ge.s32.totalorder %s8, 4
    %s18 = sphi 0, %s20
    %s21 = sphi 0, %s18
    %s22 = sphi 0, %s21
    %s38 = sphi 0, %s22
    %s42 = sphi 0, %s42
    %s44 = sphi 0, %s42
    %s45 = sphi 0, %s44
    %s59 = sphi 0, %s45
    %s65 = sphi 0, %s67
    %s68 = sphi 0, %s65
    %s69 = sphi 0, %s68
    %s85 = sphi 0, %s69
  $region4: #{linear_kan.1} parent=0 // loop_header_branch
    %11 = sbr.rel (%p9) target = $region8
  $region5: #{linear_kan.1} parent=0 // loop_body
    %s13 = ssub.s32 %s8, 1
    %s14 = ssub.s32 %s8, 2
    %s15 = sadd.s32 %s8, 1
    %s16 = ssub.s32 %s8, %s15
    %p17 = scmp.eq.s32.totalorder %s16, 0
    %s19 = sadd.s32 %s18, 1
    %s20 = scalar_select %p17, %s18, %s19
    %p23 = pneg %p17
    %p24 = scmp.eq.s32.totalorder %s8, 1
    %p25 = por %p23, %p24
    %p26 = scmp.ne.s32.totalorder %s18, %s21
    %p27 = scmp.eq.s32.totalorder %s8, 0
    %p28 = por %p26, %p27
    %p29 = scmp.ne.s32.totalorder %s18, %s21
    %p30 = scmp.eq.s32.totalorder %s13, 1
    %p31 = por %p29, %p30
    %p32 = scmp.ne.s32.totalorder %s21, %s22
    %p33 = scmp.eq.s32.totalorder %s13, 0
    %p34 = por %p32, %p33
    %p35 = scmp.ne.s32.totalorder %s21, %s22
    %p36 = scmp.eq.s32.totalorder %s14, 1
    %p37 = por %p35, %p36
    %p39 = scmp.ne.s32.totalorder %s22, %s38
    %p40 = scmp.eq.s32.totalorder %s14, 0
    %p41 = por %p39, %p40
    %s43 = sadd.s32 %s42, 1
    %p46 = scmp.eq.s32.totalorder %s8, 1
    %p47 = scmp.ne.s32.totalorder %s42, %s44
    %p48 = scmp.eq.s32.totalorder %s8, 0
    %p49 = por %p47, %p48
    %p50 = scmp.ne.s32.totalorder %s42, %s44
    %p51 = scmp.eq.s32.totalorder %s13, 1
    %p52 = por %p50, %p51
    %p53 = scmp.ne.s32.totalorder %s44, %s45
    %p54 = scmp.eq.s32.totalorder %s13, 0
    %p55 = por %p53, %p54
    %p56 = scmp.ne.s32.totalorder %s44, %s45
    %p57 = scmp.eq.s32.totalorder %s14, 1
    %p58 = por %p56, %p57
    %p60 = scmp.ne.s32.totalorder %s45, %s59
    %p61 = scmp.eq.s32.totalorder %s14, 0
    %p62 = por %p60, %p61
    %s63 = ssub.s32 %s8, %s15
    %p64 = scmp.eq.s32.totalorder %s63, 0
    %s66 = sadd.s32 %s65, 1
    %s67 = scalar_select %p64, %s65, %s66
    %p70 = pneg %p64
    %p71 = scmp.eq.s32.totalorder %s8, 1
    %p72 = por %p70, %p71
    %p73 = scmp.ne.s32.totalorder %s65, %s68
    %p74 = scmp.eq.s32.totalorder %s8, 0
    %p75 = por %p73, %p74
    %p76 = scmp.ne.s32.totalorder %s65, %s68
    %p77 = scmp.eq.s32.totalorder %s13, 1
    %p78 = por %p76, %p77
    %p79 = scmp.ne.s32.totalorder %s68, %s69
    %p80 = scmp.eq.s32.totalorder %s13, 0
    %p81 = por %p79, %p80
    %p82 = scmp.ne.s32.totalorder %s68, %s69
    %p83 = scmp.eq.s32.totalorder %s14, 1
    %p84 = por %p82, %p83
    %p86 = scmp.ne.s32.totalorder %s69, %s85
    %p87 = scmp.eq.s32.totalorder %s14, 0
    %p88 = por %p86, %p87
    %p89 = scmp.le.s32.totalorder 1, %s8
    %p90 = scmp.lt.s32.totalorder %s8, 3
    %p91 = pnand %p89, %p90
    %p92 = pneg %p91
    // Predicated region
    $region9: #{linear_kan.1} parent=5 // pred_check
      _
    $region10: #{linear_kan.1} parent=5 // pred_check_branch
      %94 = sbr.rel (%p91) target = $region12
    $region11: #{linear_kan.1} parent=5 // pred_region
      %s95 = ssub.s32 %s8, 1
      // Predicated region
      $region13: #{linear_kan.1} parent=11 // pred_check
        %p96 = pneg %p55
      $region14: #{linear_kan.1} parent=11 // pred_check_branch
        %98 = sbr.rel (%p96) target = $region16
      $region15: #{linear_kan.1} parent=11 // pred_region
        _
      $region16: #{linear_kan.1} parent=11 // pred_fallthru
        _
    $region12: #{linear_kan.1} parent=5 // pred_fallthru
      _
    %p99 = scmp.lt.s32.totalorder %s8, 2
    // Predicated region
    $region17: #{linear_kan.1} parent=5 // pred_check
      %p100 = pneg %p99
    $region18: #{linear_kan.1} parent=5 // pred_check_branch
      %102 = sbr.rel (%p100) target = $region20
    $region19: #{linear_kan.1} parent=5 // pred_region
      // Predicated region
      $region21: #{linear_kan.1} parent=19 // pred_check
        %p103 = pneg %p28
      $region22: #{linear_kan.1} parent=19 // pred_check_branch
        %105 = sbr.rel (%p103) target = $region24
      $region23: #{linear_kan.1} parent=19 // pred_region
        %s106 = smul.u32 32, %s8
        %p107 = scmp.lt.s32.totalorder %s106, 63
        %s108 = scalar_select %p107, %s106, 63
        %s109 = smul.addr %s108, 8
        %s110 = scalar_lea.vmem %s0, %s109
        %s111 = smul.u32 32, %s8
      $region24: #{linear_kan.1} parent=19 // pred_fallthru
        _
    $region20: #{linear_kan.1} parent=5 // pred_fallthru
      _
    %p112 = scmp.le.s32.totalorder 1, %s8
    %p113 = scmp.lt.s32.totalorder %s8, 3
    %p114 = pnand %p112, %p113
    %p115 = pneg %p114
    // Predicated region
    $region25: #{linear_kan.1} parent=5 // pred_check
      _
    $region26: #{linear_kan.1} parent=5 // pred_check_branch
      %117 = sbr.rel (%p114) target = $region28
    $region27: #{linear_kan.1} parent=5 // pred_region
      %s118 = ssub.s32 %s8, 1
      %s119 = smul.u32 32, %s13
      %p120 = scmp.lt.s32.totalorder %s119, 63
      %s121 = scalar_select %p120, %s119, 63
      %s122 = smul.addr %s121, 8
      %s123 = scalar_lea.vmem %s0, %s122
      %p124 = pneg %p34
      %p125 = pneg %p31
      %p126 = pneg %p55
      %p127 = pneg %p52
      %p128 = pneg %p81
      %p129 = pneg %p78
      %s130 = smul.u32 32, %s13
      %p131 = scmp.lt.s32.totalorder %s130, 63
      %s132 = scalar_select %p131, %s130, 63
      %s133 = smul.addr %s132, 8
      %s134 = scalar_lea.vmem %s2, %s133
      %s135 = smul.u32 32, %s13
      %p136 = scmp.lt.s32.totalorder %s135, 63
      %s137 = scalar_select %p136, %s135, 63
      %s138 = smul.addr %s137, 8
      %s139 = scalar_lea.vmem %s0, %s138
      %s140 = smul.u32 32, %s13
      %s141 = smul.u32 32, %s13
      %p142 = scmp.lt.s32.totalorder %s141, 63
      %s143 = scalar_select %p142, %s141, 63
      %s144 = smul.addr %s143, 8
      %s145 = scalar_lea.vmem %s2, %s144
      %s146 = smul.u32 32, %s13
      %v147 = vld [vmem:[%s139] sm:$0xff]
      %v148 = vld [vmem:[%s139 + $0x8] sm:$0xff]
      %v149 = vld [vmem:[%s139 + $0x10] sm:$0xff]
      %v150 = vld [vmem:[%s139 + $0x18] sm:$0xff]
      %v151 = vld [vmem:[%s139 + $0x20] sm:$0xff]
      %v152 = vld [vmem:[%s139 + $0x28] sm:$0xff]
      %v153 = vld [vmem:[%s139 + $0x30] sm:$0xff]
      %v154 = vld [vmem:[%s139 + $0x38] sm:$0xff]
      %v155 = vld [vmem:[%s139 + $0x40] sm:$0xff]
      %v156 = vld [vmem:[%s139 + $0x48] sm:$0xff]
      %v157 = vld [vmem:[%s139 + $0x50] sm:$0xff]
      %v158 = vld [vmem:[%s139 + $0x58] sm:$0xff]
      %v159 = vld [vmem:[%s139 + $0x60] sm:$0xff]
      %v160 = vld [vmem:[%s139 + $0x68] sm:$0xff]
      %v161 = vld [vmem:[%s139 + $0x70] sm:$0xff]
      %v162 = vld [vmem:[%s139 + $0x78] sm:$0xff]
      %v163 = vld [vmem:[%s139 + $0x80] sm:$0xff]
      %v164 = vld [vmem:[%s139 + $0x88] sm:$0xff]
      %v165 = vld [vmem:[%s139 + $0x90] sm:$0xff]
      %v166 = vld [vmem:[%s139 + $0x98] sm:$0xff]
      %v167 = vld [vmem:[%s139 + $0xa0] sm:$0xff]
      %v168 = vld [vmem:[%s139 + $0xa8] sm:$0xff]
      %v169 = vld [vmem:[%s139 + $0xb0] sm:$0xff]
      %v170 = vld [vmem:[%s139 + $0xb8] sm:$0xff]
      %v171 = vld [vmem:[%s139 + $0xc0] sm:$0xff]
      %v172 = vld [vmem:[%s139 + $0xc8] sm:$0xff]
      %v173 = vld [vmem:[%s139 + $0xd0] sm:$0xff]
      %v174 = vld [vmem:[%s139 + $0xd8] sm:$0xff]
      %v175 = vld [vmem:[%s139 + $0xe0] sm:$0xff]
      %v176 = vld [vmem:[%s139 + $0xe8] sm:$0xff]
      %v177 = vld [vmem:[%s139 + $0xf0] sm:$0xff]
      %v178 = vld [vmem:[%s139 + $0xf8] sm:$0xff]
      %v179 = vxor.u32 %v147, 2147483648
      %v180 = vxor.u32 %v148, 2147483648
      %v181 = vxor.u32 %v149, 2147483648
      %v182 = vxor.u32 %v150, 2147483648
      %v183 = vxor.u32 %v151, 2147483648
      %v184 = vxor.u32 %v152, 2147483648
      %v185 = vxor.u32 %v153, 2147483648
      %v186 = vxor.u32 %v154, 2147483648
      %v187 = vxor.u32 %v155, 2147483648
      %v188 = vxor.u32 %v156, 2147483648
      %v189 = vxor.u32 %v157, 2147483648
      %v190 = vxor.u32 %v158, 2147483648
      %v191 = vxor.u32 %v159, 2147483648
      %v192 = vxor.u32 %v160, 2147483648
      %v193 = vxor.u32 %v161, 2147483648
      %v194 = vxor.u32 %v162, 2147483648
      %v195 = vxor.u32 %v163, 2147483648
      %v196 = vxor.u32 %v164, 2147483648
      %v197 = vxor.u32 %v165, 2147483648
      %v198 = vxor.u32 %v166, 2147483648
      %v199 = vxor.u32 %v167, 2147483648
      %v200 = vxor.u32 %v168, 2147483648
      %v201 = vxor.u32 %v169, 2147483648
      %v202 = vxor.u32 %v170, 2147483648
      %v203 = vxor.u32 %v171, 2147483648
      %v204 = vxor.u32 %v172, 2147483648
      %v205 = vxor.u32 %v173, 2147483648
      %v206 = vxor.u32 %v174, 2147483648
      %v207 = vxor.u32 %v175, 2147483648
      %v208 = vxor.u32 %v176, 2147483648
      %v209 = vxor.u32 %v177, 2147483648
      %v210 = vxor.u32 %v178, 2147483648
      %v211 = vmul.f32 %v179, 1.442695
      %v212 = vpow.pop %v211
      %v213 = vmul.f32 %v180, 1.442695
      %v214 = vpow.pop %v213
      %v215 = vmul.f32 %v181, 1.442695
      %v216 = vpow.pop %v215
      %v217 = vmul.f32 %v182, 1.442695
      %v218 = vpow.pop %v217
      %v219 = vmul.f32 %v183, 1.442695
      %v220 = vpow.pop %v219
      %v221 = vmul.f32 %v184, 1.442695
      %v222 = vpow.pop %v221
      %v223 = vmul.f32 %v185, 1.442695
      %v224 = vpow.pop %v223
      %v225 = vmul.f32 %v186, 1.442695
      %v226 = vpow.pop %v225
      %v227 = vmul.f32 %v187, 1.442695
      %v228 = vpow.pop %v227
      %v229 = vmul.f32 %v188, 1.442695
      %v230 = vpow.pop %v229
      %v231 = vmul.f32 %v189, 1.442695
      %v232 = vpow.pop %v231
      %v233 = vmul.f32 %v190, 1.442695
      %v234 = vpow.pop %v233
      %v235 = vmul.f32 %v191, 1.442695
      %v236 = vpow.pop %v235
      %v237 = vmul.f32 %v192, 1.442695
      %v238 = vpow.pop %v237
      %v239 = vmul.f32 %v193, 1.442695
      %v240 = vpow.pop %v239
      %v241 = vmul.f32 %v194, 1.442695
      %v242 = vpow.pop %v241
      %v243 = vmul.f32 %v195, 1.442695
      %v244 = vpow.pop %v243
      %v245 = vmul.f32 %v196, 1.442695
      %v246 = vpow.pop %v245
      %v247 = vmul.f32 %v197, 1.442695
      %v248 = vpow.pop %v247
      %v249 = vmul.f32 %v198, 1.442695
      %v250 = vpow.pop %v249
      %v251 = vmul.f32 %v199, 1.442695
      %v252 = vpow.pop %v251
      %v253 = vmul.f32 %v200, 1.442695
      %v254 = vpow.pop %v253
      %v255 = vmul.f32 %v201, 1.442695
      %v256 = vpow.pop %v255
      %v257 = vmul.f32 %v202, 1.442695
      %v258 = vpow.pop %v257
      %v259 = vmul.f32 %v203, 1.442695
      %v260 = vpow.pop %v259
      %v261 = vmul.f32 %v204, 1.442695
      %v262 = vpow.pop %v261
      %v263 = vmul.f32 %v205, 1.442695
      %v264 = vpow.pop %v263
      %v265 = vmul.f32 %v206, 1.442695
      %v266 = vpow.pop %v265
      %v267 = vmul.f32 %v207, 1.442695
      %v268 = vpow.pop %v267
      %v269 = vmul.f32 %v208, 1.442695
      %v270 = vpow.pop %v269
      %v271 = vmul.f32 %v209, 1.442695
      %v272 = vpow.pop %v271
      %v273 = vmul.f32 %v210, 1.442695
      %v274 = vpow.pop %v273
      %v275 = vadd.f32 %v212, 1.0
      %v276 = vadd.f32 %v214, 1.0
      %v277 = vadd.f32 %v216, 1.0
      %v278 = vadd.f32 %v218, 1.0
      %v279 = vadd.f32 %v220, 1.0
      %v280 = vadd.f32 %v222, 1.0
      %v281 = vadd.f32 %v224, 1.0
      %v282 = vadd.f32 %v226, 1.0
      %v283 = vadd.f32 %v228, 1.0
      %v284 = vadd.f32 %v230, 1.0
      %v285 = vadd.f32 %v232, 1.0
      %v286 = vadd.f32 %v234, 1.0
      %v287 = vadd.f32 %v236, 1.0
      %v288 = vadd.f32 %v238, 1.0
      %v289 = vadd.f32 %v240, 1.0
      %v290 = vadd.f32 %v242, 1.0
      %v291 = vadd.f32 %v244, 1.0
      %v292 = vadd.f32 %v246, 1.0
      %v293 = vadd.f32 %v248, 1.0
      %v294 = vadd.f32 %v250, 1.0
      %v295 = vadd.f32 %v252, 1.0
      %v296 = vadd.f32 %v254, 1.0
      %v297 = vadd.f32 %v256, 1.0
      %v298 = vadd.f32 %v258, 1.0
      %v299 = vadd.f32 %v260, 1.0
      %v300 = vadd.f32 %v262, 1.0
      %v301 = vadd.f32 %v264, 1.0
      %v302 = vadd.f32 %v266, 1.0
      %v303 = vadd.f32 %v268, 1.0
      %v304 = vadd.f32 %v270, 1.0
      %v305 = vadd.f32 %v272, 1.0
      %v306 = vadd.f32 %v274, 1.0
      %v307 = vrcp.pop %v275
      %v308 = vmul.f32 1.0, %v307
      %v309 = vrcp.pop %v276
      %v310 = vmul.f32 1.0, %v309
      %v311 = vrcp.pop %v277
      %v312 = vmul.f32 1.0, %v311
      %v313 = vrcp.pop %v278
      %v314 = vmul.f32 1.0, %v313
      %v315 = vrcp.pop %v279
      %v316 = vmul.f32 1.0, %v315
      %v317 = vrcp.pop %v280
      %v318 = vmul.f32 1.0, %v317
      %v319 = vrcp.pop %v281
      %v320 = vmul.f32 1.0, %v319
      %v321 = vrcp.pop %v282
      %v322 = vmul.f32 1.0, %v321
      %v323 = vrcp.pop %v283
      %v324 = vmul.f32 1.0, %v323
      %v325 = vrcp.pop %v284
      %v326 = vmul.f32 1.0, %v325
      %v327 = vrcp.pop %v285
      %v328 = vmul.f32 1.0, %v327
      %v329 = vrcp.pop %v286
      %v330 = vmul.f32 1.0, %v329
      %v331 = vrcp.pop %v287
      %v332 = vmul.f32 1.0, %v331
      %v333 = vrcp.pop %v288
      %v334 = vmul.f32 1.0, %v333
      %v335 = vrcp.pop %v289
      %v336 = vmul.f32 1.0, %v335
      %v337 = vrcp.pop %v290
      %v338 = vmul.f32 1.0, %v337
      %v339 = vrcp.pop %v291
      %v340 = vmul.f32 1.0, %v339
      %v341 = vrcp.pop %v292
      %v342 = vmul.f32 1.0, %v341
      %v343 = vrcp.pop %v293
      %v344 = vmul.f32 1.0, %v343
      %v345 = vrcp.pop %v294
      %v346 = vmul.f32 1.0, %v345
      %v347 = vrcp.pop %v295
      %v348 = vmul.f32 1.0, %v347
      %v349 = vrcp.pop %v296
      %v350 = vmul.f32 1.0, %v349
      %v351 = vrcp.pop %v297
      %v352 = vmul.f32 1.0, %v351
      %v353 = vrcp.pop %v298
      %v354 = vmul.f32 1.0, %v353
      %v355 = vrcp.pop %v299
      %v356 = vmul.f32 1.0, %v355
      %v357 = vrcp.pop %v300
      %v358 = vmul.f32 1.0, %v357
      %v359 = vrcp.pop %v301
      %v360 = vmul.f32 1.0, %v359
      %v361 = vrcp.pop %v302
      %v362 = vmul.f32 1.0, %v361
      %v363 = vrcp.pop %v303
      %v364 = vmul.f32 1.0, %v363
      %v365 = vrcp.pop %v304
      %v366 = vmul.f32 1.0, %v365
      %v367 = vrcp.pop %v305
      %v368 = vmul.f32 1.0, %v367
      %v369 = vrcp.pop %v306
      %v370 = vmul.f32 1.0, %v369
      %v371 = vmul.f32 %v147, %v308
      %v372 = vmul.f32 %v148, %v310
      %v373 = vmul.f32 %v149, %v312
      %v374 = vmul.f32 %v150, %v314
      %v375 = vmul.f32 %v151, %v316
      %v376 = vmul.f32 %v152, %v318
      %v377 = vmul.f32 %v153, %v320
      %v378 = vmul.f32 %v154, %v322
      %v379 = vmul.f32 %v155, %v324
      %v380 = vmul.f32 %v156, %v326
      %v381 = vmul.f32 %v157, %v328
      %v382 = vmul.f32 %v158, %v330
      %v383 = vmul.f32 %v159, %v332
      %v384 = vmul.f32 %v160, %v334
      %v385 = vmul.f32 %v161, %v336
      %v386 = vmul.f32 %v162, %v338
      %v387 = vmul.f32 %v163, %v340
      %v388 = vmul.f32 %v164, %v342
      %v389 = vmul.f32 %v165, %v344
      %v390 = vmul.f32 %v166, %v346
      %v391 = vmul.f32 %v167, %v348
      %v392 = vmul.f32 %v168, %v350
      %v393 = vmul.f32 %v169, %v352
      %v394 = vmul.f32 %v170, %v354
      %v395 = vmul.f32 %v171, %v356
      %v396 = vmul.f32 %v172, %v358
      %v397 = vmul.f32 %v173, %v360
      %v398 = vmul.f32 %v174, %v362
      %v399 = vmul.f32 %v175, %v364
      %v400 = vmul.f32 %v176, %v366
      %v401 = vmul.f32 %v177, %v368
      %v402 = vmul.f32 %v178, %v370
      %vm403 = vcmask 261120
      %404 = vst.msk [vmem:[#allocation2] sm:$0xff] %vm403, %v371
      %405 = vst.msk [vmem:[#allocation2 + $0x18] sm:$0xff] %vm403, %v372
      %406 = vst.msk [vmem:[#allocation2 + $0x30] sm:$0xff] %vm403, %v373
      %407 = vst.msk [vmem:[#allocation2 + $0x48] sm:$0xff] %vm403, %v374
      %408 = vst.msk [vmem:[#allocation2 + $0x60] sm:$0xff] %vm403, %v375
      %409 = vst.msk [vmem:[#allocation2 + $0x78] sm:$0xff] %vm403, %v376
      %410 = vst.msk [vmem:[#allocation2 + $0x90] sm:$0xff] %vm403, %v377
      %411 = vst.msk [vmem:[#allocation2 + $0xa8] sm:$0xff] %vm403, %v378
      %412 = vst.msk [vmem:[#allocation2 + $0xc0] sm:$0xff] %vm403, %v379
      %413 = vst.msk [vmem:[#allocation2 + $0xd8] sm:$0xff] %vm403, %v380
      %414 = vst.msk [vmem:[#allocation2 + $0xf0] sm:$0xff] %vm403, %v381
      %415 = vst.msk [vmem:[#allocation2 + $0x108] sm:$0xff] %vm403, %v382
      %416 = vst.msk [vmem:[#allocation2 + $0x120] sm:$0xff] %vm403, %v383
      %417 = vst.msk [vmem:[#allocation2 + $0x138] sm:$0xff] %vm403, %v384
      %418 = vst.msk [vmem:[#allocation2 + $0x150] sm:$0xff] %vm403, %v385
      %419 = vst.msk [vmem:[#allocation2 + $0x168] sm:$0xff] %vm403, %v386
      %420 = vst.msk [vmem:[#allocation2 + $0x180] sm:$0xff] %vm403, %v387
      %421 = vst.msk [vmem:[#allocation2 + $0x198] sm:$0xff] %vm403, %v388
      %422 = vst.msk [vmem:[#allocation2 + $0x1b0] sm:$0xff] %vm403, %v389
      %423 = vst.msk [vmem:[#allocation2 + $0x1c8] sm:$0xff] %vm403, %v390
      %424 = vst.msk [vmem:[#allocation2 + $0x1e0] sm:$0xff] %vm403, %v391
      %425 = vst.msk [vmem:[#allocation2 + $0x1f8] sm:$0xff] %vm403, %v392
      %426 = vst.msk [vmem:[#allocation2 + $0x210] sm:$0xff] %vm403, %v393
      %427 = vst.msk [vmem:[#allocation2 + $0x228] sm:$0xff] %vm403, %v394
      %428 = vst.msk [vmem:[#allocation2 + $0x240] sm:$0xff] %vm403, %v395
      %429 = vst.msk [vmem:[#allocation2 + $0x258] sm:$0xff] %vm403, %v396
      %430 = vst.msk [vmem:[#allocation2 + $0x270] sm:$0xff] %vm403, %v397
      %431 = vst.msk [vmem:[#allocation2 + $0x288] sm:$0xff] %vm403, %v398
      %432 = vst.msk [vmem:[#allocation2 + $0x2a0] sm:$0xff] %vm403, %v399
      %433 = vst.msk [vmem:[#allocation2 + $0x2b8] sm:$0xff] %vm403, %v400
      %434 = vst.msk [vmem:[#allocation2 + $0x2d0] sm:$0xff] %vm403, %v401
      %435 = vst.msk [vmem:[#allocation2 + $0x2e8] sm:$0xff] %vm403, %v402
      %v436 = vsub.f32 %v147, -1.0
      %v437 = vsub.f32 %v148, -1.0
      %v438 = vsub.f32 %v149, -1.0
      %v439 = vsub.f32 %v150, -1.0
      %v440 = vsub.f32 %v151, -1.0
      %v441 = vsub.f32 %v152, -1.0
      %v442 = vsub.f32 %v153, -1.0
      %v443 = vsub.f32 %v154, -1.0
      %v444 = vsub.f32 %v155, -1.0
      %v445 = vsub.f32 %v156, -1.0
      %v446 = vsub.f32 %v157, -1.0
      %v447 = vsub.f32 %v158, -1.0
      %v448 = vsub.f32 %v159, -1.0
      %v449 = vsub.f32 %v160, -1.0
      %v450 = vsub.f32 %v161, -1.0
      %v451 = vsub.f32 %v162, -1.0
      %v452 = vsub.f32 %v163, -1.0
      %v453 = vsub.f32 %v164, -1.0
      %v454 = vsub.f32 %v165, -1.0
      %v455 = vsub.f32 %v166, -1.0
      %v456 = vsub.f32 %v167, -1.0
      %v457 = vsub.f32 %v168, -1.0
      %v458 = vsub.f32 %v169, -1.0
      %v459 = vsub.f32 %v170, -1.0
      %v460 = vsub.f32 %v171, -1.0
      %v461 = vsub.f32 %v172, -1.0
      %v462 = vsub.f32 %v173, -1.0
      %v463 = vsub.f32 %v174, -1.0
      %v464 = vsub.f32 %v175, -1.0
      %v465 = vsub.f32 %v176, -1.0
      %v466 = vsub.f32 %v177, -1.0
      %v467 = vsub.f32 %v178, -1.0
      %v468 = vmul.f32 %v436, %v436
      %v469 = vmul.f32 %v437, %v437
      %v470 = vmul.f32 %v438, %v438
      %v471 = vmul.f32 %v439, %v439
      %v472 = vmul.f32 %v440, %v440
      %v473 = vmul.f32 %v441, %v441
      %v474 = vmul.f32 %v442, %v442
      %v475 = vmul.f32 %v443, %v443
      %v476 = vmul.f32 %v444, %v444
      %v477 = vmul.f32 %v445, %v445
      %v478 = vmul.f32 %v446, %v446
      %v479 = vmul.f32 %v447, %v447
      %v480 = vmul.f32 %v448, %v448
      %v481 = vmul.f32 %v449, %v449
      %v482 = vmul.f32 %v450, %v450
      %v483 = vmul.f32 %v451, %v451
      %v484 = vmul.f32 %v452, %v452
      %v485 = vmul.f32 %v453, %v453
      %v486 = vmul.f32 %v454, %v454
      %v487 = vmul.f32 %v455, %v455
      %v488 = vmul.f32 %v456, %v456
      %v489 = vmul.f32 %v457, %v457
      %v490 = vmul.f32 %v458, %v458
      %v491 = vmul.f32 %v459, %v459
      %v492 = vmul.f32 %v460, %v460
      %v493 = vmul.f32 %v461, %v461
      %v494 = vmul.f32 %v462, %v462
      %v495 = vmul.f32 %v463, %v463
      %v496 = vmul.f32 %v464, %v464
      %v497 = vmul.f32 %v465, %v465
      %v498 = vmul.f32 %v466, %v466
      %v499 = vmul.f32 %v467, %v467
      %v500 = vsub.f32 0.0, %v468
      %v501 = vsub.f32 0.0, %v469
      %v502 = vsub.f32 0.0, %v470
      %v503 = vsub.f32 0.0, %v471
      %v504 = vsub.f32 0.0, %v472
      %v505 = vsub.f32 0.0, %v473
      %v506 = vsub.f32 0.0, %v474
      %v507 = vsub.f32 0.0, %v475
      %v508 = vsub.f32 0.0, %v476
      %v509 = vsub.f32 0.0, %v477
      %v510 = vsub.f32 0.0, %v478
      %v511 = vsub.f32 0.0, %v479
      %v512 = vsub.f32 0.0, %v480
      %v513 = vsub.f32 0.0, %v481
      %v514 = vsub.f32 0.0, %v482
      %v515 = vsub.f32 0.0, %v483
      %v516 = vsub.f32 0.0, %v484
      %v517 = vsub.f32 0.0, %v485
      %v518 = vsub.f32 0.0, %v486
      %v519 = vsub.f32 0.0, %v487
      %v520 = vsub.f32 0.0, %v488
      %v521 = vsub.f32 0.0, %v489
      %v522 = vsub.f32 0.0, %v490
      %v523 = vsub.f32 0.0, %v491
      %v524 = vsub.f32 0.0, %v492
      %v525 = vsub.f32 0.0, %v493
      %v526 = vsub.f32 0.0, %v494
      %v527 = vsub.f32 0.0, %v495
      %v528 = vsub.f32 0.0, %v496
      %v529 = vsub.f32 0.0, %v497
      %v530 = vsub.f32 0.0, %v498
      %v531 = vsub.f32 0.0, %v499
      %v532 = vmul.f32 %v500, 6.125
      %v533 = vmul.f32 %v501, 6.125
      %v534 = vmul.f32 %v502, 6.125
      %v535 = vmul.f32 %v503, 6.125
      %v536 = vmul.f32 %v504, 6.125
      %v537 = vmul.f32 %v505, 6.125
      %v538 = vmul.f32 %v506, 6.125
      %v539 = vmul.f32 %v507, 6.125
      %v540 = vmul.f32 %v508, 6.125
      %v541 = vmul.f32 %v509, 6.125
      %v542 = vmul.f32 %v510, 6.125
      %v543 = vmul.f32 %v511, 6.125
      %v544 = vmul.f32 %v512, 6.125
      %v545 = vmul.f32 %v513, 6.125
      %v546 = vmul.f32 %v514, 6.125
      %v547 = vmul.f32 %v515, 6.125
      %v548 = vmul.f32 %v516, 6.125
      %v549 = vmul.f32 %v517, 6.125
      %v550 = vmul.f32 %v518, 6.125
      %v551 = vmul.f32 %v519, 6.125
      %v552 = vmul.f32 %v520, 6.125
      %v553 = vmul.f32 %v521, 6.125
      %v554 = vmul.f32 %v522, 6.125
      %v555 = vmul.f32 %v523, 6.125
      %v556 = vmul.f32 %v524, 6.125
      %v557 = vmul.f32 %v525, 6.125
      %v558 = vmul.f32 %v526, 6.125
      %v559 = vmul.f32 %v527, 6.125
      %v560 = vmul.f32 %v528, 6.125
      %v561 = vmul.f32 %v529, 6.125
      %v562 = vmul.f32 %v530, 6.125
      %v563 = vmul.f32 %v531, 6.125
      %v564 = vmul.f32 %v532, 1.442695
      %v565 = vpow.pop %v564
      %v566 = vmul.f32 %v533, 1.442695
      %v567 = vpow.pop %v566
      %v568 = vmul.f32 %v534, 1.442695
      %v569 = vpow.pop %v568
      %v570 = vmul.f32 %v535, 1.442695
      %v571 = vpow.pop %v570
      %v572 = vmul.f32 %v536, 1.442695
      %v573 = vpow.pop %v572
      %v574 = vmul.f32 %v537, 1.442695
      %v575 = vpow.pop %v574
      %v576 = vmul.f32 %v538, 1.442695
      %v577 = vpow.pop %v576
      %v578 = vmul.f32 %v539, 1.442695
      %v579 = vpow.pop %v578
      %v580 = vmul.f32 %v540, 1.442695
      %v581 = vpow.pop %v580
      %v582 = vmul.f32 %v541, 1.442695
      %v583 = vpow.pop %v582
      %v584 = vmul.f32 %v542, 1.442695
      %v585 = vpow.pop %v584
      %v586 = vmul.f32 %v543, 1.442695
      %v587 = vpow.pop %v586
      %v588 = vmul.f32 %v544, 1.442695
      %v589 = vpow.pop %v588
      %v590 = vmul.f32 %v545, 1.442695
      %v591 = vpow.pop %v590
      %v592 = vmul.f32 %v546, 1.442695
      %v593 = vpow.pop %v592
      %v594 = vmul.f32 %v547, 1.442695
      %v595 = vpow.pop %v594
      %v596 = vmul.f32 %v548, 1.442695
      %v597 = vpow.pop %v596
      %v598 = vmul.f32 %v549, 1.442695
      %v599 = vpow.pop %v598
      %v600 = vmul.f32 %v550, 1.442695
      %v601 = vpow.pop %v600
      %v602 = vmul.f32 %v551, 1.442695
      %v603 = vpow.pop %v602
      %v604 = vmul.f32 %v552, 1.442695
      %v605 = vpow.pop %v604
      %v606 = vmul.f32 %v553, 1.442695
      %v607 = vpow.pop %v606
      %v608 = vmul.f32 %v554, 1.442695
      %v609 = vpow.pop %v608
      %v610 = vmul.f32 %v555, 1.442695
      %v611 = vpow.pop %v610
      %v612 = vmul.f32 %v556, 1.442695
      %v613 = vpow.pop %v612
      %v614 = vmul.f32 %v557, 1.442695
      %v615 = vpow.pop %v614
      %v616 = vmul.f32 %v558, 1.442695
      %v617 = vpow.pop %v616
      %v618 = vmul.f32 %v559, 1.442695
      %v619 = vpow.pop %v618
      %v620 = vmul.f32 %v560, 1.442695
      %v621 = vpow.pop %v620
      %v622 = vmul.f32 %v561, 1.442695
      %v623 = vpow.pop %v622
      %v624 = vmul.f32 %v562, 1.442695
      %v625 = vpow.pop %v624
      %v626 = vmul.f32 %v563, 1.442695
      %v627 = vpow.pop %v626
      %660 = vrot.lane.b32.xlu0 %v565, 32
      %v661 = vpop.permute.xlu0 %660
      %662 = vrot.lane.b32.xlu0 %v567, 32
      %v663 = vpop.permute.xlu0 %662
      %664 = vrot.lane.b32.xlu0 %v569, 32
      %v665 = vpop.permute.xlu0 %664
      %666 = vrot.lane.b32.xlu0 %v571, 32
      %v667 = vpop.permute.xlu0 %666
      %668 = vrot.lane.b32.xlu0 %v573, 32
      %v669 = vpop.permute.xlu0 %668
      %670 = vrot.lane.b32.xlu0 %v575, 32
      %v671 = vpop.permute.xlu0 %670
      %672 = vrot.lane.b32.xlu0 %v577, 32
      %v673 = vpop.permute.xlu0 %672
      %674 = vrot.lane.b32.xlu0 %v579, 32
      %v675 = vpop.permute.xlu0 %674
      %676 = vrot.lane.b32.xlu0 %v581, 32
      %v677 = vpop.permute.xlu0 %676
      %678 = vrot.lane.b32.xlu0 %v583, 32
      %v679 = vpop.permute.xlu0 %678
      %680 = vrot.lane.b32.xlu0 %v585, 32
      %v681 = vpop.permute.xlu0 %680
      %682 = vrot.lane.b32.xlu0 %v587, 32
      %v683 = vpop.permute.xlu0 %682
      %684 = vrot.lane.b32.xlu0 %v589, 32
      %v685 = vpop.permute.xlu0 %684
      %686 = vrot.lane.b32.xlu0 %v591, 32
      %v687 = vpop.permute.xlu0 %686
      %688 = vrot.lane.b32.xlu0 %v593, 32
      %v689 = vpop.permute.xlu0 %688
      %690 = vrot.lane.b32.xlu0 %v595, 32
      %v691 = vpop.permute.xlu0 %690
      %692 = vrot.lane.b32.xlu0 %v597, 32
      %v693 = vpop.permute.xlu0 %692
      %694 = vrot.lane.b32.xlu0 %v599, 32
      %v695 = vpop.permute.xlu0 %694
      %696 = vrot.lane.b32.xlu0 %v601, 32
      %v697 = vpop.permute.xlu0 %696
      %698 = vrot.lane.b32.xlu0 %v603, 32
      %v699 = vpop.permute.xlu0 %698
      %700 = vrot.lane.b32.xlu0 %v605, 32
      %v701 = vpop.permute.xlu0 %700
      %702 = vrot.lane.b32.xlu0 %v607, 32
      %v703 = vpop.permute.xlu0 %702
      %704 = vrot.lane.b32.xlu0 %v609, 32
      %v705 = vpop.permute.xlu0 %704
      %706 = vrot.lane.b32.xlu0 %v611, 32
      %v707 = vpop.permute.xlu0 %706
      %708 = vrot.lane.b32.xlu0 %v613, 32
      %v709 = vpop.permute.xlu0 %708
      %710 = vrot.lane.b32.xlu0 %v615, 32
      %v711 = vpop.permute.xlu0 %710
      %712 = vrot.lane.b32.xlu0 %v617, 32
      %v713 = vpop.permute.xlu0 %712
      %714 = vrot.lane.b32.xlu0 %v619, 32
      %v715 = vpop.permute.xlu0 %714
      %716 = vrot.lane.b32.xlu0 %v621, 32
      %v717 = vpop.permute.xlu0 %716
      %718 = vrot.lane.b32.xlu0 %v623, 32
      %v719 = vpop.permute.xlu0 %718
      %720 = vrot.lane.b32.xlu0 %v625, 32
      %v721 = vpop.permute.xlu0 %720
      %722 = vrot.lane.b32.xlu0 %v627, 32
      %v723 = vpop.permute.xlu0 %722
      %vm756 = vcmask 523520
      %757 = vst.msk [vmem:[#allocation2] sm:$0xff] %vm756, %v661
      %758 = vst.msk [vmem:[#allocation2 + $0x18] sm:$0xff] %vm756, %v663
      %759 = vst.msk [vmem:[#allocation2 + $0x30] sm:$0xff] %vm756, %v665
      %760 = vst.msk [vmem:[#allocation2 + $0x48] sm:$0xff] %vm756, %v667
      %761 = vst.msk [vmem:[#allocation2 + $0x60] sm:$0xff] %vm756, %v669
      %762 = vst.msk [vmem:[#allocation2 + $0x78] sm:$0xff] %vm756, %v671
      %763 = vst.msk [vmem:[#allocation2 + $0x90] sm:$0xff] %vm756, %v673
      %764 = vst.msk [vmem:[#allocation2 + $0xa8] sm:$0xff] %vm756, %v675
      %765 = vst.msk [vmem:[#allocation2 + $0xc0] sm:$0xff] %vm756, %v677
      %766 = vst.msk [vmem:[#allocation2 + $0xd8] sm:$0xff] %vm756, %v679
      %767 = vst.msk [vmem:[#allocation2 + $0xf0] sm:$0xff] %vm756, %v681
      %768 = vst.msk [vmem:[#allocation2 + $0x108] sm:$0xff] %vm756, %v683
      %769 = vst.msk [vmem:[#allocation2 + $0x120] sm:$0xff] %vm756, %v685
      %770 = vst.msk [vmem:[#allocation2 + $0x138] sm:$0xff] %vm756, %v687
      %771 = vst.msk [vmem:[#allocation2 + $0x150] sm:$0xff] %vm756, %v689
      %772 = vst.msk [vmem:[#allocation2 + $0x168] sm:$0xff] %vm756, %v691
      %773 = vst.msk [vmem:[#allocation2 + $0x180] sm:$0xff] %vm756, %v693
      %774 = vst.msk [vmem:[#allocation2 + $0x198] sm:$0xff] %vm756, %v695
      %775 = vst.msk [vmem:[#allocation2 + $0x1b0] sm:$0xff] %vm756, %v697
      %776 = vst.msk [vmem:[#allocation2 + $0x1c8] sm:$0xff] %vm756, %v699
      %777 = vst.msk [vmem:[#allocation2 + $0x1e0] sm:$0xff] %vm756, %v701
      %778 = vst.msk [vmem:[#allocation2 + $0x1f8] sm:$0xff] %vm756, %v703
      %779 = vst.msk [vmem:[#allocation2 + $0x210] sm:$0xff] %vm756, %v705
      %780 = vst.msk [vmem:[#allocation2 + $0x228] sm:$0xff] %vm756, %v707
      %781 = vst.msk [vmem:[#allocation2 + $0x240] sm:$0xff] %vm756, %v709
      %782 = vst.msk [vmem:[#allocation2 + $0x258] sm:$0xff] %vm756, %v711
      %783 = vst.msk [vmem:[#allocation2 + $0x270] sm:$0xff] %vm756, %v713
      %784 = vst.msk [vmem:[#allocation2 + $0x288] sm:$0xff] %vm756, %v715
      %785 = vst.msk [vmem:[#allocation2 + $0x2a0] sm:$0xff] %vm756, %v717
      %786 = vst.msk [vmem:[#allocation2 + $0x2b8] sm:$0xff] %vm756, %v719
      %787 = vst.msk [vmem:[#allocation2 + $0x2d0] sm:$0xff] %vm756, %v721
      %788 = vst.msk [vmem:[#allocation2 + $0x2e8] sm:$0xff] %vm756, %v723
      %v789 = vsub.f32 %v147, -0.71428573
      %v790 = vsub.f32 %v148, -0.71428573
      %v791 = vsub.f32 %v149, -0.71428573
      %v792 = vsub.f32 %v150, -0.71428573
      %v793 = vsub.f32 %v151, -0.71428573
      %v794 = vsub.f32 %v152, -0.71428573
      %v795 = vsub.f32 %v153, -0.71428573
      %v796 = vsub.f32 %v154, -0.71428573
      %v797 = vsub.f32 %v155, -0.71428573
      %v798 = vsub.f32 %v156, -0.71428573
      %v799 = vsub.f32 %v157, -0.71428573
      %v800 = vsub.f32 %v158, -0.71428573
      %v801 = vsub.f32 %v159, -0.71428573
      %v802 = vsub.f32 %v160, -0.71428573
      %v803 = vsub.f32 %v161, -0.71428573
      %v804 = vsub.f32 %v162, -0.71428573
      %v805 = vsub.f32 %v163, -0.71428573
      %v806 = vsub.f32 %v164, -0.71428573
      %v807 = vsub.f32 %v165, -0.71428573
      %v808 = vsub.f32 %v166, -0.71428573
      %v809 = vsub.f32 %v167, -0.71428573
      %v810 = vsub.f32 %v168, -0.71428573
      %v811 = vsub.f32 %v169, -0.71428573
      %v812 = vsub.f32 %v170, -0.71428573
      %v813 = vsub.f32 %v171, -0.71428573
      %v814 = vsub.f32 %v172, -0.71428573
      %v815 = vsub.f32 %v173, -0.71428573
      %v816 = vsub.f32 %v174, -0.71428573
      %v817 = vsub.f32 %v175, -0.71428573
      %v818 = vsub.f32 %v176, -0.71428573
      %v819 = vsub.f32 %v177, -0.71428573
      %v820 = vsub.f32 %v178, -0.71428573
      %v821 = vmul.f32 %v789, %v789
      %v822 = vmul.f32 %v790, %v790
      %v823 = vmul.f32 %v791, %v791
      %v824 = vmul.f32 %v792, %v792
      %v825 = vmul.f32 %v793, %v793
      %v826 = vmul.f32 %v794, %v794
      %v827 = vmul.f32 %v795, %v795
      %v828 = vmul.f32 %v796, %v796
      %v829 = vmul.f32 %v797, %v797
      %v830 = vmul.f32 %v798, %v798
      %v831 = vmul.f32 %v799, %v799
      %v832 = vmul.f32 %v800, %v800
      %v833 = vmul.f32 %v801, %v801
      %v834 = vmul.f32 %v802, %v802
      %v835 = vmul.f32 %v803, %v803
      %v836 = vmul.f32 %v804, %v804
      %v837 = vmul.f32 %v805, %v805
      %v838 = vmul.f32 %v806, %v806
      %v839 = vmul.f32 %v807, %v807
      %v840 = vmul.f32 %v808, %v808
      %v841 = vmul.f32 %v809, %v809
      %v842 = vmul.f32 %v810, %v810
      %v843 = vmul.f32 %v811, %v811
      %v844 = vmul.f32 %v812, %v812
      %v845 = vmul.f32 %v813, %v813
      %v846 = vmul.f32 %v814, %v814
      %v847 = vmul.f32 %v815, %v815
      %v848 = vmul.f32 %v816, %v816
      %v849 = vmul.f32 %v817, %v817
      %v850 = vmul.f32 %v818, %v818
      %v851 = vmul.f32 %v819, %v819
      %v852 = vmul.f32 %v820, %v820
      %v853 = vsub.f32 0.0, %v821
      %v854 = vsub.f32 0.0, %v822
      %v855 = vsub.f32 0.0, %v823
      %v856 = vsub.f32 0.0, %v824
      %v857 = vsub.f32 0.0, %v825
      %v858 = vsub.f32 0.0, %v826
      %v859 = vsub.f32 0.0, %v827
      %v860 = vsub.f32 0.0, %v828
      %v861 = vsub.f32 0.0, %v829
      %v862 = vsub.f32 0.0, %v830
      %v863 = vsub.f32 0.0, %v831
      %v864 = vsub.f32 0.0, %v832
      %v865 = vsub.f32 0.0, %v833
      %v866 = vsub.f32 0.0, %v834
      %v867 = vsub.f32 0.0, %v835
      %v868 = vsub.f32 0.0, %v836
      %v869 = vsub.f32 0.0, %v837
      %v870 = vsub.f32 0.0, %v838
      %v871 = vsub.f32 0.0, %v839
      %v872 = vsub.f32 0.0, %v840
      %v873 = vsub.f32 0.0, %v841
      %v874 = vsub.f32 0.0, %v842
      %v875 = vsub.f32 0.0, %v843
      %v876 = vsub.f32 0.0, %v844
      %v877 = vsub.f32 0.0, %v845
      %v878 = vsub.f32 0.0, %v846
      %v879 = vsub.f32 0.0, %v847
      %v880 = vsub.f32 0.0, %v848
      %v881 = vsub.f32 0.0, %v849
      %v882 = vsub.f32 0.0, %v850
      %v883 = vsub.f32 0.0, %v851
      %v884 = vsub.f32 0.0, %v852
      %v885 = vmul.f32 %v853, 6.125
      %v886 = vmul.f32 %v854, 6.125
      %v887 = vmul.f32 %v855, 6.125
      %v888 = vmul.f32 %v856, 6.125
      %v889 = vmul.f32 %v857, 6.125
      %v890 = vmul.f32 %v858, 6.125
      %v891 = vmul.f32 %v859, 6.125
      %v892 = vmul.f32 %v860, 6.125
      %v893 = vmul.f32 %v861, 6.125
      %v894 = vmul.f32 %v862, 6.125
      %v895 = vmul.f32 %v863, 6.125
      %v896 = vmul.f32 %v864, 6.125
      %v897 = vmul.f32 %v865, 6.125
      %v898 = vmul.f32 %v866, 6.125
      %v899 = vmul.f32 %v867, 6.125
      %v900 = vmul.f32 %v868, 6.125
      %v901 = vmul.f32 %v869, 6.125
      %v902 = vmul.f32 %v870, 6.125
      %v903 = vmul.f32 %v871, 6.125
      %v904 = vmul.f32 %v872, 6.125
      %v905 = vmul.f32 %v873, 6.125
      %v906 = vmul.f32 %v874, 6.125
      %v907 = vmul.f32 %v875, 6.125
      %v908 = vmul.f32 %v876, 6.125
      %v909 = vmul.f32 %v877, 6.125
      %v910 = vmul.f32 %v878, 6.125
      %v911 = vmul.f32 %v879, 6.125
      %v912 = vmul.f32 %v880, 6.125
      %v913 = vmul.f32 %v881, 6.125
      %v914 = vmul.f32 %v882, 6.125
      %v915 = vmul.f32 %v883, 6.125
      %v916 = vmul.f32 %v884, 6.125
      %v917 = vmul.f32 %v885, 1.442695
      %v918 = vpow.pop %v917
      %v919 = vmul.f32 %v886, 1.442695
      %v920 = vpow.pop %v919
      %v921 = vmul.f32 %v887, 1.442695
      %v922 = vpow.pop %v921
      %v923 = vmul.f32 %v888, 1.442695
      %v924 = vpow.pop %v923
      %v925 = vmul.f32 %v889, 1.442695
      %v926 = vpow.pop %v925
      %v927 = vmul.f32 %v890, 1.442695
      %v928 = vpow.pop %v927
      %v929 = vmul.f32 %v891, 1.442695
      %v930 = vpow.pop %v929
      %v931 = vmul.f32 %v892, 1.442695
      %v932 = vpow.pop %v931
      %v933 = vmul.f32 %v893, 1.442695
      %v934 = vpow.pop %v933
      %v935 = vmul.f32 %v894, 1.442695
      %v936 = vpow.pop %v935
      %v937 = vmul.f32 %v895, 1.442695
      %v938 = vpow.pop %v937
      %v939 = vmul.f32 %v896, 1.442695
      %v940 = vpow.pop %v939
      %v941 = vmul.f32 %v897, 1.442695
      %v942 = vpow.pop %v941
      %v943 = vmul.f32 %v898, 1.442695
      %v944 = vpow.pop %v943
      %v945 = vmul.f32 %v899, 1.442695
      %v946 = vpow.pop %v945
      %v947 = vmul.f32 %v900, 1.442695
      %v948 = vpow.pop %v947
      %v949 = vmul.f32 %v901, 1.442695
      %v950 = vpow.pop %v949
      %v951 = vmul.f32 %v902, 1.442695
      %v952 = vpow.pop %v951
      %v953 = vmul.f32 %v903, 1.442695
      %v954 = vpow.pop %v953
      %v955 = vmul.f32 %v904, 1.442695
      %v956 = vpow.pop %v955
      %v957 = vmul.f32 %v905, 1.442695
      %v958 = vpow.pop %v957
      %v959 = vmul.f32 %v906, 1.442695
      %v960 = vpow.pop %v959
      %v961 = vmul.f32 %v907, 1.442695
      %v962 = vpow.pop %v961
      %v963 = vmul.f32 %v908, 1.442695
      %v964 = vpow.pop %v963
      %v965 = vmul.f32 %v909, 1.442695
      %v966 = vpow.pop %v965
      %v967 = vmul.f32 %v910, 1.442695
      %v968 = vpow.pop %v967
      %v969 = vmul.f32 %v911, 1.442695
      %v970 = vpow.pop %v969
      %v971 = vmul.f32 %v912, 1.442695
      %v972 = vpow.pop %v971
      %v973 = vmul.f32 %v913, 1.442695
      %v974 = vpow.pop %v973
      %v975 = vmul.f32 %v914, 1.442695
      %v976 = vpow.pop %v975
      %v977 = vmul.f32 %v915, 1.442695
      %v978 = vpow.pop %v977
      %v979 = vmul.f32 %v916, 1.442695
      %v980 = vpow.pop %v979
      %1013 = vrot.lane.b32.xlu0 %v918, 64
      %v1014 = vpop.permute.xlu0 %1013
      %1015 = vrot.lane.b32.xlu0 %v920, 64
      %v1016 = vpop.permute.xlu0 %1015
      %1017 = vrot.lane.b32.xlu0 %v922, 64
      %v1018 = vpop.permute.xlu0 %1017
      %1019 = vrot.lane.b32.xlu0 %v924, 64
      %v1020 = vpop.permute.xlu0 %1019
      %1021 = vrot.lane.b32.xlu0 %v926, 64
      %v1022 = vpop.permute.xlu0 %1021
      %1023 = vrot.lane.b32.xlu0 %v928, 64
      %v1024 = vpop.permute.xlu0 %1023
      %1025 = vrot.lane.b32.xlu0 %v930, 64
      %v1026 = vpop.permute.xlu0 %1025
      %1027 = vrot.lane.b32.xlu0 %v932, 64
      %v1028 = vpop.permute.xlu0 %1027
      %1029 = vrot.lane.b32.xlu0 %v934, 64
      %v1030 = vpop.permute.xlu0 %1029
      %1031 = vrot.lane.b32.xlu0 %v936, 64
      %v1032 = vpop.permute.xlu0 %1031
      %1033 = vrot.lane.b32.xlu0 %v938, 64
      %v1034 = vpop.permute.xlu0 %1033
      %1035 = vrot.lane.b32.xlu0 %v940, 64
      %v1036 = vpop.permute.xlu0 %1035
      %1037 = vrot.lane.b32.xlu0 %v942, 64
      %v1038 = vpop.permute.xlu0 %1037
      %1039 = vrot.lane.b32.xlu0 %v944, 64
      %v1040 = vpop.permute.xlu0 %1039
      %1041 = vrot.lane.b32.xlu0 %v946, 64
      %v1042 = vpop.permute.xlu0 %1041
      %1043 = vrot.lane.b32.xlu0 %v948, 64
      %v1044 = vpop.permute.xlu0 %1043
      %1045 = vrot.lane.b32.xlu0 %v950, 64
      %v1046 = vpop.permute.xlu0 %1045
      %1047 = vrot.lane.b32.xlu0 %v952, 64
      %v1048 = vpop.permute.xlu0 %1047
      %1049 = vrot.lane.b32.xlu0 %v954, 64
      %v1050 = vpop.permute.xlu0 %1049
      %1051 = vrot.lane.b32.xlu0 %v956, 64
      %v1052 = vpop.permute.xlu0 %1051
      %1053 = vrot.lane.b32.xlu0 %v958, 64
      %v1054 = vpop.permute.xlu0 %1053
      %1055 = vrot.lane.b32.xlu0 %v960, 64
      %v1056 = vpop.permute.xlu0 %1055
      %1057 = vrot.lane.b32.xlu0 %v962, 64
      %v1058 = vpop.permute.xlu0 %1057
      %1059 = vrot.lane.b32.xlu0 %v964, 64
      %v1060 = vpop.permute.xlu0 %1059
      %1061 = vrot.lane.b32.xlu0 %v966, 64
      %v1062 = vpop.permute.xlu0 %1061
      %1063 = vrot.lane.b32.xlu0 %v968, 64
      %v1064 = vpop.permute.xlu0 %1063
      %1065 = vrot.lane.b32.xlu0 %v970, 64
      %v1066 = vpop.permute.xlu0 %1065
      %1067 = vrot.lane.b32.xlu0 %v972, 64
      %v1068 = vpop.permute.xlu0 %1067
      %1069 = vrot.lane.b32.xlu0 %v974, 64
      %v1070 = vpop.permute.xlu0 %1069
      %1071 = vrot.lane.b32.xlu0 %v976, 64
      %v1072 = vpop.permute.xlu0 %1071
      %1073 = vrot.lane.b32.xlu0 %v978, 64
      %v1074 = vpop.permute.xlu0 %1073
      %1075 = vrot.lane.b32.xlu0 %v980, 64
      %v1076 = vpop.permute.xlu0 %1075
      %vm1109 = vcmask 785920
      %1110 = vst.msk [vmem:[#allocation2] sm:$0xff] %vm1109, %v1014
      %1111 = vst.msk [vmem:[#allocation2 + $0x18] sm:$0xff] %vm1109, %v1016
      %1112 = vst.msk [vmem:[#allocation2 + $0x30] sm:$0xff] %vm1109, %v1018
      %1113 = vst.msk [vmem:[#allocation2 + $0x48] sm:$0xff] %vm1109, %v1020
      %1114 = vst.msk [vmem:[#allocation2 + $0x60] sm:$0xff] %vm1109, %v1022
      %1115 = vst.msk [vmem:[#allocation2 + $0x78] sm:$0xff] %vm1109, %v1024
      %1116 = vst.msk [vmem:[#allocation2 + $0x90] sm:$0xff] %vm1109, %v1026
      %1117 = vst.msk [vmem:[#allocation2 + $0xa8] sm:$0xff] %vm1109, %v1028
      %1118 = vst.msk [vmem:[#allocation2 + $0xc0] sm:$0xff] %vm1109, %v1030
      %1119 = vst.msk [vmem:[#allocation2 + $0xd8] sm:$0xff] %vm1109, %v1032
      %1120 = vst.msk [vmem:[#allocation2 + $0xf0] sm:$0xff] %vm1109, %v1034
      %1121 = vst.msk [vmem:[#allocation2 + $0x108] sm:$0xff] %vm1109, %v1036
      %1122 = vst.msk [vmem:[#allocation2 + $0x120] sm:$0xff] %vm1109, %v1038
      %1123 = vst.msk [vmem:[#allocation2 + $0x138] sm:$0xff] %vm1109, %v1040
      %1124 = vst.msk [vmem:[#allocation2 + $0x150] sm:$0xff] %vm1109, %v1042
      %1125 = vst.msk [vmem:[#allocation2 + $0x168] sm:$0xff] %vm1109, %v1044
      %1126 = vst.msk [vmem:[#allocation2 + $0x180] sm:$0xff] %vm1109, %v1046
      %1127 = vst.msk [vmem:[#allocation2 + $0x198] sm:$0xff] %vm1109, %v1048
      %1128 = vst.msk [vmem:[#allocation2 + $0x1b0] sm:$0xff] %vm1109, %v1050
      %1129 = vst.msk [vmem:[#allocation2 + $0x1c8] sm:$0xff] %vm1109, %v1052
      %1130 = vst.msk [vmem:[#allocation2 + $0x1e0] sm:$0xff] %vm1109, %v1054
      %1131 = vst.msk [vmem:[#allocation2 + $0x1f8] sm:$0xff] %vm1109, %v1056
      %1132 = vst.msk [vmem:[#allocation2 + $0x210] sm:$0xff] %vm1109, %v1058
      %1133 = vst.msk [vmem:[#allocation2 + $0x228] sm:$0xff] %vm1109, %v1060
      %1134 = vst.msk [vmem:[#allocation2 + $0x240] sm:$0xff] %vm1109, %v1062
      %1135 = vst.msk [vmem:[#allocation2 + $0x258] sm:$0xff] %vm1109, %v1064
      %1136 = vst.msk [vmem:[#allocation2 + $0x270] sm:$0xff] %vm1109, %v1066
      %1137 = vst.msk [vmem:[#allocation2 + $0x288] sm:$0xff] %vm1109, %v1068
      %1138 = vst.msk [vmem:[#allocation2 + $0x2a0] sm:$0xff] %vm1109, %v1070
      %1139 = vst.msk [vmem:[#allocation2 + $0x2b8] sm:$0xff] %vm1109, %v1072
      %1140 = vst.msk [vmem:[#allocation2 + $0x2d0] sm:$0xff] %vm1109, %v1074
      %1141 = vst.msk [vmem:[#allocation2 + $0x2e8] sm:$0xff] %vm1109, %v1076
      %v1142 = vsub.f32 %v147, -0.42857143
      %v1143 = vsub.f32 %v148, -0.42857143
      %v1144 = vsub.f32 %v149, -0.42857143
      %v1145 = vsub.f32 %v150, -0.42857143
      %v1146 = vsub.f32 %v151, -0.42857143
      %v1147 = vsub.f32 %v152, -0.42857143
      %v1148 = vsub.f32 %v153, -0.42857143
      %v1149 = vsub.f32 %v154, -0.42857143
      %v1150 = vsub.f32 %v155, -0.42857143
      %v1151 = vsub.f32 %v156, -0.42857143
      %v1152 = vsub.f32 %v157, -0.42857143
      %v1153 = vsub.f32 %v158, -0.42857143
      %v1154 = vsub.f32 %v159, -0.42857143
      %v1155 = vsub.f32 %v160, -0.42857143
      %v1156 = vsub.f32 %v161, -0.42857143
      %v1157 = vsub.f32 %v162, -0.42857143
      %v1158 = vsub.f32 %v163, -0.42857143
      %v1159 = vsub.f32 %v164, -0.42857143
      %v1160 = vsub.f32 %v165, -0.42857143
      %v1161 = vsub.f32 %v166, -0.42857143
      %v1162 = vsub.f32 %v167, -0.42857143
      %v1163 = vsub.f32 %v168, -0.42857143
      %v1164 = vsub.f32 %v169, -0.42857143
      %v1165 = vsub.f32 %v170, -0.42857143
      %v1166 = vsub.f32 %v171, -0.42857143
      %v1167 = vsub.f32 %v172, -0.42857143
      %v1168 = vsub.f32 %v173, -0.42857143
      %v1169 = vsub.f32 %v174, -0.42857143
      %v1170 = vsub.f32 %v175, -0.42857143
      %v1171 = vsub.f32 %v176, -0.42857143
      %v1172 = vsub.f32 %v177, -0.42857143
      %v1173 = vsub.f32 %v178, -0.42857143
      %v1174 = vmul.f32 %v1142, %v1142
      %v1175 = vmul.f32 %v1143, %v1143
      %v1176 = vmul.f32 %v1144, %v1144
      %v1177 = vmul.f32 %v1145, %v1145
      %v1178 = vmul.f32 %v1146, %v1146
      %v1179 = vmul.f32 %v1147, %v1147
      %v1180 = vmul.f32 %v1148, %v1148
      %v1181 = vmul.f32 %v1149, %v1149
      %v1182 = vmul.f32 %v1150, %v1150
      %v1183 = vmul.f32 %v1151, %v1151
      %v1184 = vmul.f32 %v1152, %v1152
      %v1185 = vmul.f32 %v1153, %v1153
      %v1186 = vmul.f32 %v1154, %v1154
      %v1187 = vmul.f32 %v1155, %v1155
      %v1188 = vmul.f32 %v1156, %v1156
      %v1189 = vmul.f32 %v1157, %v1157
      %v1190 = vmul.f32 %v1158, %v1158
      %v1191 = vmul.f32 %v1159, %v1159
      %v1192 = vmul.f32 %v1160, %v1160
      %v1193 = vmul.f32 %v1161, %v1161
      %v1194 = vmul.f32 %v1162, %v1162
      %v1195 = vmul.f32 %v1163, %v1163
      %v1196 = vmul.f32 %v1164, %v1164
      %v1197 = vmul.f32 %v1165, %v1165
      %v1198 = vmul.f32 %v1166, %v1166
      %v1199 = vmul.f32 %v1167, %v1167
      %v1200 = vmul.f32 %v1168, %v1168
      %v1201 = vmul.f32 %v1169, %v1169
      %v1202 = vmul.f32 %v1170, %v1170
      %v1203 = vmul.f32 %v1171, %v1171
      %v1204 = vmul.f32 %v1172, %v1172
      %v1205 = vmul.f32 %v1173, %v1173
      %v1206 = vsub.f32 0.0, %v1174
      %v1207 = vsub.f32 0.0, %v1175
      %v1208 = vsub.f32 0.0, %v1176
      %v1209 = vsub.f32 0.0, %v1177
      %v1210 = vsub.f32 0.0, %v1178
      %v1211 = vsub.f32 0.0, %v1179
      %v1212 = vsub.f32 0.0, %v1180
      %v1213 = vsub.f32 0.0, %v1181
      %v1214 = vsub.f32 0.0, %v1182
      %v1215 = vsub.f32 0.0, %v1183
      %v1216 = vsub.f32 0.0, %v1184
      %v1217 = vsub.f32 0.0, %v1185
      %v1218 = vsub.f32 0.0, %v1186
      %v1219 = vsub.f32 0.0, %v1187
      %v1220 = vsub.f32 0.0, %v1188
      %v1221 = vsub.f32 0.0, %v1189
      %v1222 = vsub.f32 0.0, %v1190
      %v1223 = vsub.f32 0.0, %v1191
      %v1224 = vsub.f32 0.0, %v1192
      %v1225 = vsub.f32 0.0, %v1193
      %v1226 = vsub.f32 0.0, %v1194
      %v1227 = vsub.f32 0.0, %v1195
      %v1228 = vsub.f32 0.0, %v1196
      %v1229 = vsub.f32 0.0, %v1197
      %v1230 = vsub.f32 0.0, %v1198
      %v1231 = vsub.f32 0.0, %v1199
      %v1232 = vsub.f32 0.0, %v1200
      %v1233 = vsub.f32 0.0, %v1201
      %v1234 = vsub.f32 0.0, %v1202
      %v1235 = vsub.f32 0.0, %v1203
      %v1236 = vsub.f32 0.0, %v1204
      %v1237 = vsub.f32 0.0, %v1205
      %v1238 = vmul.f32 %v1206, 6.125
      %v1239 = vmul.f32 %v1207, 6.125
      %v1240 = vmul.f32 %v1208, 6.125
      %v1241 = vmul.f32 %v1209, 6.125
      %v1242 = vmul.f32 %v1210, 6.125
      %v1243 = vmul.f32 %v1211, 6.125
      %v1244 = vmul.f32 %v1212, 6.125
      %v1245 = vmul.f32 %v1213, 6.125
      %v1246 = vmul.f32 %v1214, 6.125
      %v1247 = vmul.f32 %v1215, 6.125
      %v1248 = vmul.f32 %v1216, 6.125
      %v1249 = vmul.f32 %v1217, 6.125
      %v1250 = vmul.f32 %v1218, 6.125
      %v1251 = vmul.f32 %v1219, 6.125
      %v1252 = vmul.f32 %v1220, 6.125
      %v1253 = vmul.f32 %v1221, 6.125
      %v1254 = vmul.f32 %v1222, 6.125
      %v1255 = vmul.f32 %v1223, 6.125
      %v1256 = vmul.f32 %v1224, 6.125
      %v1257 = vmul.f32 %v1225, 6.125
      %v1258 = vmul.f32 %v1226, 6.125
      %v1259 = vmul.f32 %v1227, 6.125
      %v1260 = vmul.f32 %v1228, 6.125
      %v1261 = vmul.f32 %v1229, 6.125
      %v1262 = vmul.f32 %v1230, 6.125
      %v1263 = vmul.f32 %v1231, 6.125
      %v1264 = vmul.f32 %v1232, 6.125
      %v1265 = vmul.f32 %v1233, 6.125
      %v1266 = vmul.f32 %v1234, 6.125
      %v1267 = vmul.f32 %v1235, 6.125
      %v1268 = vmul.f32 %v1236, 6.125
      %v1269 = vmul.f32 %v1237, 6.125
      %v1270 = vmul.f32 %v1238, 1.442695
      %v1271 = vpow.pop %v1270
      %v1272 = vmul.f32 %v1239, 1.442695
      %v1273 = vpow.pop %v1272
      %v1274 = vmul.f32 %v1240, 1.442695
      %v1275 = vpow.pop %v1274
      %v1276 = vmul.f32 %v1241, 1.442695
      %v1277 = vpow.pop %v1276
      %v1278 = vmul.f32 %v1242, 1.442695
      %v1279 = vpow.pop %v1278
      %v1280 = vmul.f32 %v1243, 1.442695
      %v1281 = vpow.pop %v1280
      %v1282 = vmul.f32 %v1244, 1.442695
      %v1283 = vpow.pop %v1282
      %v1284 = vmul.f32 %v1245, 1.442695
      %v1285 = vpow.pop %v1284
      %v1286 = vmul.f32 %v1246, 1.442695
      %v1287 = vpow.pop %v1286
      %v1288 = vmul.f32 %v1247, 1.442695
      %v1289 = vpow.pop %v1288
      %v1290 = vmul.f32 %v1248, 1.442695
      %v1291 = vpow.pop %v1290
      %v1292 = vmul.f32 %v1249, 1.442695
      %v1293 = vpow.pop %v1292
      %v1294 = vmul.f32 %v1250, 1.442695
      %v1295 = vpow.pop %v1294
      %v1296 = vmul.f32 %v1251, 1.442695
      %v1297 = vpow.pop %v1296
      %v1298 = vmul.f32 %v1252, 1.442695
      %v1299 = vpow.pop %v1298
      %v1300 = vmul.f32 %v1253, 1.442695
      %v1301 = vpow.pop %v1300
      %v1302 = vmul.f32 %v1254, 1.442695
      %v1303 = vpow.pop %v1302
      %v1304 = vmul.f32 %v1255, 1.442695
      %v1305 = vpow.pop %v1304
      %v1306 = vmul.f32 %v1256, 1.442695
      %v1307 = vpow.pop %v1306
      %v1308 = vmul.f32 %v1257, 1.442695
      %v1309 = vpow.pop %v1308
      %v1310 = vmul.f32 %v1258, 1.442695
      %v1311 = vpow.pop %v1310
      %v1312 = vmul.f32 %v1259, 1.442695
      %v1313 = vpow.pop %v1312
      %v1314 = vmul.f32 %v1260, 1.442695
      %v1315 = vpow.pop %v1314
      %v1316 = vmul.f32 %v1261, 1.442695
      %v1317 = vpow.pop %v1316
      %v1318 = vmul.f32 %v1262, 1.442695
      %v1319 = vpow.pop %v1318
      %v1320 = vmul.f32 %v1263, 1.442695
      %v1321 = vpow.pop %v1320
      %v1322 = vmul.f32 %v1264, 1.442695
      %v1323 = vpow.pop %v1322
      %v1324 = vmul.f32 %v1265, 1.442695
      %v1325 = vpow.pop %v1324
      %v1326 = vmul.f32 %v1266, 1.442695
      %v1327 = vpow.pop %v1326
      %v1328 = vmul.f32 %v1267, 1.442695
      %v1329 = vpow.pop %v1328
      %v1330 = vmul.f32 %v1268, 1.442695
      %v1331 = vpow.pop %v1330
      %v1332 = vmul.f32 %v1269, 1.442695
      %v1333 = vpow.pop %v1332
      %1366 = vrot.lane.b32.xlu0 %v1271, 96
      %v1367 = vpop.permute.xlu0 %1366
      %1368 = vrot.lane.b32.xlu0 %v1273, 96
      %v1369 = vpop.permute.xlu0 %1368
      %1370 = vrot.lane.b32.xlu0 %v1275, 96
      %v1371 = vpop.permute.xlu0 %1370
      %1372 = vrot.lane.b32.xlu0 %v1277, 96
      %v1373 = vpop.permute.xlu0 %1372
      %1374 = vrot.lane.b32.xlu0 %v1279, 96
      %v1375 = vpop.permute.xlu0 %1374
      %1376 = vrot.lane.b32.xlu0 %v1281, 96
      %v1377 = vpop.permute.xlu0 %1376
      %1378 = vrot.lane.b32.xlu0 %v1283, 96
      %v1379 = vpop.permute.xlu0 %1378
      %1380 = vrot.lane.b32.xlu0 %v1285, 96
      %v1381 = vpop.permute.xlu0 %1380
      %1382 = vrot.lane.b32.xlu0 %v1287, 96
      %v1383 = vpop.permute.xlu0 %1382
      %1384 = vrot.lane.b32.xlu0 %v1289, 96
      %v1385 = vpop.permute.xlu0 %1384
      %1386 = vrot.lane.b32.xlu0 %v1291, 96
      %v1387 = vpop.permute.xlu0 %1386
      %1388 = vrot.lane.b32.xlu0 %v1293, 96
      %v1389 = vpop.permute.xlu0 %1388
      %1390 = vrot.lane.b32.xlu0 %v1295, 96
      %v1391 = vpop.permute.xlu0 %1390
      %1392 = vrot.lane.b32.xlu0 %v1297, 96
      %v1393 = vpop.permute.xlu0 %1392
      %1394 = vrot.lane.b32.xlu0 %v1299, 96
      %v1395 = vpop.permute.xlu0 %1394
      %1396 = vrot.lane.b32.xlu0 %v1301, 96
      %v1397 = vpop.permute.xlu0 %1396
      %1398 = vrot.lane.b32.xlu0 %v1303, 96
      %v1399 = vpop.permute.xlu0 %1398
      %1400 = vrot.lane.b32.xlu0 %v1305, 96
      %v1401 = vpop.permute.xlu0 %1400
      %1402 = vrot.lane.b32.xlu0 %v1307, 96
      %v1403 = vpop.permute.xlu0 %1402
      %1404 = vrot.lane.b32.xlu0 %v1309, 96
      %v1405 = vpop.permute.xlu0 %1404
      %1406 = vrot.lane.b32.xlu0 %v1311, 96
      %v1407 = vpop.permute.xlu0 %1406
      %1408 = vrot.lane.b32.xlu0 %v1313, 96
      %v1409 = vpop.permute.xlu0 %1408
      %1410 = vrot.lane.b32.xlu0 %v1315, 96
      %v1411 = vpop.permute.xlu0 %1410
      %1412 = vrot.lane.b32.xlu0 %v1317, 96
      %v1413 = vpop.permute.xlu0 %1412
      %1414 = vrot.lane.b32.xlu0 %v1319, 96
      %v1415 = vpop.permute.xlu0 %1414
      %1416 = vrot.lane.b32.xlu0 %v1321, 96
      %v1417 = vpop.permute.xlu0 %1416
      %1418 = vrot.lane.b32.xlu0 %v1323, 96
      %v1419 = vpop.permute.xlu0 %1418
      %1420 = vrot.lane.b32.xlu0 %v1325, 96
      %v1421 = vpop.permute.xlu0 %1420
      %1422 = vrot.lane.b32.xlu0 %v1327, 96
      %v1423 = vpop.permute.xlu0 %1422
      %1424 = vrot.lane.b32.xlu0 %v1329, 96
      %v1425 = vpop.permute.xlu0 %1424
      %1426 = vrot.lane.b32.xlu0 %v1331, 96
      %v1427 = vpop.permute.xlu0 %1426
      %1428 = vrot.lane.b32.xlu0 %v1333, 96
      %v1429 = vpop.permute.xlu0 %1428
      %vm1462 = vcmask 1048320
      %1463 = vst.msk [vmem:[#allocation2] sm:$0xff] %vm1462, %v1367
      %1464 = vst.msk [vmem:[#allocation2 + $0x18] sm:$0xff] %vm1462, %v1369
      %1465 = vst.msk [vmem:[#allocation2 + $0x30] sm:$0xff] %vm1462, %v1371
      %1466 = vst.msk [vmem:[#allocation2 + $0x48] sm:$0xff] %vm1462, %v1373
      %1467 = vst.msk [vmem:[#allocation2 + $0x60] sm:$0xff] %vm1462, %v1375
      %1468 = vst.msk [vmem:[#allocation2 + $0x78] sm:$0xff] %vm1462, %v1377
      %1469 = vst.msk [vmem:[#allocation2 + $0x90] sm:$0xff] %vm1462, %v1379
      %1470 = vst.msk [vmem:[#allocation2 + $0xa8] sm:$0xff] %vm1462, %v1381
      %1471 = vst.msk [vmem:[#allocation2 + $0xc0] sm:$0xff] %vm1462, %v1383
      %1472 = vst.msk [vmem:[#allocation2 + $0xd8] sm:$0xff] %vm1462, %v1385
      %1473 = vst.msk [vmem:[#allocation2 + $0xf0] sm:$0xff] %vm1462, %v1387
      %1474 = vst.msk [vmem:[#allocation2 + $0x108] sm:$0xff] %vm1462, %v1389
      %1475 = vst.msk [vmem:[#allocation2 + $0x120] sm:$0xff] %vm1462, %v1391
      %1476 = vst.msk [vmem:[#allocation2 + $0x138] sm:$0xff] %vm1462, %v1393
      %1477 = vst.msk [vmem:[#allocation2 + $0x150] sm:$0xff] %vm1462, %v1395
      %1478 = vst.msk [vmem:[#allocation2 + $0x168] sm:$0xff] %vm1462, %v1397
      %1479 = vst.msk [vmem:[#allocation2 + $0x180] sm:$0xff] %vm1462, %v1399
      %1480 = vst.msk [vmem:[#allocation2 + $0x198] sm:$0xff] %vm1462, %v1401
      %1481 = vst.msk [vmem:[#allocation2 + $0x1b0] sm:$0xff] %vm1462, %v1403
      %1482 = vst.msk [vmem:[#allocation2 + $0x1c8] sm:$0xff] %vm1462, %v1405
      %1483 = vst.msk [vmem:[#allocation2 + $0x1e0] sm:$0xff] %vm1462, %v1407
      %1484 = vst.msk [vmem:[#allocation2 + $0x1f8] sm:$0xff] %vm1462, %v1409
      %1485 = vst.msk [vmem:[#allocation2 + $0x210] sm:$0xff] %vm1462, %v1411
      %1486 = vst.msk [vmem:[#allocation2 + $0x228] sm:$0xff] %vm1462, %v1413
      %1487 = vst.msk [vmem:[#allocation2 + $0x240] sm:$0xff] %vm1462, %v1415
      %1488 = vst.msk [vmem:[#allocation2 + $0x258] sm:$0xff] %vm1462, %v1417
      %1489 = vst.msk [vmem:[#allocation2 + $0x270] sm:$0xff] %vm1462, %v1419
      %1490 = vst.msk [vmem:[#allocation2 + $0x288] sm:$0xff] %vm1462, %v1421
      %1491 = vst.msk [vmem:[#allocation2 + $0x2a0] sm:$0xff] %vm1462, %v1423
      %1492 = vst.msk [vmem:[#allocation2 + $0x2b8] sm:$0xff] %vm1462, %v1425
      %1493 = vst.msk [vmem:[#allocation2 + $0x2d0] sm:$0xff] %vm1462, %v1427
      %1494 = vst.msk [vmem:[#allocation2 + $0x2e8] sm:$0xff] %vm1462, %v1429
      %v1495 = vsub.f32 %v147, -0.14285715
      %v1496 = vsub.f32 %v148, -0.14285715
      %v1497 = vsub.f32 %v149, -0.14285715
      %v1498 = vsub.f32 %v150, -0.14285715
      %v1499 = vsub.f32 %v151, -0.14285715
      %v1500 = vsub.f32 %v152, -0.14285715
      %v1501 = vsub.f32 %v153, -0.14285715
      %v1502 = vsub.f32 %v154, -0.14285715
      %v1503 = vsub.f32 %v155, -0.14285715
      %v1504 = vsub.f32 %v156, -0.14285715
      %v1505 = vsub.f32 %v157, -0.14285715
      %v1506 = vsub.f32 %v158, -0.14285715
      %v1507 = vsub.f32 %v159, -0.14285715
      %v1508 = vsub.f32 %v160, -0.14285715
      %v1509 = vsub.f32 %v161, -0.14285715
      %v1510 = vsub.f32 %v162, -0.14285715
      %v1511 = vsub.f32 %v163, -0.14285715
      %v1512 = vsub.f32 %v164, -0.14285715
      %v1513 = vsub.f32 %v165, -0.14285715
      %v1514 = vsub.f32 %v166, -0.14285715
      %v1515 = vsub.f32 %v167, -0.14285715
      %v1516 = vsub.f32 %v168, -0.14285715
      %v1517 = vsub.f32 %v169, -0.14285715
      %v1518 = vsub.f32 %v170, -0.14285715
      %v1519 = vsub.f32 %v171, -0.14285715
      %v1520 = vsub.f32 %v172, -0.14285715
      %v1521 = vsub.f32 %v173, -0.14285715
      %v1522 = vsub.f32 %v174, -0.14285715
      %v1523 = vsub.f32 %v175, -0.14285715
      %v1524 = vsub.f32 %v176, -0.14285715
      %v1525 = vsub.f32 %v177, -0.14285715
      %v1526 = vsub.f32 %v178, -0.14285715
      %v1527 = vmul.f32 %v1495, %v1495
      %v1528 = vmul.f32 %v1496, %v1496
      %v1529 = vmul.f32 %v1497, %v1497
      %v1530 = vmul.f32 %v1498, %v1498
      %v1531 = vmul.f32 %v1499, %v1499
      %v1532 = vmul.f32 %v1500, %v1500
      %v1533 = vmul.f32 %v1501, %v1501
      %v1534 = vmul.f32 %v1502, %v1502
      %v1535 = vmul.f32 %v1503, %v1503
      %v1536 = vmul.f32 %v1504, %v1504
      %v1537 = vmul.f32 %v1505, %v1505
      %v1538 = vmul.f32 %v1506, %v1506
      %v1539 = vmul.f32 %v1507, %v1507
      %v1540 = vmul.f32 %v1508, %v1508
      %v1541 = vmul.f32 %v1509, %v1509
      %v1542 = vmul.f32 %v1510, %v1510
      %v1543 = vmul.f32 %v1511, %v1511
      %v1544 = vmul.f32 %v1512, %v1512
      %v1545 = vmul.f32 %v1513, %v1513
      %v1546 = vmul.f32 %v1514, %v1514
      %v1547 = vmul.f32 %v1515, %v1515
      %v1548 = vmul.f32 %v1516, %v1516
      %v1549 = vmul.f32 %v1517, %v1517
      %v1550 = vmul.f32 %v1518, %v1518
      %v1551 = vmul.f32 %v1519, %v1519
      %v1552 = vmul.f32 %v1520, %v1520
      %v1553 = vmul.f32 %v1521, %v1521
      %v1554 = vmul.f32 %v1522, %v1522
      %v1555 = vmul.f32 %v1523, %v1523
      %v1556 = vmul.f32 %v1524, %v1524
      %v1557 = vmul.f32 %v1525, %v1525
      %v1558 = vmul.f32 %v1526, %v1526
      %v1559 = vsub.f32 0.0, %v1527
      %v1560 = vsub.f32 0.0, %v1528
      %v1561 = vsub.f32 0.0, %v1529
      %v1562 = vsub.f32 0.0, %v1530
      %v1563 = vsub.f32 0.0, %v1531
      %v1564 = vsub.f32 0.0, %v1532
      %v1565 = vsub.f32 0.0, %v1533
      %v1566 = vsub.f32 0.0, %v1534
      %v1567 = vsub.f32 0.0, %v1535
      %v1568 = vsub.f32 0.0, %v1536
      %v1569 = vsub.f32 0.0, %v1537
      %v1570 = vsub.f32 0.0, %v1538
      %v1571 = vsub.f32 0.0, %v1539
      %v1572 = vsub.f32 0.0, %v1540
      %v1573 = vsub.f32 0.0, %v1541
      %v1574 = vsub.f32 0.0, %v1542
      %v1575 = vsub.f32 0.0, %v1543
      %v1576 = vsub.f32 0.0, %v1544
      %v1577 = vsub.f32 0.0, %v1545
      %v1578 = vsub.f32 0.0, %v1546
      %v1579 = vsub.f32 0.0, %v1547
      %v1580 = vsub.f32 0.0, %v1548
      %v1581 = vsub.f32 0.0, %v1549
      %v1582 = vsub.f32 0.0, %v1550
      %v1583 = vsub.f32 0.0, %v1551
      %v1584 = vsub.f32 0.0, %v1552
      %v1585 = vsub.f32 0.0, %v1553
      %v1586 = vsub.f32 0.0, %v1554
      %v1587 = vsub.f32 0.0, %v1555
      %v1588 = vsub.f32 0.0, %v1556
      %v1589 = vsub.f32 0.0, %v1557
      %v1590 = vsub.f32 0.0, %v1558
      %v1591 = vmul.f32 %v1559, 6.125
      %v1592 = vmul.f32 %v1560, 6.125
      %v1593 = vmul.f32 %v1561, 6.125
      %v1594 = vmul.f32 %v1562, 6.125
      %v1595 = vmul.f32 %v1563, 6.125
      %v1596 = vmul.f32 %v1564, 6.125
      %v1597 = vmul.f32 %v1565, 6.125
      %v1598 = vmul.f32 %v1566, 6.125
      %v1599 = vmul.f32 %v1567, 6.125
      %v1600 = vmul.f32 %v1568, 6.125
      %v1601 = vmul.f32 %v1569, 6.125
      %v1602 = vmul.f32 %v1570, 6.125
      %v1603 = vmul.f32 %v1571, 6.125
      %v1604 = vmul.f32 %v1572, 6.125
      %v1605 = vmul.f32 %v1573, 6.125
      %v1606 = vmul.f32 %v1574, 6.125
      %v1607 = vmul.f32 %v1575, 6.125
      %v1608 = vmul.f32 %v1576, 6.125
      %v1609 = vmul.f32 %v1577, 6.125
      %v1610 = vmul.f32 %v1578, 6.125
      %v1611 = vmul.f32 %v1579, 6.125
      %v1612 = vmul.f32 %v1580, 6.125
      %v1613 = vmul.f32 %v1581, 6.125
      %v1614 = vmul.f32 %v1582, 6.125
      %v1615 = vmul.f32 %v1583, 6.125
      %v1616 = vmul.f32 %v1584, 6.125
      %v1617 = vmul.f32 %v1585, 6.125
      %v1618 = vmul.f32 %v1586, 6.125
      %v1619 = vmul.f32 %v1587, 6.125
      %v1620 = vmul.f32 %v1588, 6.125
      %v1621 = vmul.f32 %v1589, 6.125
      %v1622 = vmul.f32 %v1590, 6.125
      %v1623 = vmul.f32 %v1591, 1.442695
      %v1624 = vpow.pop %v1623
      %v1625 = vmul.f32 %v1592, 1.442695
      %v1626 = vpow.pop %v1625
      %v1627 = vmul.f32 %v1593, 1.442695
      %v1628 = vpow.pop %v1627
      %v1629 = vmul.f32 %v1594, 1.442695
      %v1630 = vpow.pop %v1629
      %v1631 = vmul.f32 %v1595, 1.442695
      %v1632 = vpow.pop %v1631
      %v1633 = vmul.f32 %v1596, 1.442695
      %v1634 = vpow.pop %v1633
      %v1635 = vmul.f32 %v1597, 1.442695
      %v1636 = vpow.pop %v1635
      %v1637 = vmul.f32 %v1598, 1.442695
      %v1638 = vpow.pop %v1637
      %v1639 = vmul.f32 %v1599, 1.442695
      %v1640 = vpow.pop %v1639
      %v1641 = vmul.f32 %v1600, 1.442695
      %v1642 = vpow.pop %v1641
      %v1643 = vmul.f32 %v1601, 1.442695
      %v1644 = vpow.pop %v1643
      %v1645 = vmul.f32 %v1602, 1.442695
      %v1646 = vpow.pop %v1645
      %v1647 = vmul.f32 %v1603, 1.442695
      %v1648 = vpow.pop %v1647
      %v1649 = vmul.f32 %v1604, 1.442695
      %v1650 = vpow.pop %v1649
      %v1651 = vmul.f32 %v1605, 1.442695
      %v1652 = vpow.pop %v1651
      %v1653 = vmul.f32 %v1606, 1.442695
      %v1654 = vpow.pop %v1653
      %v1655 = vmul.f32 %v1607, 1.442695
      %v1656 = vpow.pop %v1655
      %v1657 = vmul.f32 %v1608, 1.442695
      %v1658 = vpow.pop %v1657
      %v1659 = vmul.f32 %v1609, 1.442695
      %v1660 = vpow.pop %v1659
      %v1661 = vmul.f32 %v1610, 1.442695
      %v1662 = vpow.pop %v1661
      %v1663 = vmul.f32 %v1611, 1.442695
      %v1664 = vpow.pop %v1663
      %v1665 = vmul.f32 %v1612, 1.442695
      %v1666 = vpow.pop %v1665
      %v1667 = vmul.f32 %v1613, 1.442695
      %v1668 = vpow.pop %v1667
      %v1669 = vmul.f32 %v1614, 1.442695
      %v1670 = vpow.pop %v1669
      %v1671 = vmul.f32 %v1615, 1.442695
      %v1672 = vpow.pop %v1671
      %v1673 = vmul.f32 %v1616, 1.442695
      %v1674 = vpow.pop %v1673
      %v1675 = vmul.f32 %v1617, 1.442695
      %v1676 = vpow.pop %v1675
      %v1677 = vmul.f32 %v1618, 1.442695
      %v1678 = vpow.pop %v1677
      %v1679 = vmul.f32 %v1619, 1.442695
      %v1680 = vpow.pop %v1679
      %v1681 = vmul.f32 %v1620, 1.442695
      %v1682 = vpow.pop %v1681
      %v1683 = vmul.f32 %v1621, 1.442695
      %v1684 = vpow.pop %v1683
      %v1685 = vmul.f32 %v1622, 1.442695
      %v1686 = vpow.pop %v1685
      %1687 = vst.msk [vmem:[#allocation2 + $0x8] sm:$0xff] %vm403, %v1624
      %1688 = vst.msk [vmem:[#allocation2 + $0x20] sm:$0xff] %vm403, %v1626
      %1689 = vst.msk [vmem:[#allocation2 + $0x38] sm:$0xff] %vm403, %v1628
      %1690 = vst.msk [vmem:[#allocation2 + $0x50] sm:$0xff] %vm403, %v1630
      %1691 = vst.msk [vmem:[#allocation2 + $0x68] sm:$0xff] %vm403, %v1632
      %1692 = vst.msk [vmem:[#allocation2 + $0x80] sm:$0xff] %vm403, %v1634
      %1693 = vst.msk [vmem:[#allocation2 + $0x98] sm:$0xff] %vm403, %v1636
      %1694 = vst.msk [vmem:[#allocation2 + $0xb0] sm:$0xff] %vm403, %v1638
      %1695 = vst.msk [vmem:[#allocation2 + $0xc8] sm:$0xff] %vm403, %v1640
      %1696 = vst.msk [vmem:[#allocation2 + $0xe0] sm:$0xff] %vm403, %v1642
      %1697 = vst.msk [vmem:[#allocation2 + $0xf8] sm:$0xff] %vm403, %v1644
      %1698 = vst.msk [vmem:[#allocation2 + $0x110] sm:$0xff] %vm403, %v1646
      %1699 = vst.msk [vmem:[#allocation2 + $0x128] sm:$0xff] %vm403, %v1648
      %1700 = vst.msk [vmem:[#allocation2 + $0x140] sm:$0xff] %vm403, %v1650
      %1701 = vst.msk [vmem:[#allocation2 + $0x158] sm:$0xff] %vm403, %v1652
      %1702 = vst.msk [vmem:[#allocation2 + $0x170] sm:$0xff] %vm403, %v1654
      %1703 = vst.msk [vmem:[#allocation2 + $0x188] sm:$0xff] %vm403, %v1656
      %1704 = vst.msk [vmem:[#allocation2 + $0x1a0] sm:$0xff] %vm403, %v1658
      %1705 = vst.msk [vmem:[#allocation2 + $0x1b8] sm:$0xff] %vm403, %v1660
      %1706 = vst.msk [vmem:[#allocation2 + $0x1d0] sm:$0xff] %vm403, %v1662
      %1707 = vst.msk [vmem:[#allocation2 + $0x1e8] sm:$0xff] %vm403, %v1664
      %1708 = vst.msk [vmem:[#allocation2 + $0x200] sm:$0xff] %vm403, %v1666
      %1709 = vst.msk [vmem:[#allocation2 + $0x218] sm:$0xff] %vm403, %v1668
      %1710 = vst.msk [vmem:[#allocation2 + $0x230] sm:$0xff] %vm403, %v1670
      %1711 = vst.msk [vmem:[#allocation2 + $0x248] sm:$0xff] %vm403, %v1672
      %1712 = vst.msk [vmem:[#allocation2 + $0x260] sm:$0xff] %vm403, %v1674
      %1713 = vst.msk [vmem:[#allocation2 + $0x278] sm:$0xff] %vm403, %v1676
      %1714 = vst.msk [vmem:[#allocation2 + $0x290] sm:$0xff] %vm403, %v1678
      %1715 = vst.msk [vmem:[#allocation2 + $0x2a8] sm:$0xff] %vm403, %v1680
      %1716 = vst.msk [vmem:[#allocation2 + $0x2c0] sm:$0xff] %vm403, %v1682
      %1717 = vst.msk [vmem:[#allocation2 + $0x2d8] sm:$0xff] %vm403, %v1684
      %1718 = vst.msk [vmem:[#allocation2 + $0x2f0] sm:$0xff] %vm403, %v1686
      %v1719 = vsub.f32 %v147, 0.14285715
      %v1720 = vsub.f32 %v148, 0.14285715
      %v1721 = vsub.f32 %v149, 0.14285715
      %v1722 = vsub.f32 %v150, 0.14285715
      %v1723 = vsub.f32 %v151, 0.14285715
      %v1724 = vsub.f32 %v152, 0.14285715
      %v1725 = vsub.f32 %v153, 0.14285715
      %v1726 = vsub.f32 %v154, 0.14285715
      %v1727 = vsub.f32 %v155, 0.14285715
      %v1728 = vsub.f32 %v156, 0.14285715
      %v1729 = vsub.f32 %v157, 0.14285715
      %v1730 = vsub.f32 %v158, 0.14285715
      %v1731 = vsub.f32 %v159, 0.14285715
      %v1732 = vsub.f32 %v160, 0.14285715
      %v1733 = vsub.f32 %v161, 0.14285715
      %v1734 = vsub.f32 %v162, 0.14285715
      %v1735 = vsub.f32 %v163, 0.14285715
      %v1736 = vsub.f32 %v164, 0.14285715
      %v1737 = vsub.f32 %v165, 0.14285715
      %v1738 = vsub.f32 %v166, 0.14285715
      %v1739 = vsub.f32 %v167, 0.14285715
      %v1740 = vsub.f32 %v168, 0.14285715
      %v1741 = vsub.f32 %v169, 0.14285715
      %v1742 = vsub.f32 %v170, 0.14285715
      %v1743 = vsub.f32 %v171, 0.14285715
      %v1744 = vsub.f32 %v172, 0.14285715
      %v1745 = vsub.f32 %v173, 0.14285715
      %v1746 = vsub.f32 %v174, 0.14285715
      %v1747 = vsub.f32 %v175, 0.14285715
      %v1748 = vsub.f32 %v176, 0.14285715
      %v1749 = vsub.f32 %v177, 0.14285715
      %v1750 = vsub.f32 %v178, 0.14285715
      %v1751 = vmul.f32 %v1719, %v1719
      %v1752 = vmul.f32 %v1720, %v1720
      %v1753 = vmul.f32 %v1721, %v1721
      %v1754 = vmul.f32 %v1722, %v1722
      %v1755 = vmul.f32 %v1723, %v1723
      %v1756 = vmul.f32 %v1724, %v1724
      %v1757 = vmul.f32 %v1725, %v1725
      %v1758 = vmul.f32 %v1726, %v1726
      %v1759 = vmul.f32 %v1727, %v1727
      %v1760 = vmul.f32 %v1728, %v1728
      %v1761 = vmul.f32 %v1729, %v1729
      %v1762 = vmul.f32 %v1730, %v1730
      %v1763 = vmul.f32 %v1731, %v1731
      %v1764 = vmul.f32 %v1732, %v1732
      %v1765 = vmul.f32 %v1733, %v1733
      %v1766 = vmul.f32 %v1734, %v1734
      %v1767 = vmul.f32 %v1735, %v1735
      %v1768 = vmul.f32 %v1736, %v1736
      %v1769 = vmul.f32 %v1737, %v1737
      %v1770 = vmul.f32 %v1738, %v1738
      %v1771 = vmul.f32 %v1739, %v1739
      %v1772 = vmul.f32 %v1740, %v1740
      %v1773 = vmul.f32 %v1741, %v1741
      %v1774 = vmul.f32 %v1742, %v1742
      %v1775 = vmul.f32 %v1743, %v1743
      %v1776 = vmul.f32 %v1744, %v1744
      %v1777 = vmul.f32 %v1745, %v1745
      %v1778 = vmul.f32 %v1746, %v1746
      %v1779 = vmul.f32 %v1747, %v1747
      %v1780 = vmul.f32 %v1748, %v1748
      %v1781 = vmul.f32 %v1749, %v1749
      %v1782 = vmul.f32 %v1750, %v1750
      %v1783 = vsub.f32 0.0, %v1751
      %v1784 = vsub.f32 0.0, %v1752
      %v1785 = vsub.f32 0.0, %v1753
      %v1786 = vsub.f32 0.0, %v1754
      %v1787 = vsub.f32 0.0, %v1755
      %v1788 = vsub.f32 0.0, %v1756
      %v1789 = vsub.f32 0.0, %v1757
      %v1790 = vsub.f32 0.0, %v1758
      %v1791 = vsub.f32 0.0, %v1759
      %v1792 = vsub.f32 0.0, %v1760
      %v1793 = vsub.f32 0.0, %v1761
      %v1794 = vsub.f32 0.0, %v1762
      %v1795 = vsub.f32 0.0, %v1763
      %v1796 = vsub.f32 0.0, %v1764
      %v1797 = vsub.f32 0.0, %v1765
      %v1798 = vsub.f32 0.0, %v1766
      %v1799 = vsub.f32 0.0, %v1767
      %v1800 = vsub.f32 0.0, %v1768
      %v1801 = vsub.f32 0.0, %v1769
      %v1802 = vsub.f32 0.0, %v1770
      %v1803 = vsub.f32 0.0, %v1771
      %v1804 = vsub.f32 0.0, %v1772
      %v1805 = vsub.f32 0.0, %v1773
      %v1806 = vsub.f32 0.0, %v1774
      %v1807 = vsub.f32 0.0, %v1775
      %v1808 = vsub.f32 0.0, %v1776
      %v1809 = vsub.f32 0.0, %v1777
      %v1810 = vsub.f32 0.0, %v1778
      %v1811 = vsub.f32 0.0, %v1779
      %v1812 = vsub.f32 0.0, %v1780
      %v1813 = vsub.f32 0.0, %v1781
      %v1814 = vsub.f32 0.0, %v1782
      %v1815 = vmul.f32 %v1783, 6.125
      %v1816 = vmul.f32 %v1784, 6.125
      %v1817 = vmul.f32 %v1785, 6.125
      %v1818 = vmul.f32 %v1786, 6.125
      %v1819 = vmul.f32 %v1787, 6.125
      %v1820 = vmul.f32 %v1788, 6.125
      %v1821 = vmul.f32 %v1789, 6.125
      %v1822 = vmul.f32 %v1790, 6.125
      %v1823 = vmul.f32 %v1791, 6.125
      %v1824 = vmul.f32 %v1792, 6.125
      %v1825 = vmul.f32 %v1793, 6.125
      %v1826 = vmul.f32 %v1794, 6.125
      %v1827 = vmul.f32 %v1795, 6.125
      %v1828 = vmul.f32 %v1796, 6.125
      %v1829 = vmul.f32 %v1797, 6.125
      %v1830 = vmul.f32 %v1798, 6.125
      %v1831 = vmul.f32 %v1799, 6.125
      %v1832 = vmul.f32 %v1800, 6.125
      %v1833 = vmul.f32 %v1801, 6.125
      %v1834 = vmul.f32 %v1802, 6.125
      %v1835 = vmul.f32 %v1803, 6.125
      %v1836 = vmul.f32 %v1804, 6.125
      %v1837 = vmul.f32 %v1805, 6.125
      %v1838 = vmul.f32 %v1806, 6.125
      %v1839 = vmul.f32 %v1807, 6.125
      %v1840 = vmul.f32 %v1808, 6.125
      %v1841 = vmul.f32 %v1809, 6.125
      %v1842 = vmul.f32 %v1810, 6.125
      %v1843 = vmul.f32 %v1811, 6.125
      %v1844 = vmul.f32 %v1812, 6.125
      %v1845 = vmul.f32 %v1813, 6.125
      %v1846 = vmul.f32 %v1814, 6.125
      %v1847 = vmul.f32 %v1815, 1.442695
      %v1848 = vpow.pop %v1847
      %v1849 = vmul.f32 %v1816, 1.442695
      %v1850 = vpow.pop %v1849
      %v1851 = vmul.f32 %v1817, 1.442695
      %v1852 = vpow.pop %v1851
      %v1853 = vmul.f32 %v1818, 1.442695
      %v1854 = vpow.pop %v1853
      %v1855 = vmul.f32 %v1819, 1.442695
      %v1856 = vpow.pop %v1855
      %v1857 = vmul.f32 %v1820, 1.442695
      %v1858 = vpow.pop %v1857
      %v1859 = vmul.f32 %v1821, 1.442695
      %v1860 = vpow.pop %v1859
      %v1861 = vmul.f32 %v1822, 1.442695
      %v1862 = vpow.pop %v1861
      %v1863 = vmul.f32 %v1823, 1.442695
      %v1864 = vpow.pop %v1863
      %v1865 = vmul.f32 %v1824, 1.442695
      %v1866 = vpow.pop %v1865
      %v1867 = vmul.f32 %v1825, 1.442695
      %v1868 = vpow.pop %v1867
      %v1869 = vmul.f32 %v1826, 1.442695
      %v1870 = vpow.pop %v1869
      %v1871 = vmul.f32 %v1827, 1.442695
      %v1872 = vpow.pop %v1871
      %v1873 = vmul.f32 %v1828, 1.442695
      %v1874 = vpow.pop %v1873
      %v1875 = vmul.f32 %v1829, 1.442695
      %v1876 = vpow.pop %v1875
      %v1877 = vmul.f32 %v1830, 1.442695
      %v1878 = vpow.pop %v1877
      %v1879 = vmul.f32 %v1831, 1.442695
      %v1880 = vpow.pop %v1879
      %v1881 = vmul.f32 %v1832, 1.442695
      %v1882 = vpow.pop %v1881
      %v1883 = vmul.f32 %v1833, 1.442695
      %v1884 = vpow.pop %v1883
      %v1885 = vmul.f32 %v1834, 1.442695
      %v1886 = vpow.pop %v1885
      %v1887 = vmul.f32 %v1835, 1.442695
      %v1888 = vpow.pop %v1887
      %v1889 = vmul.f32 %v1836, 1.442695
      %v1890 = vpow.pop %v1889
      %v1891 = vmul.f32 %v1837, 1.442695
      %v1892 = vpow.pop %v1891
      %v1893 = vmul.f32 %v1838, 1.442695
      %v1894 = vpow.pop %v1893
      %v1895 = vmul.f32 %v1839, 1.442695
      %v1896 = vpow.pop %v1895
      %v1897 = vmul.f32 %v1840, 1.442695
      %v1898 = vpow.pop %v1897
      %v1899 = vmul.f32 %v1841, 1.442695
      %v1900 = vpow.pop %v1899
      %v1901 = vmul.f32 %v1842, 1.442695
      %v1902 = vpow.pop %v1901
      %v1903 = vmul.f32 %v1843, 1.442695
      %v1904 = vpow.pop %v1903
      %v1905 = vmul.f32 %v1844, 1.442695
      %v1906 = vpow.pop %v1905
      %v1907 = vmul.f32 %v1845, 1.442695
      %v1908 = vpow.pop %v1907
      %v1909 = vmul.f32 %v1846, 1.442695
      %v1910 = vpow.pop %v1909
      %1943 = vrot.lane.b32.xlu0 %v1848, 32
      %v1944 = vpop.permute.xlu0 %1943
      %1945 = vrot.lane.b32.xlu0 %v1850, 32
      %v1946 = vpop.permute.xlu0 %1945
      %1947 = vrot.lane.b32.xlu0 %v1852, 32
      %v1948 = vpop.permute.xlu0 %1947
      %1949 = vrot.lane.b32.xlu0 %v1854, 32
      %v1950 = vpop.permute.xlu0 %1949
      %1951 = vrot.lane.b32.xlu0 %v1856, 32
      %v1952 = vpop.permute.xlu0 %1951
      %1953 = vrot.lane.b32.xlu0 %v1858, 32
      %v1954 = vpop.permute.xlu0 %1953
      %1955 = vrot.lane.b32.xlu0 %v1860, 32
      %v1956 = vpop.permute.xlu0 %1955
      %1957 = vrot.lane.b32.xlu0 %v1862, 32
      %v1958 = vpop.permute.xlu0 %1957
      %1959 = vrot.lane.b32.xlu0 %v1864, 32
      %v1960 = vpop.permute.xlu0 %1959
      %1961 = vrot.lane.b32.xlu0 %v1866, 32
      %v1962 = vpop.permute.xlu0 %1961
      %1963 = vrot.lane.b32.xlu0 %v1868, 32
      %v1964 = vpop.permute.xlu0 %1963
      %1965 = vrot.lane.b32.xlu0 %v1870, 32
      %v1966 = vpop.permute.xlu0 %1965
      %1967 = vrot.lane.b32.xlu0 %v1872, 32
      %v1968 = vpop.permute.xlu0 %1967
      %1969 = vrot.lane.b32.xlu0 %v1874, 32
      %v1970 = vpop.permute.xlu0 %1969
      %1971 = vrot.lane.b32.xlu0 %v1876, 32
      %v1972 = vpop.permute.xlu0 %1971
      %1973 = vrot.lane.b32.xlu0 %v1878, 32
      %v1974 = vpop.permute.xlu0 %1973
      %1975 = vrot.lane.b32.xlu0 %v1880, 32
      %v1976 = vpop.permute.xlu0 %1975
      %1977 = vrot.lane.b32.xlu0 %v1882, 32
      %v1978 = vpop.permute.xlu0 %1977
      %1979 = vrot.lane.b32.xlu0 %v1884, 32
      %v1980 = vpop.permute.xlu0 %1979
      %1981 = vrot.lane.b32.xlu0 %v1886, 32
      %v1982 = vpop.permute.xlu0 %1981
      %1983 = vrot.lane.b32.xlu0 %v1888, 32
      %v1984 = vpop.permute.xlu0 %1983
      %1985 = vrot.lane.b32.xlu0 %v1890, 32
      %v1986 = vpop.permute.xlu0 %1985
      %1987 = vrot.lane.b32.xlu0 %v1892, 32
      %v1988 = vpop.permute.xlu0 %1987
      %1989 = vrot.lane.b32.xlu0 %v1894, 32
      %v1990 = vpop.permute.xlu0 %1989
      %1991 = vrot.lane.b32.xlu0 %v1896, 32
      %v1992 = vpop.permute.xlu0 %1991
      %1993 = vrot.lane.b32.xlu0 %v1898, 32
      %v1994 = vpop.permute.xlu0 %1993
      %1995 = vrot.lane.b32.xlu0 %v1900, 32
      %v1996 = vpop.permute.xlu0 %1995
      %1997 = vrot.lane.b32.xlu0 %v1902, 32
      %v1998 = vpop.permute.xlu0 %1997
      %1999 = vrot.lane.b32.xlu0 %v1904, 32
      %v2000 = vpop.permute.xlu0 %1999
      %2001 = vrot.lane.b32.xlu0 %v1906, 32
      %v2002 = vpop.permute.xlu0 %2001
      %2003 = vrot.lane.b32.xlu0 %v1908, 32
      %v2004 = vpop.permute.xlu0 %2003
      %2005 = vrot.lane.b32.xlu0 %v1910, 32
      %v2006 = vpop.permute.xlu0 %2005
      %2039 = vst.msk [vmem:[#allocation2 + $0x8] sm:$0xff] %vm756, %v1944
      %2040 = vst.msk [vmem:[#allocation2 + $0x20] sm:$0xff] %vm756, %v1946
      %2041 = vst.msk [vmem:[#allocation2 + $0x38] sm:$0xff] %vm756, %v1948
      %2042 = vst.msk [vmem:[#allocation2 + $0x50] sm:$0xff] %vm756, %v1950
      %2043 = vst.msk [vmem:[#allocation2 + $0x68] sm:$0xff] %vm756, %v1952
      %2044 = vst.msk [vmem:[#allocation2 + $0x80] sm:$0xff] %vm756, %v1954
      %2045 = vst.msk [vmem:[#allocation2 + $0x98] sm:$0xff] %vm756, %v1956
      %2046 = vst.msk [vmem:[#allocation2 + $0xb0] sm:$0xff] %vm756, %v1958
      %2047 = vst.msk [vmem:[#allocation2 + $0xc8] sm:$0xff] %vm756, %v1960
      %2048 = vst.msk [vmem:[#allocation2 + $0xe0] sm:$0xff] %vm756, %v1962
      %2049 = vst.msk [vmem:[#allocation2 + $0xf8] sm:$0xff] %vm756, %v1964
      %2050 = vst.msk [vmem:[#allocation2 + $0x110] sm:$0xff] %vm756, %v1966
      %2051 = vst.msk [vmem:[#allocation2 + $0x128] sm:$0xff] %vm756, %v1968
      %2052 = vst.msk [vmem:[#allocation2 + $0x140] sm:$0xff] %vm756, %v1970
      %2053 = vst.msk [vmem:[#allocation2 + $0x158] sm:$0xff] %vm756, %v1972
      %2054 = vst.msk [vmem:[#allocation2 + $0x170] sm:$0xff] %vm756, %v1974
      %2055 = vst.msk [vmem:[#allocation2 + $0x188] sm:$0xff] %vm756, %v1976
      %2056 = vst.msk [vmem:[#allocation2 + $0x1a0] sm:$0xff] %vm756, %v1978
      %2057 = vst.msk [vmem:[#allocation2 + $0x1b8] sm:$0xff] %vm756, %v1980
      %2058 = vst.msk [vmem:[#allocation2 + $0x1d0] sm:$0xff] %vm756, %v1982
      %2059 = vst.msk [vmem:[#allocation2 + $0x1e8] sm:$0xff] %vm756, %v1984
      %2060 = vst.msk [vmem:[#allocation2 + $0x200] sm:$0xff] %vm756, %v1986
      %2061 = vst.msk [vmem:[#allocation2 + $0x218] sm:$0xff] %vm756, %v1988
      %2062 = vst.msk [vmem:[#allocation2 + $0x230] sm:$0xff] %vm756, %v1990
      %2063 = vst.msk [vmem:[#allocation2 + $0x248] sm:$0xff] %vm756, %v1992
      %2064 = vst.msk [vmem:[#allocation2 + $0x260] sm:$0xff] %vm756, %v1994
      %2065 = vst.msk [vmem:[#allocation2 + $0x278] sm:$0xff] %vm756, %v1996
      %2066 = vst.msk [vmem:[#allocation2 + $0x290] sm:$0xff] %vm756, %v1998
      %2067 = vst.msk [vmem:[#allocation2 + $0x2a8] sm:$0xff] %vm756, %v2000
      %2068 = vst.msk [vmem:[#allocation2 + $0x2c0] sm:$0xff] %vm756, %v2002
      %2069 = vst.msk [vmem:[#allocation2 + $0x2d8] sm:$0xff] %vm756, %v2004
      %2070 = vst.msk [vmem:[#allocation2 + $0x2f0] sm:$0xff] %vm756, %v2006
      %v2071 = vsub.f32 %v147, 0.42857143
      %v2072 = vsub.f32 %v148, 0.42857143
      %v2073 = vsub.f32 %v149, 0.42857143
      %v2074 = vsub.f32 %v150, 0.42857143
      %v2075 = vsub.f32 %v151, 0.42857143
      %v2076 = vsub.f32 %v152, 0.42857143
      %v2077 = vsub.f32 %v153, 0.42857143
      %v2078 = vsub.f32 %v154, 0.42857143
      %v2079 = vsub.f32 %v155, 0.42857143
      %v2080 = vsub.f32 %v156, 0.42857143
      %v2081 = vsub.f32 %v157, 0.42857143
      %v2082 = vsub.f32 %v158, 0.42857143
      %v2083 = vsub.f32 %v159, 0.42857143
      %v2084 = vsub.f32 %v160, 0.42857143
      %v2085 = vsub.f32 %v161, 0.42857143
      %v2086 = vsub.f32 %v162, 0.42857143
      %v2087 = vsub.f32 %v163, 0.42857143
      %v2088 = vsub.f32 %v164, 0.42857143
      %v2089 = vsub.f32 %v165, 0.42857143
      %v2090 = vsub.f32 %v166, 0.42857143
      %v2091 = vsub.f32 %v167, 0.42857143
      %v2092 = vsub.f32 %v168, 0.42857143
      %v2093 = vsub.f32 %v169, 0.42857143
      %v2094 = vsub.f32 %v170, 0.42857143
      %v2095 = vsub.f32 %v171, 0.42857143
      %v2096 = vsub.f32 %v172, 0.42857143
      %v2097 = vsub.f32 %v173, 0.42857143
      %v2098 = vsub.f32 %v174, 0.42857143
      %v2099 = vsub.f32 %v175, 0.42857143
      %v2100 = vsub.f32 %v176, 0.42857143
      %v2101 = vsub.f32 %v177, 0.42857143
      %v2102 = vsub.f32 %v178, 0.42857143
      %v2103 = vmul.f32 %v2071, %v2071
      %v2104 = vmul.f32 %v2072, %v2072
      %v2105 = vmul.f32 %v2073, %v2073
      %v2106 = vmul.f32 %v2074, %v2074
      %v2107 = vmul.f32 %v2075, %v2075
      %v2108 = vmul.f32 %v2076, %v2076
      %v2109 = vmul.f32 %v2077, %v2077
      %v2110 = vmul.f32 %v2078, %v2078
      %v2111 = vmul.f32 %v2079, %v2079
      %v2112 = vmul.f32 %v2080, %v2080
      %v2113 = vmul.f32 %v2081, %v2081
      %v2114 = vmul.f32 %v2082, %v2082
      %v2115 = vmul.f32 %v2083, %v2083
      %v2116 = vmul.f32 %v2084, %v2084
      %v2117 = vmul.f32 %v2085, %v2085
      %v2118 = vmul.f32 %v2086, %v2086
      %v2119 = vmul.f32 %v2087, %v2087
      %v2120 = vmul.f32 %v2088, %v2088
      %v2121 = vmul.f32 %v2089, %v2089
      %v2122 = vmul.f32 %v2090, %v2090
      %v2123 = vmul.f32 %v2091, %v2091
      %v2124 = vmul.f32 %v2092, %v2092
      %v2125 = vmul.f32 %v2093, %v2093
      %v2126 = vmul.f32 %v2094, %v2094
      %v2127 = vmul.f32 %v2095, %v2095
      %v2128 = vmul.f32 %v2096, %v2096
      %v2129 = vmul.f32 %v2097, %v2097
      %v2130 = vmul.f32 %v2098, %v2098
      %v2131 = vmul.f32 %v2099, %v2099
      %v2132 = vmul.f32 %v2100, %v2100
      %v2133 = vmul.f32 %v2101, %v2101
      %v2134 = vmul.f32 %v2102, %v2102
      %v2135 = vsub.f32 0.0, %v2103
      %v2136 = vsub.f32 0.0, %v2104
      %v2137 = vsub.f32 0.0, %v2105
      %v2138 = vsub.f32 0.0, %v2106
      %v2139 = vsub.f32 0.0, %v2107
      %v2140 = vsub.f32 0.0, %v2108
      %v2141 = vsub.f32 0.0, %v2109
      %v2142 = vsub.f32 0.0, %v2110
      %v2143 = vsub.f32 0.0, %v2111
      %v2144 = vsub.f32 0.0, %v2112
      %v2145 = vsub.f32 0.0, %v2113
      %v2146 = vsub.f32 0.0, %v2114
      %v2147 = vsub.f32 0.0, %v2115
      %v2148 = vsub.f32 0.0, %v2116
      %v2149 = vsub.f32 0.0, %v2117
      %v2150 = vsub.f32 0.0, %v2118
      %v2151 = vsub.f32 0.0, %v2119
      %v2152 = vsub.f32 0.0, %v2120
      %v2153 = vsub.f32 0.0, %v2121
      %v2154 = vsub.f32 0.0, %v2122
      %v2155 = vsub.f32 0.0, %v2123
      %v2156 = vsub.f32 0.0, %v2124
      %v2157 = vsub.f32 0.0, %v2125
      %v2158 = vsub.f32 0.0, %v2126
      %v2159 = vsub.f32 0.0, %v2127
      %v2160 = vsub.f32 0.0, %v2128
      %v2161 = vsub.f32 0.0, %v2129
      %v2162 = vsub.f32 0.0, %v2130
      %v2163 = vsub.f32 0.0, %v2131
      %v2164 = vsub.f32 0.0, %v2132
      %v2165 = vsub.f32 0.0, %v2133
      %v2166 = vsub.f32 0.0, %v2134
      %v2167 = vmul.f32 %v2135, 6.125
      %v2168 = vmul.f32 %v2136, 6.125
      %v2169 = vmul.f32 %v2137, 6.125
      %v2170 = vmul.f32 %v2138, 6.125
      %v2171 = vmul.f32 %v2139, 6.125
      %v2172 = vmul.f32 %v2140, 6.125
      %v2173 = vmul.f32 %v2141, 6.125
      %v2174 = vmul.f32 %v2142, 6.125
      %v2175 = vmul.f32 %v2143, 6.125
      %v2176 = vmul.f32 %v2144, 6.125
      %v2177 = vmul.f32 %v2145, 6.125
      %v2178 = vmul.f32 %v2146, 6.125
      %v2179 = vmul.f32 %v2147, 6.125
      %v2180 = vmul.f32 %v2148, 6.125
      %v2181 = vmul.f32 %v2149, 6.125
      %v2182 = vmul.f32 %v2150, 6.125
      %v2183 = vmul.f32 %v2151, 6.125
      %v2184 = vmul.f32 %v2152, 6.125
      %v2185 = vmul.f32 %v2153, 6.125
      %v2186 = vmul.f32 %v2154, 6.125
      %v2187 = vmul.f32 %v2155, 6.125
      %v2188 = vmul.f32 %v2156, 6.125
      %v2189 = vmul.f32 %v2157, 6.125
      %v2190 = vmul.f32 %v2158, 6.125
      %v2191 = vmul.f32 %v2159, 6.125
      %v2192 = vmul.f32 %v2160, 6.125
      %v2193 = vmul.f32 %v2161, 6.125
      %v2194 = vmul.f32 %v2162, 6.125
      %v2195 = vmul.f32 %v2163, 6.125
      %v2196 = vmul.f32 %v2164, 6.125
      %v2197 = vmul.f32 %v2165, 6.125
      %v2198 = vmul.f32 %v2166, 6.125
      %v2199 = vmul.f32 %v2167, 1.442695
      %v2200 = vpow.pop %v2199
      %v2201 = vmul.f32 %v2168, 1.442695
      %v2202 = vpow.pop %v2201
      %v2203 = vmul.f32 %v2169, 1.442695
      %v2204 = vpow.pop %v2203
      %v2205 = vmul.f32 %v2170, 1.442695
      %v2206 = vpow.pop %v2205
      %v2207 = vmul.f32 %v2171, 1.442695
      %v2208 = vpow.pop %v2207
      %v2209 = vmul.f32 %v2172, 1.442695
      %v2210 = vpow.pop %v2209
      %v2211 = vmul.f32 %v2173, 1.442695
      %v2212 = vpow.pop %v2211
      %v2213 = vmul.f32 %v2174, 1.442695
      %v2214 = vpow.pop %v2213
      %v2215 = vmul.f32 %v2175, 1.442695
      %v2216 = vpow.pop %v2215
      %v2217 = vmul.f32 %v2176, 1.442695
      %v2218 = vpow.pop %v2217
      %v2219 = vmul.f32 %v2177, 1.442695
      %v2220 = vpow.pop %v2219
      %v2221 = vmul.f32 %v2178, 1.442695
      %v2222 = vpow.pop %v2221
      %v2223 = vmul.f32 %v2179, 1.442695
      %v2224 = vpow.pop %v2223
      %v2225 = vmul.f32 %v2180, 1.442695
      %v2226 = vpow.pop %v2225
      %v2227 = vmul.f32 %v2181, 1.442695
      %v2228 = vpow.pop %v2227
      %v2229 = vmul.f32 %v2182, 1.442695
      %v2230 = vpow.pop %v2229
      %v2231 = vmul.f32 %v2183, 1.442695
      %v2232 = vpow.pop %v2231
      %v2233 = vmul.f32 %v2184, 1.442695
      %v2234 = vpow.pop %v2233
      %v2235 = vmul.f32 %v2185, 1.442695
      %v2236 = vpow.pop %v2235
      %v2237 = vmul.f32 %v2186, 1.442695
      %v2238 = vpow.pop %v2237
      %v2239 = vmul.f32 %v2187, 1.442695
      %v2240 = vpow.pop %v2239
      %v2241 = vmul.f32 %v2188, 1.442695
      %v2242 = vpow.pop %v2241
      %v2243 = vmul.f32 %v2189, 1.442695
      %v2244 = vpow.pop %v2243
      %v2245 = vmul.f32 %v2190, 1.442695
      %v2246 = vpow.pop %v2245
      %v2247 = vmul.f32 %v2191, 1.442695
      %v2248 = vpow.pop %v2247
      %v2249 = vmul.f32 %v2192, 1.442695
      %v2250 = vpow.pop %v2249
      %v2251 = vmul.f32 %v2193, 1.442695
      %v2252 = vpow.pop %v2251
      %v2253 = vmul.f32 %v2194, 1.442695
      %v2254 = vpow.pop %v2253
      %v2255 = vmul.f32 %v2195, 1.442695
      %v2256 = vpow.pop %v2255
      %v2257 = vmul.f32 %v2196, 1.442695
      %v2258 = vpow.pop %v2257
      %v2259 = vmul.f32 %v2197, 1.442695
      %v2260 = vpow.pop %v2259
      %v2261 = vmul.f32 %v2198, 1.442695
      %v2262 = vpow.pop %v2261
      %2295 = vrot.lane.b32.xlu0 %v2200, 64
      %v2296 = vpop.permute.xlu0 %2295
      %2297 = vrot.lane.b32.xlu0 %v2202, 64
      %v2298 = vpop.permute.xlu0 %2297
      %2299 = vrot.lane.b32.xlu0 %v2204, 64
      %v2300 = vpop.permute.xlu0 %2299
      %2301 = vrot.lane.b32.xlu0 %v2206, 64
      %v2302 = vpop.permute.xlu0 %2301
      %2303 = vrot.lane.b32.xlu0 %v2208, 64
      %v2304 = vpop.permute.xlu0 %2303
      %2305 = vrot.lane.b32.xlu0 %v2210, 64
      %v2306 = vpop.permute.xlu0 %2305
      %2307 = vrot.lane.b32.xlu0 %v2212, 64
      %v2308 = vpop.permute.xlu0 %2307
      %2309 = vrot.lane.b32.xlu0 %v2214, 64
      %v2310 = vpop.permute.xlu0 %2309
      %2311 = vrot.lane.b32.xlu0 %v2216, 64
      %v2312 = vpop.permute.xlu0 %2311
      %2313 = vrot.lane.b32.xlu0 %v2218, 64
      %v2314 = vpop.permute.xlu0 %2313
      %2315 = vrot.lane.b32.xlu0 %v2220, 64
      %v2316 = vpop.permute.xlu0 %2315
      %2317 = vrot.lane.b32.xlu0 %v2222, 64
      %v2318 = vpop.permute.xlu0 %2317
      %2319 = vrot.lane.b32.xlu0 %v2224, 64
      %v2320 = vpop.permute.xlu0 %2319
      %2321 = vrot.lane.b32.xlu0 %v2226, 64
      %v2322 = vpop.permute.xlu0 %2321
      %2323 = vrot.lane.b32.xlu0 %v2228, 64
      %v2324 = vpop.permute.xlu0 %2323
      %2325 = vrot.lane.b32.xlu0 %v2230, 64
      %v2326 = vpop.permute.xlu0 %2325
      %2327 = vrot.lane.b32.xlu0 %v2232, 64
      %v2328 = vpop.permute.xlu0 %2327
      %2329 = vrot.lane.b32.xlu0 %v2234, 64
      %v2330 = vpop.permute.xlu0 %2329
      %2331 = vrot.lane.b32.xlu0 %v2236, 64
      %v2332 = vpop.permute.xlu0 %2331
      %2333 = vrot.lane.b32.xlu0 %v2238, 64
      %v2334 = vpop.permute.xlu0 %2333
      %2335 = vrot.lane.b32.xlu0 %v2240, 64
      %v2336 = vpop.permute.xlu0 %2335
      %2337 = vrot.lane.b32.xlu0 %v2242, 64
      %v2338 = vpop.permute.xlu0 %2337
      %2339 = vrot.lane.b32.xlu0 %v2244, 64
      %v2340 = vpop.permute.xlu0 %2339
      %2341 = vrot.lane.b32.xlu0 %v2246, 64
      %v2342 = vpop.permute.xlu0 %2341
      %2343 = vrot.lane.b32.xlu0 %v2248, 64
      %v2344 = vpop.permute.xlu0 %2343
      %2345 = vrot.lane.b32.xlu0 %v2250, 64
      %v2346 = vpop.permute.xlu0 %2345
      %2347 = vrot.lane.b32.xlu0 %v2252, 64
      %v2348 = vpop.permute.xlu0 %2347
      %2349 = vrot.lane.b32.xlu0 %v2254, 64
      %v2350 = vpop.permute.xlu0 %2349
      %2351 = vrot.lane.b32.xlu0 %v2256, 64
      %v2352 = vpop.permute.xlu0 %2351
      %2353 = vrot.lane.b32.xlu0 %v2258, 64
      %v2354 = vpop.permute.xlu0 %2353
      %2355 = vrot.lane.b32.xlu0 %v2260, 64
      %v2356 = vpop.permute.xlu0 %2355
      %2357 = vrot.lane.b32.xlu0 %v2262, 64
      %v2358 = vpop.permute.xlu0 %2357
      %2391 = vst.msk [vmem:[#allocation2 + $0x8] sm:$0xff] %vm1109, %v2296
      %2392 = vst.msk [vmem:[#allocation2 + $0x20] sm:$0xff] %vm1109, %v2298
      %2393 = vst.msk [vmem:[#allocation2 + $0x38] sm:$0xff] %vm1109, %v2300
      %2394 = vst.msk [vmem:[#allocation2 + $0x50] sm:$0xff] %vm1109, %v2302
      %2395 = vst.msk [vmem:[#allocation2 + $0x68] sm:$0xff] %vm1109, %v2304
      %2396 = vst.msk [vmem:[#allocation2 + $0x80] sm:$0xff] %vm1109, %v2306
      %2397 = vst.msk [vmem:[#allocation2 + $0x98] sm:$0xff] %vm1109, %v2308
      %2398 = vst.msk [vmem:[#allocation2 + $0xb0] sm:$0xff] %vm1109, %v2310
      %2399 = vst.msk [vmem:[#allocation2 + $0xc8] sm:$0xff] %vm1109, %v2312
      %2400 = vst.msk [vmem:[#allocation2 + $0xe0] sm:$0xff] %vm1109, %v2314
      %2401 = vst.msk [vmem:[#allocation2 + $0xf8] sm:$0xff] %vm1109, %v2316
      %2402 = vst.msk [vmem:[#allocation2 + $0x110] sm:$0xff] %vm1109, %v2318
      %2403 = vst.msk [vmem:[#allocation2 + $0x128] sm:$0xff] %vm1109, %v2320
      %2404 = vst.msk [vmem:[#allocation2 + $0x140] sm:$0xff] %vm1109, %v2322
      %2405 = vst.msk [vmem:[#allocation2 + $0x158] sm:$0xff] %vm1109, %v2324
      %2406 = vst.msk [vmem:[#allocation2 + $0x170] sm:$0xff] %vm1109, %v2326
      %2407 = vst.msk [vmem:[#allocation2 + $0x188] sm:$0xff] %vm1109, %v2328
      %2408 = vst.msk [vmem:[#allocation2 + $0x1a0] sm:$0xff] %vm1109, %v2330
      %2409 = vst.msk [vmem:[#allocation2 + $0x1b8] sm:$0xff] %vm1109, %v2332
      %2410 = vst.msk [vmem:[#allocation2 + $0x1d0] sm:$0xff] %vm1109, %v2334
      %2411 = vst.msk [vmem:[#allocation2 + $0x1e8] sm:$0xff] %vm1109, %v2336
      %2412 = vst.msk [vmem:[#allocation2 + $0x200] sm:$0xff] %vm1109, %v2338
      %2413 = vst.msk [vmem:[#allocation2 + $0x218] sm:$0xff] %vm1109, %v2340
      %2414 = vst.msk [vmem:[#allocation2 + $0x230] sm:$0xff] %vm1109, %v2342
      %2415 = vst.msk [vmem:[#allocation2 + $0x248] sm:$0xff] %vm1109, %v2344
      %2416 = vst.msk [vmem:[#allocation2 + $0x260] sm:$0xff] %vm1109, %v2346
      %2417 = vst.msk [vmem:[#allocation2 + $0x278] sm:$0xff] %vm1109, %v2348
      %2418 = vst.msk [vmem:[#allocation2 + $0x290] sm:$0xff] %vm1109, %v2350
      %2419 = vst.msk [vmem:[#allocation2 + $0x2a8] sm:$0xff] %vm1109, %v2352
      %2420 = vst.msk [vmem:[#allocation2 + $0x2c0] sm:$0xff] %vm1109, %v2354
      %2421 = vst.msk [vmem:[#allocation2 + $0x2d8] sm:$0xff] %vm1109, %v2356
      %2422 = vst.msk [vmem:[#allocation2 + $0x2f0] sm:$0xff] %vm1109, %v2358
      %v2423 = vsub.f32 %v147, 0.71428573
      %v2424 = vsub.f32 %v148, 0.71428573
      %v2425 = vsub.f32 %v149, 0.71428573
      %v2426 = vsub.f32 %v150, 0.71428573
      %v2427 = vsub.f32 %v151, 0.71428573
      %v2428 = vsub.f32 %v152, 0.71428573
      %v2429 = vsub.f32 %v153, 0.71428573
      %v2430 = vsub.f32 %v154, 0.71428573
      %v2431 = vsub.f32 %v155, 0.71428573
      %v2432 = vsub.f32 %v156, 0.71428573
      %v2433 = vsub.f32 %v157, 0.71428573
      %v2434 = vsub.f32 %v158, 0.71428573
      %v2435 = vsub.f32 %v159, 0.71428573
      %v2436 = vsub.f32 %v160, 0.71428573
      %v2437 = vsub.f32 %v161, 0.71428573
      %v2438 = vsub.f32 %v162, 0.71428573
      %v2439 = vsub.f32 %v163, 0.71428573
      %v2440 = vsub.f32 %v164, 0.71428573
      %v2441 = vsub.f32 %v165, 0.71428573
      %v2442 = vsub.f32 %v166, 0.71428573
      %v2443 = vsub.f32 %v167, 0.71428573
      %v2444 = vsub.f32 %v168, 0.71428573
      %v2445 = vsub.f32 %v169, 0.71428573
      %v2446 = vsub.f32 %v170, 0.71428573
      %v2447 = vsub.f32 %v171, 0.71428573
      %v2448 = vsub.f32 %v172, 0.71428573
      %v2449 = vsub.f32 %v173, 0.71428573
      %v2450 = vsub.f32 %v174, 0.71428573
      %v2451 = vsub.f32 %v175, 0.71428573
      %v2452 = vsub.f32 %v176, 0.71428573
      %v2453 = vsub.f32 %v177, 0.71428573
      %v2454 = vsub.f32 %v178, 0.71428573
      %v2455 = vmul.f32 %v2423, %v2423
      %v2456 = vmul.f32 %v2424, %v2424
      %v2457 = vmul.f32 %v2425, %v2425
      %v2458 = vmul.f32 %v2426, %v2426
      %v2459 = vmul.f32 %v2427, %v2427
      %v2460 = vmul.f32 %v2428, %v2428
      %v2461 = vmul.f32 %v2429, %v2429
      %v2462 = vmul.f32 %v2430, %v2430
      %v2463 = vmul.f32 %v2431, %v2431
      %v2464 = vmul.f32 %v2432, %v2432
      %v2465 = vmul.f32 %v2433, %v2433
      %v2466 = vmul.f32 %v2434, %v2434
      %v2467 = vmul.f32 %v2435, %v2435
      %v2468 = vmul.f32 %v2436, %v2436
      %v2469 = vmul.f32 %v2437, %v2437
      %v2470 = vmul.f32 %v2438, %v2438
      %v2471 = vmul.f32 %v2439, %v2439
      %v2472 = vmul.f32 %v2440, %v2440
      %v2473 = vmul.f32 %v2441, %v2441
      %v2474 = vmul.f32 %v2442, %v2442
      %v2475 = vmul.f32 %v2443, %v2443
      %v2476 = vmul.f32 %v2444, %v2444
      %v2477 = vmul.f32 %v2445, %v2445
      %v2478 = vmul.f32 %v2446, %v2446
      %v2479 = vmul.f32 %v2447, %v2447
      %v2480 = vmul.f32 %v2448, %v2448
      %v2481 = vmul.f32 %v2449, %v2449
      %v2482 = vmul.f32 %v2450, %v2450
      %v2483 = vmul.f32 %v2451, %v2451
      %v2484 = vmul.f32 %v2452, %v2452
      %v2485 = vmul.f32 %v2453, %v2453
      %v2486 = vmul.f32 %v2454, %v2454
      %v2487 = vsub.f32 0.0, %v2455
      %v2488 = vsub.f32 0.0, %v2456
      %v2489 = vsub.f32 0.0, %v2457
      %v2490 = vsub.f32 0.0, %v2458
      %v2491 = vsub.f32 0.0, %v2459
      %v2492 = vsub.f32 0.0, %v2460
      %v2493 = vsub.f32 0.0, %v2461
      %v2494 = vsub.f32 0.0, %v2462
      %v2495 = vsub.f32 0.0, %v2463
      %v2496 = vsub.f32 0.0, %v2464
      %v2497 = vsub.f32 0.0, %v2465
      %v2498 = vsub.f32 0.0, %v2466
      %v2499 = vsub.f32 0.0, %v2467
      %v2500 = vsub.f32 0.0, %v2468
      %v2501 = vsub.f32 0.0, %v2469
      %v2502 = vsub.f32 0.0, %v2470
      %v2503 = vsub.f32 0.0, %v2471
      %v2504 = vsub.f32 0.0, %v2472
      %v2505 = vsub.f32 0.0, %v2473
      %v2506 = vsub.f32 0.0, %v2474
      %v2507 = vsub.f32 0.0, %v2475
      %v2508 = vsub.f32 0.0, %v2476
      %v2509 = vsub.f32 0.0, %v2477
      %v2510 = vsub.f32 0.0, %v2478
      %v2511 = vsub.f32 0.0, %v2479
      %v2512 = vsub.f32 0.0, %v2480
      %v2513 = vsub.f32 0.0, %v2481
      %v2514 = vsub.f32 0.0, %v2482
      %v2515 = vsub.f32 0.0, %v2483
      %v2516 = vsub.f32 0.0, %v2484
      %v2517 = vsub.f32 0.0, %v2485
      %v2518 = vsub.f32 0.0, %v2486
      %v2519 = vmul.f32 %v2487, 6.125
      %v2520 = vmul.f32 %v2488, 6.125
      %v2521 = vmul.f32 %v2489, 6.125
      %v2522 = vmul.f32 %v2490, 6.125
      %v2523 = vmul.f32 %v2491, 6.125
      %v2524 = vmul.f32 %v2492, 6.125
      %v2525 = vmul.f32 %v2493, 6.125
      %v2526 = vmul.f32 %v2494, 6.125
      %v2527 = vmul.f32 %v2495, 6.125
      %v2528 = vmul.f32 %v2496, 6.125
      %v2529 = vmul.f32 %v2497, 6.125
      %v2530 = vmul.f32 %v2498, 6.125
      %v2531 = vmul.f32 %v2499, 6.125
      %v2532 = vmul.f32 %v2500, 6.125
      %v2533 = vmul.f32 %v2501, 6.125
      %v2534 = vmul.f32 %v2502, 6.125
      %v2535 = vmul.f32 %v2503, 6.125
      %v2536 = vmul.f32 %v2504, 6.125
      %v2537 = vmul.f32 %v2505, 6.125
      %v2538 = vmul.f32 %v2506, 6.125
      %v2539 = vmul.f32 %v2507, 6.125
      %v2540 = vmul.f32 %v2508, 6.125
      %v2541 = vmul.f32 %v2509, 6.125
      %v2542 = vmul.f32 %v2510, 6.125
      %v2543 = vmul.f32 %v2511, 6.125
      %v2544 = vmul.f32 %v2512, 6.125
      %v2545 = vmul.f32 %v2513, 6.125
      %v2546 = vmul.f32 %v2514, 6.125
      %v2547 = vmul.f32 %v2515, 6.125
      %v2548 = vmul.f32 %v2516, 6.125
      %v2549 = vmul.f32 %v2517, 6.125
      %v2550 = vmul.f32 %v2518, 6.125
      %v2551 = vmul.f32 %v2519, 1.442695
      %v2552 = vpow.pop %v2551
      %v2553 = vmul.f32 %v2520, 1.442695
      %v2554 = vpow.pop %v2553
      %v2555 = vmul.f32 %v2521, 1.442695
      %v2556 = vpow.pop %v2555
      %v2557 = vmul.f32 %v2522, 1.442695
      %v2558 = vpow.pop %v2557
      %v2559 = vmul.f32 %v2523, 1.442695
      %v2560 = vpow.pop %v2559
      %v2561 = vmul.f32 %v2524, 1.442695
      %v2562 = vpow.pop %v2561
      %v2563 = vmul.f32 %v2525, 1.442695
      %v2564 = vpow.pop %v2563
      %v2565 = vmul.f32 %v2526, 1.442695
      %v2566 = vpow.pop %v2565
      %v2567 = vmul.f32 %v2527, 1.442695
      %v2568 = vpow.pop %v2567
      %v2569 = vmul.f32 %v2528, 1.442695
      %v2570 = vpow.pop %v2569
      %v2571 = vmul.f32 %v2529, 1.442695
      %v2572 = vpow.pop %v2571
      %v2573 = vmul.f32 %v2530, 1.442695
      %v2574 = vpow.pop %v2573
      %v2575 = vmul.f32 %v2531, 1.442695
      %v2576 = vpow.pop %v2575
      %v2577 = vmul.f32 %v2532, 1.442695
      %v2578 = vpow.pop %v2577
      %v2579 = vmul.f32 %v2533, 1.442695
      %v2580 = vpow.pop %v2579
      %v2581 = vmul.f32 %v2534, 1.442695
      %v2582 = vpow.pop %v2581
      %v2583 = vmul.f32 %v2535, 1.442695
      %v2584 = vpow.pop %v2583
      %v2585 = vmul.f32 %v2536, 1.442695
      %v2586 = vpow.pop %v2585
      %v2587 = vmul.f32 %v2537, 1.442695
      %v2588 = vpow.pop %v2587
      %v2589 = vmul.f32 %v2538, 1.442695
      %v2590 = vpow.pop %v2589
      %v2591 = vmul.f32 %v2539, 1.442695
      %v2592 = vpow.pop %v2591
      %v2593 = vmul.f32 %v2540, 1.442695
      %v2594 = vpow.pop %v2593
      %v2595 = vmul.f32 %v2541, 1.442695
      %v2596 = vpow.pop %v2595
      %v2597 = vmul.f32 %v2542, 1.442695
      %v2598 = vpow.pop %v2597
      %v2599 = vmul.f32 %v2543, 1.442695
      %v2600 = vpow.pop %v2599
      %v2601 = vmul.f32 %v2544, 1.442695
      %v2602 = vpow.pop %v2601
      %v2603 = vmul.f32 %v2545, 1.442695
      %v2604 = vpow.pop %v2603
      %v2605 = vmul.f32 %v2546, 1.442695
      %v2606 = vpow.pop %v2605
      %v2607 = vmul.f32 %v2547, 1.442695
      %v2608 = vpow.pop %v2607
      %v2609 = vmul.f32 %v2548, 1.442695
      %v2610 = vpow.pop %v2609
      %v2611 = vmul.f32 %v2549, 1.442695
      %v2612 = vpow.pop %v2611
      %v2613 = vmul.f32 %v2550, 1.442695
      %v2614 = vpow.pop %v2613
      %2647 = vrot.lane.b32.xlu0 %v2552, 96
      %v2648 = vpop.permute.xlu0 %2647
      %2649 = vrot.lane.b32.xlu0 %v2554, 96
      %v2650 = vpop.permute.xlu0 %2649
      %2651 = vrot.lane.b32.xlu0 %v2556, 96
      %v2652 = vpop.permute.xlu0 %2651
      %2653 = vrot.lane.b32.xlu0 %v2558, 96
      %v2654 = vpop.permute.xlu0 %2653
      %2655 = vrot.lane.b32.xlu0 %v2560, 96
      %v2656 = vpop.permute.xlu0 %2655
      %2657 = vrot.lane.b32.xlu0 %v2562, 96
      %v2658 = vpop.permute.xlu0 %2657
      %2659 = vrot.lane.b32.xlu0 %v2564, 96
      %v2660 = vpop.permute.xlu0 %2659
      %2661 = vrot.lane.b32.xlu0 %v2566, 96
      %v2662 = vpop.permute.xlu0 %2661
      %2663 = vrot.lane.b32.xlu0 %v2568, 96
      %v2664 = vpop.permute.xlu0 %2663
      %2665 = vrot.lane.b32.xlu0 %v2570, 96
      %v2666 = vpop.permute.xlu0 %2665
      %2667 = vrot.lane.b32.xlu0 %v2572, 96
      %v2668 = vpop.permute.xlu0 %2667
      %2669 = vrot.lane.b32.xlu0 %v2574, 96
      %v2670 = vpop.permute.xlu0 %2669
      %2671 = vrot.lane.b32.xlu0 %v2576, 96
      %v2672 = vpop.permute.xlu0 %2671
      %2673 = vrot.lane.b32.xlu0 %v2578, 96
      %v2674 = vpop.permute.xlu0 %2673
      %2675 = vrot.lane.b32.xlu0 %v2580, 96
      %v2676 = vpop.permute.xlu0 %2675
      %2677 = vrot.lane.b32.xlu0 %v2582, 96
      %v2678 = vpop.permute.xlu0 %2677
      %2679 = vrot.lane.b32.xlu0 %v2584, 96
      %v2680 = vpop.permute.xlu0 %2679
      %2681 = vrot.lane.b32.xlu0 %v2586, 96
      %v2682 = vpop.permute.xlu0 %2681
      %2683 = vrot.lane.b32.xlu0 %v2588, 96
      %v2684 = vpop.permute.xlu0 %2683
      %2685 = vrot.lane.b32.xlu0 %v2590, 96
      %v2686 = vpop.permute.xlu0 %2685
      %2687 = vrot.lane.b32.xlu0 %v2592, 96
      %v2688 = vpop.permute.xlu0 %2687
      %2689 = vrot.lane.b32.xlu0 %v2594, 96
      %v2690 = vpop.permute.xlu0 %2689
      %2691 = vrot.lane.b32.xlu0 %v2596, 96
      %v2692 = vpop.permute.xlu0 %2691
      %2693 = vrot.lane.b32.xlu0 %v2598, 96
      %v2694 = vpop.permute.xlu0 %2693
      %2695 = vrot.lane.b32.xlu0 %v2600, 96
      %v2696 = vpop.permute.xlu0 %2695
      %2697 = vrot.lane.b32.xlu0 %v2602, 96
      %v2698 = vpop.permute.xlu0 %2697
      %2699 = vrot.lane.b32.xlu0 %v2604, 96
      %v2700 = vpop.permute.xlu0 %2699
      %2701 = vrot.lane.b32.xlu0 %v2606, 96
      %v2702 = vpop.permute.xlu0 %2701
      %2703 = vrot.lane.b32.xlu0 %v2608, 96
      %v2704 = vpop.permute.xlu0 %2703
      %2705 = vrot.lane.b32.xlu0 %v2610, 96
      %v2706 = vpop.permute.xlu0 %2705
      %2707 = vrot.lane.b32.xlu0 %v2612, 96
      %v2708 = vpop.permute.xlu0 %2707
      %2709 = vrot.lane.b32.xlu0 %v2614, 96
      %v2710 = vpop.permute.xlu0 %2709
      %2743 = vst.msk [vmem:[#allocation2 + $0x8] sm:$0xff] %vm1462, %v2648
      %2744 = vst.msk [vmem:[#allocation2 + $0x20] sm:$0xff] %vm1462, %v2650
      %2745 = vst.msk [vmem:[#allocation2 + $0x38] sm:$0xff] %vm1462, %v2652
      %2746 = vst.msk [vmem:[#allocation2 + $0x50] sm:$0xff] %vm1462, %v2654
      %2747 = vst.msk [vmem:[#allocation2 + $0x68] sm:$0xff] %vm1462, %v2656
      %2748 = vst.msk [vmem:[#allocation2 + $0x80] sm:$0xff] %vm1462, %v2658
      %2749 = vst.msk [vmem:[#allocation2 + $0x98] sm:$0xff] %vm1462, %v2660
      %2750 = vst.msk [vmem:[#allocation2 + $0xb0] sm:$0xff] %vm1462, %v2662
      %2751 = vst.msk [vmem:[#allocation2 + $0xc8] sm:$0xff] %vm1462, %v2664
      %2752 = vst.msk [vmem:[#allocation2 + $0xe0] sm:$0xff] %vm1462, %v2666
      %2753 = vst.msk [vmem:[#allocation2 + $0xf8] sm:$0xff] %vm1462, %v2668
      %2754 = vst.msk [vmem:[#allocation2 + $0x110] sm:$0xff] %vm1462, %v2670
      %2755 = vst.msk [vmem:[#allocation2 + $0x128] sm:$0xff] %vm1462, %v2672
      %2756 = vst.msk [vmem:[#allocation2 + $0x140] sm:$0xff] %vm1462, %v2674
      %2757 = vst.msk [vmem:[#allocation2 + $0x158] sm:$0xff] %vm1462, %v2676
      %2758 = vst.msk [vmem:[#allocation2 + $0x170] sm:$0xff] %vm1462, %v2678
      %2759 = vst.msk [vmem:[#allocation2 + $0x188] sm:$0xff] %vm1462, %v2680
      %2760 = vst.msk [vmem:[#allocation2 + $0x1a0] sm:$0xff] %vm1462, %v2682
      %2761 = vst.msk [vmem:[#allocation2 + $0x1b8] sm:$0xff] %vm1462, %v2684
      %2762 = vst.msk [vmem:[#allocation2 + $0x1d0] sm:$0xff] %vm1462, %v2686
      %2763 = vst.msk [vmem:[#allocation2 + $0x1e8] sm:$0xff] %vm1462, %v2688
      %2764 = vst.msk [vmem:[#allocation2 + $0x200] sm:$0xff] %vm1462, %v2690
      %2765 = vst.msk [vmem:[#allocation2 + $0x218] sm:$0xff] %vm1462, %v2692
      %2766 = vst.msk [vmem:[#allocation2 + $0x230] sm:$0xff] %vm1462, %v2694
      %2767 = vst.msk [vmem:[#allocation2 + $0x248] sm:$0xff] %vm1462, %v2696
      %2768 = vst.msk [vmem:[#allocation2 + $0x260] sm:$0xff] %vm1462, %v2698
      %2769 = vst.msk [vmem:[#allocation2 + $0x278] sm:$0xff] %vm1462, %v2700
      %2770 = vst.msk [vmem:[#allocation2 + $0x290] sm:$0xff] %vm1462, %v2702
      %2771 = vst.msk [vmem:[#allocation2 + $0x2a8] sm:$0xff] %vm1462, %v2704
      %2772 = vst.msk [vmem:[#allocation2 + $0x2c0] sm:$0xff] %vm1462, %v2706
      %2773 = vst.msk [vmem:[#allocation2 + $0x2d8] sm:$0xff] %vm1462, %v2708
      %2774 = vst.msk [vmem:[#allocation2 + $0x2f0] sm:$0xff] %vm1462, %v2710
      %v2775 = vsub.f32 %v147, 1.0
      %v2776 = vsub.f32 %v148, 1.0
      %v2777 = vsub.f32 %v149, 1.0
      %v2778 = vsub.f32 %v150, 1.0
      %v2779 = vsub.f32 %v151, 1.0
      %v2780 = vsub.f32 %v152, 1.0
      %v2781 = vsub.f32 %v153, 1.0
      %v2782 = vsub.f32 %v154, 1.0
      %v2783 = vsub.f32 %v155, 1.0
      %v2784 = vsub.f32 %v156, 1.0
      %v2785 = vsub.f32 %v157, 1.0
      %v2786 = vsub.f32 %v158, 1.0
      %v2787 = vsub.f32 %v159, 1.0
      %v2788 = vsub.f32 %v160, 1.0
      %v2789 = vsub.f32 %v161, 1.0
      %v2790 = vsub.f32 %v162, 1.0
      %v2791 = vsub.f32 %v163, 1.0
      %v2792 = vsub.f32 %v164, 1.0
      %v2793 = vsub.f32 %v165, 1.0
      %v2794 = vsub.f32 %v166, 1.0
      %v2795 = vsub.f32 %v167, 1.0
      %v2796 = vsub.f32 %v168, 1.0
      %v2797 = vsub.f32 %v169, 1.0
      %v2798 = vsub.f32 %v170, 1.0
      %v2799 = vsub.f32 %v171, 1.0
      %v2800 = vsub.f32 %v172, 1.0
      %v2801 = vsub.f32 %v173, 1.0
      %v2802 = vsub.f32 %v174, 1.0
      %v2803 = vsub.f32 %v175, 1.0
      %v2804 = vsub.f32 %v176, 1.0
      %v2805 = vsub.f32 %v177, 1.0
      %v2806 = vsub.f32 %v178, 1.0
      %v2807 = vmul.f32 %v2775, %v2775
      %v2808 = vmul.f32 %v2776, %v2776
      %v2809 = vmul.f32 %v2777, %v2777
      %v2810 = vmul.f32 %v2778, %v2778
      %v2811 = vmul.f32 %v2779, %v2779
      %v2812 = vmul.f32 %v2780, %v2780
      %v2813 = vmul.f32 %v2781, %v2781
      %v2814 = vmul.f32 %v2782, %v2782
      %v2815 = vmul.f32 %v2783, %v2783
      %v2816 = vmul.f32 %v2784, %v2784
      %v2817 = vmul.f32 %v2785, %v2785
      %v2818 = vmul.f32 %v2786, %v2786
      %v2819 = vmul.f32 %v2787, %v2787
      %v2820 = vmul.f32 %v2788, %v2788
      %v2821 = vmul.f32 %v2789, %v2789
      %v2822 = vmul.f32 %v2790, %v2790
      %v2823 = vmul.f32 %v2791, %v2791
      %v2824 = vmul.f32 %v2792, %v2792
      %v2825 = vmul.f32 %v2793, %v2793
      %v2826 = vmul.f32 %v2794, %v2794
      %v2827 = vmul.f32 %v2795, %v2795
      %v2828 = vmul.f32 %v2796, %v2796
      %v2829 = vmul.f32 %v2797, %v2797
      %v2830 = vmul.f32 %v2798, %v2798
      %v2831 = vmul.f32 %v2799, %v2799
      %v2832 = vmul.f32 %v2800, %v2800
      %v2833 = vmul.f32 %v2801, %v2801
      %v2834 = vmul.f32 %v2802, %v2802
      %v2835 = vmul.f32 %v2803, %v2803
      %v2836 = vmul.f32 %v2804, %v2804
      %v2837 = vmul.f32 %v2805, %v2805
      %v2838 = vmul.f32 %v2806, %v2806
      %v2839 = vsub.f32 0.0, %v2807
      %v2840 = vsub.f32 0.0, %v2808
      %v2841 = vsub.f32 0.0, %v2809
      %v2842 = vsub.f32 0.0, %v2810
      %v2843 = vsub.f32 0.0, %v2811
      %v2844 = vsub.f32 0.0, %v2812
      %v2845 = vsub.f32 0.0, %v2813
      %v2846 = vsub.f32 0.0, %v2814
      %v2847 = vsub.f32 0.0, %v2815
      %v2848 = vsub.f32 0.0, %v2816
      %v2849 = vsub.f32 0.0, %v2817
      %v2850 = vsub.f32 0.0, %v2818
      %v2851 = vsub.f32 0.0, %v2819
      %v2852 = vsub.f32 0.0, %v2820
      %v2853 = vsub.f32 0.0, %v2821
      %v2854 = vsub.f32 0.0, %v2822
      %v2855 = vsub.f32 0.0, %v2823
      %v2856 = vsub.f32 0.0, %v2824
      %v2857 = vsub.f32 0.0, %v2825
      %v2858 = vsub.f32 0.0, %v2826
      %v2859 = vsub.f32 0.0, %v2827
      %v2860 = vsub.f32 0.0, %v2828
      %v2861 = vsub.f32 0.0, %v2829
      %v2862 = vsub.f32 0.0, %v2830
      %v2863 = vsub.f32 0.0, %v2831
      %v2864 = vsub.f32 0.0, %v2832
      %v2865 = vsub.f32 0.0, %v2833
      %v2866 = vsub.f32 0.0, %v2834
      %v2867 = vsub.f32 0.0, %v2835
      %v2868 = vsub.f32 0.0, %v2836
      %v2869 = vsub.f32 0.0, %v2837
      %v2870 = vsub.f32 0.0, %v2838
      %v2871 = vmul.f32 %v2839, 6.125
      %v2872 = vmul.f32 %v2840, 6.125
      %v2873 = vmul.f32 %v2841, 6.125
      %v2874 = vmul.f32 %v2842, 6.125
      %v2875 = vmul.f32 %v2843, 6.125
      %v2876 = vmul.f32 %v2844, 6.125
      %v2877 = vmul.f32 %v2845, 6.125
      %v2878 = vmul.f32 %v2846, 6.125
      %v2879 = vmul.f32 %v2847, 6.125
      %v2880 = vmul.f32 %v2848, 6.125
      %v2881 = vmul.f32 %v2849, 6.125
      %v2882 = vmul.f32 %v2850, 6.125
      %v2883 = vmul.f32 %v2851, 6.125
      %v2884 = vmul.f32 %v2852, 6.125
      %v2885 = vmul.f32 %v2853, 6.125
      %v2886 = vmul.f32 %v2854, 6.125
      %v2887 = vmul.f32 %v2855, 6.125
      %v2888 = vmul.f32 %v2856, 6.125
      %v2889 = vmul.f32 %v2857, 6.125
      %v2890 = vmul.f32 %v2858, 6.125
      %v2891 = vmul.f32 %v2859, 6.125
      %v2892 = vmul.f32 %v2860, 6.125
      %v2893 = vmul.f32 %v2861, 6.125
      %v2894 = vmul.f32 %v2862, 6.125
      %v2895 = vmul.f32 %v2863, 6.125
      %v2896 = vmul.f32 %v2864, 6.125
      %v2897 = vmul.f32 %v2865, 6.125
      %v2898 = vmul.f32 %v2866, 6.125
      %v2899 = vmul.f32 %v2867, 6.125
      %v2900 = vmul.f32 %v2868, 6.125
      %v2901 = vmul.f32 %v2869, 6.125
      %v2902 = vmul.f32 %v2870, 6.125
      %v2903 = vmul.f32 %v2871, 1.442695
      %v2904 = vpow.pop %v2903
      %v2905 = vmul.f32 %v2872, 1.442695
      %v2906 = vpow.pop %v2905
      %v2907 = vmul.f32 %v2873, 1.442695
      %v2908 = vpow.pop %v2907
      %v2909 = vmul.f32 %v2874, 1.442695
      %v2910 = vpow.pop %v2909
      %v2911 = vmul.f32 %v2875, 1.442695
      %v2912 = vpow.pop %v2911
      %v2913 = vmul.f32 %v2876, 1.442695
      %v2914 = vpow.pop %v2913
      %v2915 = vmul.f32 %v2877, 1.442695
      %v2916 = vpow.pop %v2915
      %v2917 = vmul.f32 %v2878, 1.442695
      %v2918 = vpow.pop %v2917
      %v2919 = vmul.f32 %v2879, 1.442695
      %v2920 = vpow.pop %v2919
      %v2921 = vmul.f32 %v2880, 1.442695
      %v2922 = vpow.pop %v2921
      %v2923 = vmul.f32 %v2881, 1.442695
      %v2924 = vpow.pop %v2923
      %v2925 = vmul.f32 %v2882, 1.442695
      %v2926 = vpow.pop %v2925
      %v2927 = vmul.f32 %v2883, 1.442695
      %v2928 = vpow.pop %v2927
      %v2929 = vmul.f32 %v2884, 1.442695
      %v2930 = vpow.pop %v2929
      %v2931 = vmul.f32 %v2885, 1.442695
      %v2932 = vpow.pop %v2931
      %v2933 = vmul.f32 %v2886, 1.442695
      %v2934 = vpow.pop %v2933
      %v2935 = vmul.f32 %v2887, 1.442695
      %v2936 = vpow.pop %v2935
      %v2937 = vmul.f32 %v2888, 1.442695
      %v2938 = vpow.pop %v2937
      %v2939 = vmul.f32 %v2889, 1.442695
      %v2940 = vpow.pop %v2939
      %v2941 = vmul.f32 %v2890, 1.442695
      %v2942 = vpow.pop %v2941
      %v2943 = vmul.f32 %v2891, 1.442695
      %v2944 = vpow.pop %v2943
      %v2945 = vmul.f32 %v2892, 1.442695
      %v2946 = vpow.pop %v2945
      %v2947 = vmul.f32 %v2893, 1.442695
      %v2948 = vpow.pop %v2947
      %v2949 = vmul.f32 %v2894, 1.442695
      %v2950 = vpow.pop %v2949
      %v2951 = vmul.f32 %v2895, 1.442695
      %v2952 = vpow.pop %v2951
      %v2953 = vmul.f32 %v2896, 1.442695
      %v2954 = vpow.pop %v2953
      %v2955 = vmul.f32 %v2897, 1.442695
      %v2956 = vpow.pop %v2955
      %v2957 = vmul.f32 %v2898, 1.442695
      %v2958 = vpow.pop %v2957
      %v2959 = vmul.f32 %v2899, 1.442695
      %v2960 = vpow.pop %v2959
      %v2961 = vmul.f32 %v2900, 1.442695
      %v2962 = vpow.pop %v2961
      %v2963 = vmul.f32 %v2901, 1.442695
      %v2964 = vpow.pop %v2963
      %v2965 = vmul.f32 %v2902, 1.442695
      %v2966 = vpow.pop %v2965
      %2967 = vst.msk [vmem:[#allocation2 + $0x10] sm:$0xff] %vm403, %v2904
      %2968 = vst.msk [vmem:[#allocation2 + $0x28] sm:$0xff] %vm403, %v2906
      %2969 = vst.msk [vmem:[#allocation2 + $0x40] sm:$0xff] %vm403, %v2908
      %2970 = vst.msk [vmem:[#allocation2 + $0x58] sm:$0xff] %vm403, %v2910
      %2971 = vst.msk [vmem:[#allocation2 + $0x70] sm:$0xff] %vm403, %v2912
      %2972 = vst.msk [vmem:[#allocation2 + $0x88] sm:$0xff] %vm403, %v2914
      %2973 = vst.msk [vmem:[#allocation2 + $0xa0] sm:$0xff] %vm403, %v2916
      %2974 = vst.msk [vmem:[#allocation2 + $0xb8] sm:$0xff] %vm403, %v2918
      %2975 = vst.msk [vmem:[#allocation2 + $0xd0] sm:$0xff] %vm403, %v2920
      %2976 = vst.msk [vmem:[#allocation2 + $0xe8] sm:$0xff] %vm403, %v2922
      %2977 = vst.msk [vmem:[#allocation2 + $0x100] sm:$0xff] %vm403, %v2924
      %2978 = vst.msk [vmem:[#allocation2 + $0x118] sm:$0xff] %vm403, %v2926
      %2979 = vst.msk [vmem:[#allocation2 + $0x130] sm:$0xff] %vm403, %v2928
      %2980 = vst.msk [vmem:[#allocation2 + $0x148] sm:$0xff] %vm403, %v2930
      %2981 = vst.msk [vmem:[#allocation2 + $0x160] sm:$0xff] %vm403, %v2932
      %2982 = vst.msk [vmem:[#allocation2 + $0x178] sm:$0xff] %vm403, %v2934
      %2983 = vst.msk [vmem:[#allocation2 + $0x190] sm:$0xff] %vm403, %v2936
      %2984 = vst.msk [vmem:[#allocation2 + $0x1a8] sm:$0xff] %vm403, %v2938
      %2985 = vst.msk [vmem:[#allocation2 + $0x1c0] sm:$0xff] %vm403, %v2940
      %2986 = vst.msk [vmem:[#allocation2 + $0x1d8] sm:$0xff] %vm403, %v2942
      %2987 = vst.msk [vmem:[#allocation2 + $0x1f0] sm:$0xff] %vm403, %v2944
      %2988 = vst.msk [vmem:[#allocation2 + $0x208] sm:$0xff] %vm403, %v2946
      %2989 = vst.msk [vmem:[#allocation2 + $0x220] sm:$0xff] %vm403, %v2948
      %2990 = vst.msk [vmem:[#allocation2 + $0x238] sm:$0xff] %vm403, %v2950
      %2991 = vst.msk [vmem:[#allocation2 + $0x250] sm:$0xff] %vm403, %v2952
      %2992 = vst.msk [vmem:[#allocation2 + $0x268] sm:$0xff] %vm403, %v2954
      %2993 = vst.msk [vmem:[#allocation2 + $0x280] sm:$0xff] %vm403, %v2956
      %2994 = vst.msk [vmem:[#allocation2 + $0x298] sm:$0xff] %vm403, %v2958
      %2995 = vst.msk [vmem:[#allocation2 + $0x2b0] sm:$0xff] %vm403, %v2960
      %2996 = vst.msk [vmem:[#allocation2 + $0x2c8] sm:$0xff] %vm403, %v2962
      %2997 = vst.msk [vmem:[#allocation2 + $0x2e0] sm:$0xff] %vm403, %v2964
      %2998 = vst.msk [vmem:[#allocation2 + $0x2f8] sm:$0xff] %vm403, %v2966
      %v2999 = vld [vmem:[#allocation2] sm:$0xff]
      %v3000 = vld [vmem:[#allocation2 + $0x8] sm:$0xff]
      %v3001 = vld [vmem:[#allocation2 + $0x10] sm:$0xff]
      %v3002 = vld [vmem:[#allocation2 + $0x18] sm:$0xff]
      %v3003 = vld [vmem:[#allocation2 + $0x20] sm:$0xff]
      %v3004 = vld [vmem:[#allocation2 + $0x28] sm:$0xff]
      %v3005 = vld [vmem:[#allocation2 + $0x30] sm:$0xff]
      %v3006 = vld [vmem:[#allocation2 + $0x38] sm:$0xff]
      %v3007 = vld [vmem:[#allocation2 + $0x40] sm:$0xff]
      %v3008 = vld [vmem:[#allocation2 + $0x48] sm:$0xff]
      %v3009 = vld [vmem:[#allocation2 + $0x50] sm:$0xff]
      %v3010 = vld [vmem:[#allocation2 + $0x58] sm:$0xff]
      %v3011 = vld [vmem:[#allocation2 + $0x60] sm:$0xff]
      %v3012 = vld [vmem:[#allocation2 + $0x68] sm:$0xff]
      %v3013 = vld [vmem:[#allocation2 + $0x70] sm:$0xff]
      %v3014 = vld [vmem:[#allocation2 + $0x78] sm:$0xff]
      %v3015 = vld [vmem:[#allocation2 + $0x80] sm:$0xff]
      %v3016 = vld [vmem:[#allocation2 + $0x88] sm:$0xff]
      %v3017 = vld [vmem:[#allocation2 + $0x90] sm:$0xff]
      %v3018 = vld [vmem:[#allocation2 + $0x98] sm:$0xff]
      %v3019 = vld [vmem:[#allocation2 + $0xa0] sm:$0xff]
      %v3020 = vld [vmem:[#allocation2 + $0xa8] sm:$0xff]
      %v3021 = vld [vmem:[#allocation2 + $0xb0] sm:$0xff]
      %v3022 = vld [vmem:[#allocation2 + $0xb8] sm:$0xff]
      %v3023 = vld [vmem:[#allocation2 + $0xc0] sm:$0xff]
      %v3024 = vld [vmem:[#allocation2 + $0xc8] sm:$0xff]
      %v3025 = vld [vmem:[#allocation2 + $0xd0] sm:$0xff]
      %v3026 = vld [vmem:[#allocation2 + $0xd8] sm:$0xff]
      %v3027 = vld [vmem:[#allocation2 + $0xe0] sm:$0xff]
      %v3028 = vld [vmem:[#allocation2 + $0xe8] sm:$0xff]
      %v3029 = vld [vmem:[#allocation2 + $0xf0] sm:$0xff]
      %v3030 = vld [vmem:[#allocation2 + $0xf8] sm:$0xff]
      %v3031 = vld [vmem:[#allocation2 + $0x100] sm:$0xff]
      %v3032 = vld [vmem:[#allocation2 + $0x108] sm:$0xff]
      %v3033 = vld [vmem:[#allocation2 + $0x110] sm:$0xff]
      %v3034 = vld [vmem:[#allocation2 + $0x118] sm:$0xff]
      %v3035 = vld [vmem:[#allocation2 + $0x120] sm:$0xff]
      %v3036 = vld [vmem:[#allocation2 + $0x128] sm:$0xff]
      %v3037 = vld [vmem:[#allocation2 + $0x130] sm:$0xff]
      %v3038 = vld [vmem:[#allocation2 + $0x138] sm:$0xff]
      %v3039 = vld [vmem:[#allocation2 + $0x140] sm:$0xff]
      %v3040 = vld [vmem:[#allocation2 + $0x148] sm:$0xff]
      %v3041 = vld [vmem:[#allocation2 + $0x150] sm:$0xff]
      %v3042 = vld [vmem:[#allocation2 + $0x158] sm:$0xff]
      %v3043 = vld [vmem:[#allocation2 + $0x160] sm:$0xff]
      %v3044 = vld [vmem:[#allocation2 + $0x168] sm:$0xff]
      %v3045 = vld [vmem:[#allocation2 + $0x170] sm:$0xff]
      %v3046 = vld [vmem:[#allocation2 + $0x178] sm:$0xff]
      %v3047 = vld [vmem:[#allocation2 + $0x180] sm:$0xff]
      %v3048 = vld [vmem:[#allocation2 + $0x188] sm:$0xff]
      %v3049 = vld [vmem:[#allocation2 + $0x190] sm:$0xff]
      %v3050 = vld [vmem:[#allocation2 + $0x198] sm:$0xff]
      %v3051 = vld [vmem:[#allocation2 + $0x1a0] sm:$0xff]
      %v3052 = vld [vmem:[#allocation2 + $0x1a8] sm:$0xff]
      %v3053 = vld [vmem:[#allocation2 + $0x1b0] sm:$0xff]
      %v3054 = vld [vmem:[#allocation2 + $0x1b8] sm:$0xff]
      %v3055 = vld [vmem:[#allocation2 + $0x1c0] sm:$0xff]
      %v3056 = vld [vmem:[#allocation2 + $0x1c8] sm:$0xff]
      %v3057 = vld [vmem:[#allocation2 + $0x1d0] sm:$0xff]
      %v3058 = vld [vmem:[#allocation2 + $0x1d8] sm:$0xff]
      %v3059 = vld [vmem:[#allocation2 + $0x1e0] sm:$0xff]
      %v3060 = vld [vmem:[#allocation2 + $0x1e8] sm:$0xff]
      %v3061 = vld [vmem:[#allocation2 + $0x1f0] sm:$0xff]
      %v3062 = vld [vmem:[#allocation2 + $0x1f8] sm:$0xff]
      %v3063 = vld [vmem:[#allocation2 + $0x200] sm:$0xff]
      %v3064 = vld [vmem:[#allocation2 + $0x208] sm:$0xff]
      %v3065 = vld [vmem:[#allocation2 + $0x210] sm:$0xff]
      %v3066 = vld [vmem:[#allocation2 + $0x218] sm:$0xff]
      %v3067 = vld [vmem:[#allocation2 + $0x220] sm:$0xff]
      %v3068 = vld [vmem:[#allocation2 + $0x228] sm:$0xff]
      %v3069 = vld [vmem:[#allocation2 + $0x230] sm:$0xff]
      %v3070 = vld [vmem:[#allocation2 + $0x238] sm:$0xff]
      %v3071 = vld [vmem:[#allocation2 + $0x240] sm:$0xff]
      %v3072 = vld [vmem:[#allocation2 + $0x248] sm:$0xff]
      %v3073 = vld [vmem:[#allocation2 + $0x250] sm:$0xff]
      %v3074 = vld [vmem:[#allocation2 + $0x258] sm:$0xff]
      %v3075 = vld [vmem:[#allocation2 + $0x260] sm:$0xff]
      %v3076 = vld [vmem:[#allocation2 + $0x268] sm:$0xff]
      %v3077 = vld [vmem:[#allocation2 + $0x270] sm:$0xff]
      %v3078 = vld [vmem:[#allocation2 + $0x278] sm:$0xff]
      %v3079 = vld [vmem:[#allocation2 + $0x280] sm:$0xff]
      %v3080 = vld [vmem:[#allocation2 + $0x288] sm:$0xff]
      %v3081 = vld [vmem:[#allocation2 + $0x290] sm:$0xff]
      %v3082 = vld [vmem:[#allocation2 + $0x298] sm:$0xff]
      %v3083 = vld [vmem:[#allocation2 + $0x2a0] sm:$0xff]
      %v3084 = vld [vmem:[#allocation2 + $0x2a8] sm:$0xff]
      %v3085 = vld [vmem:[#allocation2 + $0x2b0] sm:$0xff]
      %v3086 = vld [vmem:[#allocation2 + $0x2b8] sm:$0xff]
      %v3087 = vld [vmem:[#allocation2 + $0x2c0] sm:$0xff]
      %v3088 = vld [vmem:[#allocation2 + $0x2c8] sm:$0xff]
      %v3089 = vld [vmem:[#allocation2 + $0x2d0] sm:$0xff]
      %v3090 = vld [vmem:[#allocation2 + $0x2d8] sm:$0xff]
      %v3091 = vld [vmem:[#allocation2 + $0x2e0] sm:$0xff]
      %v3092 = vld [vmem:[#allocation2 + $0x2e8] sm:$0xff]
      %v3093 = vld [vmem:[#allocation2 + $0x2f0] sm:$0xff]
      %v3094 = vld [vmem:[#allocation2 + $0x2f8] sm:$0xff]
      %v3095 = vld [vmem:[%s1] sm:$0xff]
      %v3096 = vld [vmem:[%s1 + $0x8] sm:$0xff]
      %v3097 = vld [vmem:[%s1 + $0x10] sm:$0xff]
      %v3098 = vld [vmem:[%s1 + $0x18] sm:$0xff]
      %v3099 = vld [vmem:[%s1 + $0x20] sm:$0xff]
      %v3100 = vld [vmem:[%s1 + $0x28] sm:$0xff]
      %v3101 = vld [vmem:[%s1 + $0x30] sm:$0xff]
      %v3102 = vld [vmem:[%s1 + $0x38] sm:$0xff]
      %v3103 = vld [vmem:[%s1 + $0x40] sm:$0xff]
      %v3104 = vld [vmem:[%s1 + $0x48] sm:$0xff]
      %v3105 = vld [vmem:[%s1 + $0x50] sm:$0xff]
      %v3106 = vld [vmem:[%s1 + $0x58] sm:$0xff]
      %v3107 = vld [vmem:[%s1 + $0x60] sm:$0xff]
      %v3108 = vld [vmem:[%s1 + $0x68] sm:$0xff]
      %v3109 = vld [vmem:[%s1 + $0x70] sm:$0xff]
      %v3110 = vld [vmem:[%s1 + $0x78] sm:$0xff]
      %v3111 = vld [vmem:[%s1 + $0x80] sm:$0xff]
      %v3112 = vld [vmem:[%s1 + $0x88] sm:$0xff]
      %v3113 = vld [vmem:[%s1 + $0x90] sm:$0xff]
      %v3114 = vld [vmem:[%s1 + $0x98] sm:$0xff]
      %v3115 = vld [vmem:[%s1 + $0xa0] sm:$0xff]
      %v3116 = vld [vmem:[%s1 + $0xa8] sm:$0xff]
      %v3117 = vld [vmem:[%s1 + $0xb0] sm:$0xff]
      %v3118 = vld [vmem:[%s1 + $0xb8] sm:$0xff]
      %v3119 = vld [vmem:[%s1 + $0xc0] sm:$0xff]
      %v3120 = vld [vmem:[%s1 + $0xc8] sm:$0xff]
      %v3121 = vld [vmem:[%s1 + $0xd0] sm:$0xff]
      %v3122 = vld [vmem:[%s1 + $0xd8] sm:$0xff]
      %v3123 = vld [vmem:[%s1 + $0xe0] sm:$0xff]
      %v3124 = vld [vmem:[%s1 + $0xe8] sm:$0xff]
      %v3125 = vld [vmem:[%s1 + $0xf0] sm:$0xff]
      %v3126 = vld [vmem:[%s1 + $0xf8] sm:$0xff]
      %v3127 = vld [vmem:[%s1 + $0x100] sm:$0xff]
      %v3128 = vld [vmem:[%s1 + $0x108] sm:$0xff]
      %v3129 = vld [vmem:[%s1 + $0x110] sm:$0xff]
      %v3130 = vld [vmem:[%s1 + $0x118] sm:$0xff]
      %v3132 = vsel %vm403, %v3001, 0
      %v3135 = vsel %vm403, %v3004, 0
      %v3138 = vsel %vm403, %v3007, 0
      %v3141 = vsel %vm403, %v3010, 0
      %v3144 = vsel %vm403, %v3013, 0
      %v3147 = vsel %vm403, %v3016, 0
      %v3150 = vsel %vm403, %v3019, 0
      %v3153 = vsel %vm403, %v3022, 0
      %v3156 = vsel %vm403, %v3025, 0
      %v3159 = vsel %vm403, %v3028, 0
      %v3162 = vsel %vm403, %v3031, 0
      %v3165 = vsel %vm403, %v3034, 0
      %v3168 = vsel %vm403, %v3037, 0
      %v3171 = vsel %vm403, %v3040, 0
      %v3174 = vsel %vm403, %v3043, 0
      %v3177 = vsel %vm403, %v3046, 0
      %v3180 = vsel %vm403, %v3049, 0
      %v3183 = vsel %vm403, %v3052, 0
      %v3186 = vsel %vm403, %v3055, 0
      %v3189 = vsel %vm403, %v3058, 0
      %v3192 = vsel %vm403, %v3061, 0
      %v3195 = vsel %vm403, %v3064, 0
      %v3198 = vsel %vm403, %v3067, 0
      %v3201 = vsel %vm403, %v3070, 0
      %v3204 = vsel %vm403, %v3073, 0
      %v3207 = vsel %vm403, %v3076, 0
      %v3210 = vsel %vm403, %v3079, 0
      %v3213 = vsel %vm403, %v3082, 0
      %v3216 = vsel %vm403, %v3085, 0
      %v3219 = vsel %vm403, %v3088, 0
      %v3222 = vsel %vm403, %v3091, 0
      %v3225 = vsel %vm403, %v3094, 0
      %3227 = vmatprep.subr.mxu0 0.0
      %3228 = vmatpush1.msra.mxu0 %v3095
      %3229 = vmatprep.subr.mxu0 0.0
      %3230 = vmatpush1.msra.mxu0 %v3096
      %3231 = vmatprep.subr.mxu0 0.0
      %3232 = vmatpush1.msra.mxu0 %v3097
      %3233 = vmatprep.subr.mxu0 0.0
      %3234 = vmatpush1.msra.mxu0 %v3098
      %3235 = vmatprep.subr.mxu0 0.0
      %3236 = vmatpush1.msra.mxu0 %v3099
      %3237 = vmatprep.subr.mxu0 0.0
      %3238 = vmatpush1.msra.mxu0 %v3100
      %3239 = vmatprep.subr.mxu0 0.0
      %3240 = vmatpush1.msra.mxu0 %v3101
      %3241 = vmatprep.subr.mxu0 0.0
      %3242 = vmatpush1.msra.mxu0 %v3102
      %3243 = vmatprep.subr.mxu0 0.0
      %3244 = vmatpush1.msra.mxu0 %v3103
      %3245 = vmatprep.subr.mxu0 0.0
      %3246 = vmatpush1.msra.mxu0 %v3104
      %3247 = vmatprep.subr.mxu0 0.0
      %3248 = vmatpush1.msra.mxu0 %v3105
      %3249 = vmatprep.subr.mxu0 0.0
      %3250 = vmatpush1.msra.mxu0 %v3106
      %3251 = vmatprep.subr.mxu0 0.0
      %3252 = vmatpush1.msra.mxu0 %v3107
      %3253 = vmatprep.subr.mxu0 0.0
      %3254 = vmatpush1.msra.mxu0 %v3108
      %3255 = vmatprep.subr.mxu0 0.0
      %3256 = vmatpush1.msra.mxu0 %v3109
      %3257 = vmatprep.subr.mxu0 0.0
      %3258 = vmatpush1.msra.mxu0 %v3110
      %3259 = vmatprep.subr.mxu0 0.0
      %3260 = vmatpush1.msra.mxu0 %v3111
      %3261 = vmatprep.subr.mxu0 0.0
      %3262 = vmatpush1.msra.mxu0 %v3112
      %3263 = vmatprep.subr.mxu0 0.0
      %3264 = vmatpush1.msra.mxu0 %v3113
      %3265 = vmatprep.subr.mxu0 0.0
      %3266 = vmatpush1.msra.mxu0 %v3114
      %3267 = vmatprep.subr.mxu0 0.0
      %3268 = vmatpush1.msra.mxu0 %v3115
      %3269 = vmatprep.subr.mxu0 0.0
      %3270 = vmatpush1.msra.mxu0 %v3116
      %3271 = vmatprep.subr.mxu0 0.0
      %3272 = vmatpush1.msra.mxu0 %v3117
      %3273 = vmatprep.subr.mxu0 0.0
      %3274 = vmatpush1.msra.mxu0 %v3118
      %3275 = vmatprep.subr.mxu0 0.0
      %3276 = vmatpush1.msra.mxu0 %v3119
      %3277 = vmatprep.subr.mxu0 0.0
      %3278 = vmatpush1.msra.mxu0 %v3120
      %3279 = vmatprep.subr.mxu0 0.0
      %3280 = vmatpush1.msra.mxu0 %v3121
      %3281 = vmatprep.subr.mxu0 0.0
      %3282 = vmatpush1.msra.mxu0 %v3122
      %3283 = vmatprep.subr.mxu0 0.0
      %3284 = vmatpush1.msra.mxu0 %v3123
      %3285 = vmatprep.subr.mxu0 0.0
      %3286 = vmatpush1.msra.mxu0 %v3124
      %3287 = vmatprep.subr.mxu0 0.0
      %3288 = vmatpush1.msra.mxu0 %v3125
      %3289 = vmatprep.subr.mxu0 0.0
      %3290 = vmatpush1.msra.mxu0 %v3126
      %3291 = vmatprep.mubr.f32.mxu0 %v3000
      %3292 = vmatmul.mubr.f32.gmra.mrb[0].mxu0 %v2999
      %v3293 = vpop.f32.mrb[0].mxu0
      %v3294 = vadd.f32 0.0, %v3293
      %v3295 = vpop.f32.mrb[0].mxu0
      %3296 = vmatprep.mubr.f32.mxu0 %v3003
      %3297 = vmatmul.mubr.f32.gmra.mrb[0].mxu0 %v3002
      %v3298 = vpop.f32.mrb[0].mxu0
      %v3299 = vadd.f32 0.0, %v3298
      %v3300 = vpop.f32.mrb[0].mxu0
      %3301 = vmatprep.mubr.f32.mxu0 %v3006
      %3302 = vmatmul.mubr.f32.gmra.mrb[0].mxu0 %v3005
      %v3303 = vpop.f32.mrb[0].mxu0
      %v3304 = vadd.f32 0.0, %v3303
      %v3305 = vpop.f32.mrb[0].mxu0
      %3306 = vmatprep.mubr.f32.mxu0 %v3009
      %3307 = vmatmul.mubr.f32.gmra.mrb[0].mxu0 %v3008
      %v3308 = vpop.f32.mrb[0].mxu0
      %v3309 = vadd.f32 0.0, %v3308
      %v3310 = vpop.f32.mrb[0].mxu0
      %3311 = vmatprep.mubr.f32.mxu0 %v3012
      %3312 = vmatmul.mubr.f32.gmra.mrb[0].mxu0 %v3011
      %v3313 = vpop.f32.mrb[0].mxu0
      %v3314 = vadd.f32 0.0, %v3313
      %v3315 = vpop.f32.mrb[0].mxu0
      %3316 = vmatprep.mubr.f32.mxu0 %v3015
      %3317 = vmatmul.mubr.f32.gmra.mrb[0].mxu0 %v3014
      %v3318 = vpop.f32.mrb[0].mxu0
      %v3319 = vadd.f32 0.0, %v3318
      %v3320 = vpop.f32.mrb[0].mxu0
      %3321 = vmatprep.mubr.f32.mxu0 %v3018
      %3322 = vmatmul.mubr.f32.gmra.mrb[0].mxu0 %v3017
      %v3323 = vpop.f32.mrb[0].mxu0
      %v3324 = vadd.f32 0.0, %v3323
      %v3325 = vpop.f32.mrb[0].mxu0
      %3326 = vmatprep.mubr.f32.mxu0 %v3021
      %3327 = vmatmul.mubr.f32.gmra.mrb[0].mxu0 %v3020
      %v3328 = vpop.f32.mrb[0].mxu0
      %v3329 = vadd.f32 0.0, %v3328
      %v3330 = vpop.f32.mrb[0].mxu0
      %3331 = vmatprep.mubr.f32.mxu0 %v3024
      %3332 = vmatmul.mubr.f32.gmra.mrb[0].mxu0 %v3023
      %v3333 = vpop.f32.mrb[0].mxu0
      %v3334 = vadd.f32 0.0, %v3333
      %v3335 = vpop.f32.mrb[0].mxu0
      %3336 = vmatprep.mubr.f32.mxu0 %v3027
      %3337 = vmatmul.mubr.f32.gmra.mrb[0].mxu0 %v3026
      %v3338 = vpop.f32.mrb[0].mxu0
      %v3339 = vadd.f32 0.0, %v3338
      %v3340 = vpop.f32.mrb[0].mxu0
      %3341 = vmatprep.mubr.f32.mxu0 %v3030
      %3342 = vmatmul.mubr.f32.gmra.mrb[0].mxu0 %v3029
      %v3343 = vpop.f32.mrb[0].mxu0
      %v3344 = vadd.f32 0.0, %v3343
      %v3345 = vpop.f32.mrb[0].mxu0
      %3346 = vmatprep.mubr.f32.mxu0 %v3033
      %3347 = vmatmul.mubr.f32.gmra.mrb[0].mxu0 %v3032
      %v3348 = vpop.f32.mrb[0].mxu0
      %v3349 = vadd.f32 0.0, %v3348
      %v3350 = vpop.f32.mrb[0].mxu0
      %3351 = vmatprep.mubr.f32.mxu0 %v3036
      %3352 = vmatmul.mubr.f32.gmra.mrb[0].mxu0 %v3035
      %v3353 = vpop.f32.mrb[0].mxu0
      %v3354 = vadd.f32 0.0, %v3353
      %v3355 = vpop.f32.mrb[0].mxu0
      %3356 = vmatprep.mubr.f32.mxu0 %v3039
      %3357 = vmatmul.mubr.f32.gmra.mrb[0].mxu0 %v3038
      %v3358 = vpop.f32.mrb[0].mxu0
      %v3359 = vadd.f32 0.0, %v3358
      %v3360 = vpop.f32.mrb[0].mxu0
      %3361 = vmatprep.mubr.f32.mxu0 %v3042
      %3362 = vmatmul.mubr.f32.gmra.mrb[0].mxu0 %v3041
      %v3363 = vpop.f32.mrb[0].mxu0
      %v3364 = vadd.f32 0.0, %v3363
      %v3365 = vpop.f32.mrb[0].mxu0
      %3366 = vmatprep.mubr.f32.mxu0 %v3045
      %3367 = vmatmul.mubr.f32.gmra.mrb[0].mxu0 %v3044
      %v3368 = vpop.f32.mrb[0].mxu0
      %v3369 = vadd.f32 0.0, %v3368
      %v3370 = vpop.f32.mrb[0].mxu0
      %3371 = vmatprep.mubr.f32.mxu0 %v3048
      %3372 = vmatmul.mubr.f32.gmra.mrb[0].mxu0 %v3047
      %v3373 = vpop.f32.mrb[0].mxu0
      %v3374 = vadd.f32 0.0, %v3373
      %v3375 = vpop.f32.mrb[0].mxu0
      %3376 = vmatprep.mubr.f32.mxu0 %v3051
      %3377 = vmatmul.mubr.f32.gmra.mrb[0].mxu0 %v3050
      %v3378 = vpop.f32.mrb[0].mxu0
      %v3379 = vadd.f32 0.0, %v3378
      %v3380 = vpop.f32.mrb[0].mxu0
      %3381 = vmatprep.mubr.f32.mxu0 %v3054
      %3382 = vmatmul.mubr.f32.gmra.mrb[0].mxu0 %v3053
      %v3383 = vpop.f32.mrb[0].mxu0
      %v3384 = vadd.f32 0.0, %v3383
      %v3385 = vpop.f32.mrb[0].mxu0
      %3386 = vmatprep.mubr.f32.mxu0 %v3057
      %3387 = vmatmul.mubr.f32.gmra.mrb[0].mxu0 %v3056
      %v3388 = vpop.f32.mrb[0].mxu0
      %v3389 = vadd.f32 0.0, %v3388
      %v3390 = vpop.f32.mrb[0].mxu0
      %3391 = vmatprep.mubr.f32.mxu0 %v3060
      %3392 = vmatmul.mubr.f32.gmra.mrb[0].mxu0 %v3059
      %v3393 = vpop.f32.mrb[0].mxu0
      %v3394 = vadd.f32 0.0, %v3393
      %v3395 = vpop.f32.mrb[0].mxu0
      %3396 = vmatprep.mubr.f32.mxu0 %v3063
      %3397 = vmatmul.mubr.f32.gmra.mrb[0].mxu0 %v3062
      %v3398 = vpop.f32.mrb[0].mxu0
      %v3399 = vadd.f32 0.0, %v3398
      %v3400 = vpop.f32.mrb[0].mxu0
      %3401 = vmatprep.mubr.f32.mxu0 %v3066
      %3402 = vmatmul.mubr.f32.gmra.mrb[0].mxu0 %v3065
      %v3403 = vpop.f32.mrb[0].mxu0
      %v3404 = vadd.f32 0.0, %v3403
      %v3405 = vpop.f32.mrb[0].mxu0
      %3406 = vmatprep.mubr.f32.mxu0 %v3069
      %3407 = vmatmul.mubr.f32.gmra.mrb[0].mxu0 %v3068
      %v3408 = vpop.f32.mrb[0].mxu0
      %v3409 = vadd.f32 0.0, %v3408
      %v3410 = vpop.f32.mrb[0].mxu0
      %3411 = vmatprep.mubr.f32.mxu0 %v3072
      %3412 = vmatmul.mubr.f32.gmra.mrb[0].mxu0 %v3071
      %v3413 = vpop.f32.mrb[0].mxu0
      %v3414 = vadd.f32 0.0, %v3413
      %v3415 = vpop.f32.mrb[0].mxu0
      %3416 = vmatprep.mubr.f32.mxu0 %v3075
      %3417 = vmatmul.mubr.f32.gmra.mrb[0].mxu0 %v3074
      %v3418 = vpop.f32.mrb[0].mxu0
      %v3419 = vadd.f32 0.0, %v3418
      %v3420 = vpop.f32.mrb[0].mxu0
      %3421 = vmatprep.mubr.f32.mxu0 %v3078
      %3422 = vmatmul.mubr.f32.gmra.mrb[0].mxu0 %v3077
      %v3423 = vpop.f32.mrb[0].mxu0
      %v3424 = vadd.f32 0.0, %v3423
      %v3425 = vpop.f32.mrb[0].mxu0
      %3426 = vmatprep.mubr.f32.mxu0 %v3081
      %3427 = vmatmul.mubr.f32.gmra.mrb[0].mxu0 %v3080
      %v3428 = vpop.f32.mrb[0].mxu0
      %v3429 = vadd.f32 0.0, %v3428
      %v3430 = vpop.f32.mrb[0].mxu0
      %3431 = vmatprep.mubr.f32.mxu0 %v3084
      %3432 = vmatmul.mubr.f32.gmra.mrb[0].mxu0 %v3083
      %v3433 = vpop.f32.mrb[0].mxu0
      %v3434 = vadd.f32 0.0, %v3433
      %v3435 = vpop.f32.mrb[0].mxu0
      %3436 = vmatprep.mubr.f32.mxu0 %v3087
      %3437 = vmatmul.mubr.f32.gmra.mrb[0].mxu0 %v3086
      %v3438 = vpop.f32.mrb[0].mxu0
      %v3439 = vadd.f32 0.0, %v3438
      %v3440 = vpop.f32.mrb[0].mxu0
      %3441 = vmatprep.mubr.f32.mxu0 %v3090
      %3442 = vmatmul.mubr.f32.gmra.mrb[0].mxu0 %v3089
      %v3443 = vpop.f32.mrb[0].mxu0
      %v3444 = vadd.f32 0.0, %v3443
      %v3445 = vpop.f32.mrb[0].mxu0
      %3446 = vmatprep.mubr.f32.mxu0 %v3093
      %3447 = vmatmul.mubr.f32.gmra.mrb[0].mxu0 %v3092
      %v3448 = vpop.f32.mrb[0].mxu0
      %v3449 = vadd.f32 0.0, %v3448
      %v3450 = vpop.f32.mrb[0].mxu0
      %3451 = vdwg.mxu0
      %3452 = vmatprep.subr.mxu0 0.0
      %3453 = vmatpush1.msra.mxu0 %v3127
      %3454 = vmatprep.subr.mxu0 0.0
      %3455 = vmatpush1.msra.mxu0 %v3128
      %3456 = vmatprep.subr.mxu0 0.0
      %3457 = vmatpush1.msra.mxu0 %v3129
      %3458 = vmatprep.subr.mxu0 0.0
      %3459 = vmatpush1.msra.mxu0 %v3130
      %3460 = vmatprep.subr.mxu0 0.0
      %3461 = vmatpush1.msra.mxu0 0.0
      %3462 = vmatprep.subr.mxu0 0.0
      %3463 = vmatpush1.msra.mxu0 0.0
      %3464 = vmatprep.subr.mxu0 0.0
      %3465 = vmatpush1.msra.mxu0 0.0
      %3466 = vmatprep.subr.mxu0 0.0
      %3467 = vmatpush1.msra.mxu0 0.0
      %3468 = vmatprep.subr.mxu0 0.0
      %3469 = vmatpush1.msra.mxu0 0.0
      %3470 = vmatprep.subr.mxu0 0.0
      %3471 = vmatpush1.msra.mxu0 0.0
      %3472 = vmatprep.subr.mxu0 0.0
      %3473 = vmatpush1.msra.mxu0 0.0
      %3474 = vmatprep.subr.mxu0 0.0
      %3475 = vmatpush1.msra.mxu0 0.0
      %3476 = vmatprep.subr.mxu0 0.0
      %3477 = vmatpush1.msra.mxu0 0.0
      %3478 = vmatprep.subr.mxu0 0.0
      %3479 = vmatpush1.msra.mxu0 0.0
      %3480 = vmatprep.subr.mxu0 0.0
      %3481 = vmatpush1.msra.mxu0 0.0
      %3482 = vmatprep.subr.mxu0 0.0
      %3483 = vmatpush1.msra.mxu0 0.0
      %3484 = vmatprep.subr.mxu0 0.0
      %3485 = vmatpush1.msra.mxu0 0.0
      %3486 = vmatprep.subr.mxu0 0.0
      %3487 = vmatpush1.msra.mxu0 0.0
      %3488 = vmatprep.subr.mxu0 0.0
      %3489 = vmatpush1.msra.mxu0 0.0
      %3490 = vmatprep.subr.mxu0 0.0
      %3491 = vmatpush1.msra.mxu0 0.0
      %3492 = vmatprep.subr.mxu0 0.0
      %3493 = vmatpush1.msra.mxu0 0.0
      %3494 = vmatprep.subr.mxu0 0.0
      %3495 = vmatpush1.msra.mxu0 0.0
      %3496 = vmatprep.subr.mxu0 0.0
      %3497 = vmatpush1.msra.mxu0 0.0
      %3498 = vmatprep.subr.mxu0 0.0
      %3499 = vmatpush1.msra.mxu0 0.0
      %3500 = vmatprep.subr.mxu0 0.0
      %3501 = vmatpush1.msra.mxu0 0.0
      %3502 = vmatprep.subr.mxu0 0.0
      %3503 = vmatpush1.msra.mxu0 0.0
      %3504 = vmatprep.subr.mxu0 0.0
      %3505 = vmatpush1.msra.mxu0 0.0
      %3506 = vmatprep.subr.mxu0 0.0
      %3507 = vmatpush1.msra.mxu0 0.0
      %3508 = vmatprep.subr.mxu0 0.0
      %3509 = vmatpush1.msra.mxu0 0.0
      %3510 = vmatprep.subr.mxu0 0.0
      %3511 = vmatpush1.msra.mxu0 0.0
      %3512 = vmatprep.subr.mxu0 0.0
      %3513 = vmatpush1.msra.mxu0 0.0
      %3514 = vmatprep.subr.mxu0 0.0
      %3515 = vmatpush1.msra.mxu0 0.0
      %3516 = vmatprep.mubr.f32.mxu0 0.0
      %3517 = vmatmul.mubr.f32.gmra.mrb[0].mxu0 %v3132
      %v3518 = vpop.f32.mrb[0].mxu0
      %v3519 = vadd.f32 %v3294, %v3518
      %v3520 = vpop.f32.mrb[0].mxu0
      %3521 = vmatprep.mubr.f32.mxu0 0.0
      %3522 = vmatmul.mubr.f32.gmra.mrb[0].mxu0 %v3135
      %v3523 = vpop.f32.mrb[0].mxu0
      %v3524 = vadd.f32 %v3299, %v3523
      %v3525 = vpop.f32.mrb[0].mxu0
      %3526 = vmatprep.mubr.f32.mxu0 0.0
      %3527 = vmatmul.mubr.f32.gmra.mrb[0].mxu0 %v3138
      %v3528 = vpop.f32.mrb[0].mxu0
      %v3529 = vadd.f32 %v3304, %v3528
      %v3530 = vpop.f32.mrb[0].mxu0
      %3531 = vmatprep.mubr.f32.mxu0 0.0
      %3532 = vmatmul.mubr.f32.gmra.mrb[0].mxu0 %v3141
      %v3533 = vpop.f32.mrb[0].mxu0
      %v3534 = vadd.f32 %v3309, %v3533
      %v3535 = vpop.f32.mrb[0].mxu0
      %3536 = vmatprep.mubr.f32.mxu0 0.0
      %3537 = vmatmul.mubr.f32.gmra.mrb[0].mxu0 %v3144
      %v3538 = vpop.f32.mrb[0].mxu0
      %v3539 = vadd.f32 %v3314, %v3538
      %v3540 = vpop.f32.mrb[0].mxu0
      %3541 = vmatprep.mubr.f32.mxu0 0.0
      %3542 = vmatmul.mubr.f32.gmra.mrb[0].mxu0 %v3147
      %v3543 = vpop.f32.mrb[0].mxu0
      %v3544 = vadd.f32 %v3319, %v3543
      %v3545 = vpop.f32.mrb[0].mxu0
      %3546 = vmatprep.mubr.f32.mxu0 0.0
      %3547 = vmatmul.mubr.f32.gmra.mrb[0].mxu0 %v3150
      %v3548 = vpop.f32.mrb[0].mxu0
      %v3549 = vadd.f32 %v3324, %v3548
      %v3550 = vpop.f32.mrb[0].mxu0
      %3551 = vmatprep.mubr.f32.mxu0 0.0
      %3552 = vmatmul.mubr.f32.gmra.mrb[0].mxu0 %v3153
      %v3553 = vpop.f32.mrb[0].mxu0
      %v3554 = vadd.f32 %v3329, %v3553
      %v3555 = vpop.f32.mrb[0].mxu0
      %3556 = vmatprep.mubr.f32.mxu0 0.0
      %3557 = vmatmul.mubr.f32.gmra.mrb[0].mxu0 %v3156
      %v3558 = vpop.f32.mrb[0].mxu0
      %v3559 = vadd.f32 %v3334, %v3558
      %v3560 = vpop.f32.mrb[0].mxu0
      %3561 = vmatprep.mubr.f32.mxu0 0.0
      %3562 = vmatmul.mubr.f32.gmra.mrb[0].mxu0 %v3159
      %v3563 = vpop.f32.mrb[0].mxu0
      %v3564 = vadd.f32 %v3339, %v3563
      %v3565 = vpop.f32.mrb[0].mxu0
      %3566 = vmatprep.mubr.f32.mxu0 0.0
      %3567 = vmatmul.mubr.f32.gmra.mrb[0].mxu0 %v3162
      %v3568 = vpop.f32.mrb[0].mxu0
      %v3569 = vadd.f32 %v3344, %v3568
      %v3570 = vpop.f32.mrb[0].mxu0
      %3571 = vmatprep.mubr.f32.mxu0 0.0
      %3572 = vmatmul.mubr.f32.gmra.mrb[0].mxu0 %v3165
      %v3573 = vpop.f32.mrb[0].mxu0
      %v3574 = vadd.f32 %v3349, %v3573
      %v3575 = vpop.f32.mrb[0].mxu0
      %3576 = vmatprep.mubr.f32.mxu0 0.0
      %3577 = vmatmul.mubr.f32.gmra.mrb[0].mxu0 %v3168
      %v3578 = vpop.f32.mrb[0].mxu0
      %v3579 = vadd.f32 %v3354, %v3578
      %v3580 = vpop.f32.mrb[0].mxu0
      %3581 = vmatprep.mubr.f32.mxu0 0.0
      %3582 = vmatmul.mubr.f32.gmra.mrb[0].mxu0 %v3171
      %v3583 = vpop.f32.mrb[0].mxu0
      %v3584 = vadd.f32 %v3359, %v3583
      %v3585 = vpop.f32.mrb[0].mxu0
      %3586 = vmatprep.mubr.f32.mxu0 0.0
      %3587 = vmatmul.mubr.f32.gmra.mrb[0].mxu0 %v3174
      %v3588 = vpop.f32.mrb[0].mxu0
      %v3589 = vadd.f32 %v3364, %v3588
      %v3590 = vpop.f32.mrb[0].mxu0
      %3591 = vmatprep.mubr.f32.mxu0 0.0
      %3592 = vmatmul.mubr.f32.gmra.mrb[0].mxu0 %v3177
      %v3593 = vpop.f32.mrb[0].mxu0
      %v3594 = vadd.f32 %v3369, %v3593
      %v3595 = vpop.f32.mrb[0].mxu0
      %3596 = vmatprep.mubr.f32.mxu0 0.0
      %3597 = vmatmul.mubr.f32.gmra.mrb[0].mxu0 %v3180
      %v3598 = vpop.f32.mrb[0].mxu0
      %v3599 = vadd.f32 %v3374, %v3598
      %v3600 = vpop.f32.mrb[0].mxu0
      %3601 = vmatprep.mubr.f32.mxu0 0.0
      %3602 = vmatmul.mubr.f32.gmra.mrb[0].mxu0 %v3183
      %v3603 = vpop.f32.mrb[0].mxu0
      %v3604 = vadd.f32 %v3379, %v3603
      %v3605 = vpop.f32.mrb[0].mxu0
      %3606 = vmatprep.mubr.f32.mxu0 0.0
      %3607 = vmatmul.mubr.f32.gmra.mrb[0].mxu0 %v3186
      %v3608 = vpop.f32.mrb[0].mxu0
      %v3609 = vadd.f32 %v3384, %v3608
      %v3610 = vpop.f32.mrb[0].mxu0
      %3611 = vmatprep.mubr.f32.mxu0 0.0
      %3612 = vmatmul.mubr.f32.gmra.mrb[0].mxu0 %v3189
      %v3613 = vpop.f32.mrb[0].mxu0
      %v3614 = vadd.f32 %v3389, %v3613
      %v3615 = vpop.f32.mrb[0].mxu0
      %3616 = vmatprep.mubr.f32.mxu0 0.0
      %3617 = vmatmul.mubr.f32.gmra.mrb[0].mxu0 %v3192
      %v3618 = vpop.f32.mrb[0].mxu0
      %v3619 = vadd.f32 %v3394, %v3618
      %v3620 = vpop.f32.mrb[0].mxu0
      %3621 = vmatprep.mubr.f32.mxu0 0.0
      %3622 = vmatmul.mubr.f32.gmra.mrb[0].mxu0 %v3195
      %v3623 = vpop.f32.mrb[0].mxu0
      %v3624 = vadd.f32 %v3399, %v3623
      %v3625 = vpop.f32.mrb[0].mxu0
      %3626 = vmatprep.mubr.f32.mxu0 0.0
      %3627 = vmatmul.mubr.f32.gmra.mrb[0].mxu0 %v3198
      %v3628 = vpop.f32.mrb[0].mxu0
      %v3629 = vadd.f32 %v3404, %v3628
      %v3630 = vpop.f32.mrb[0].mxu0
      %3631 = vmatprep.mubr.f32.mxu0 0.0
      %3632 = vmatmul.mubr.f32.gmra.mrb[0].mxu0 %v3201
      %v3633 = vpop.f32.mrb[0].mxu0
      %v3634 = vadd.f32 %v3409, %v3633
      %v3635 = vpop.f32.mrb[0].mxu0
      %3636 = vmatprep.mubr.f32.mxu0 0.0
      %3637 = vmatmul.mubr.f32.gmra.mrb[0].mxu0 %v3204
      %v3638 = vpop.f32.mrb[0].mxu0
      %v3639 = vadd.f32 %v3414, %v3638
      %v3640 = vpop.f32.mrb[0].mxu0
      %3641 = vmatprep.mubr.f32.mxu0 0.0
      %3642 = vmatmul.mubr.f32.gmra.mrb[0].mxu0 %v3207
      %v3643 = vpop.f32.mrb[0].mxu0
      %v3644 = vadd.f32 %v3419, %v3643
      %v3645 = vpop.f32.mrb[0].mxu0
      %3646 = vmatprep.mubr.f32.mxu0 0.0
      %3647 = vmatmul.mubr.f32.gmra.mrb[0].mxu0 %v3210
      %v3648 = vpop.f32.mrb[0].mxu0
      %v3649 = vadd.f32 %v3424, %v3648
      %v3650 = vpop.f32.mrb[0].mxu0
      %3651 = vmatprep.mubr.f32.mxu0 0.0
      %3652 = vmatmul.mubr.f32.gmra.mrb[0].mxu0 %v3213
      %v3653 = vpop.f32.mrb[0].mxu0
      %v3654 = vadd.f32 %v3429, %v3653
      %v3655 = vpop.f32.mrb[0].mxu0
      %3656 = vmatprep.mubr.f32.mxu0 0.0
      %3657 = vmatmul.mubr.f32.gmra.mrb[0].mxu0 %v3216
      %v3658 = vpop.f32.mrb[0].mxu0
      %v3659 = vadd.f32 %v3434, %v3658
      %v3660 = vpop.f32.mrb[0].mxu0
      %3661 = vmatprep.mubr.f32.mxu0 0.0
      %3662 = vmatmul.mubr.f32.gmra.mrb[0].mxu0 %v3219
      %v3663 = vpop.f32.mrb[0].mxu0
      %v3664 = vadd.f32 %v3439, %v3663
      %v3665 = vpop.f32.mrb[0].mxu0
      %3666 = vmatprep.mubr.f32.mxu0 0.0
      %3667 = vmatmul.mubr.f32.gmra.mrb[0].mxu0 %v3222
      %v3668 = vpop.f32.mrb[0].mxu0
      %v3669 = vadd.f32 %v3444, %v3668
      %v3670 = vpop.f32.mrb[0].mxu0
      %3671 = vmatprep.mubr.f32.mxu0 0.0
      %3672 = vmatmul.mubr.f32.gmra.mrb[0].mxu0 %v3225
      %v3673 = vpop.f32.mrb[0].mxu0
      %v3674 = vadd.f32 %v3449, %v3673
      %v3675 = vpop.f32.mrb[0].mxu0
      %3676 = vdwg.mxu0
      %vm3677 = vcmask 130048
      %3678 = vst.msk [vmem:[%s145] sm:$0xff] %vm3677, %v3519
      %3679 = vst.msk [vmem:[%s145 + $0x8] sm:$0xff] %vm3677, %v3524
      %3680 = vst.msk [vmem:[%s145 + $0x10] sm:$0xff] %vm3677, %v3529
      %3681 = vst.msk [vmem:[%s145 + $0x18] sm:$0xff] %vm3677, %v3534
      %3682 = vst.msk [vmem:[%s145 + $0x20] sm:$0xff] %vm3677, %v3539
      %3683 = vst.msk [vmem:[%s145 + $0x28] sm:$0xff] %vm3677, %v3544
      %3684 = vst.msk [vmem:[%s145 + $0x30] sm:$0xff] %vm3677, %v3549
      %3685 = vst.msk [vmem:[%s145 + $0x38] sm:$0xff] %vm3677, %v3554
      %3686 = vst.msk [vmem:[%s145 + $0x40] sm:$0xff] %vm3677, %v3559
      %3687 = vst.msk [vmem:[%s145 + $0x48] sm:$0xff] %vm3677, %v3564
      %3688 = vst.msk [vmem:[%s145 + $0x50] sm:$0xff] %vm3677, %v3569
      %3689 = vst.msk [vmem:[%s145 + $0x58] sm:$0xff] %vm3677, %v3574
      %3690 = vst.msk [vmem:[%s145 + $0x60] sm:$0xff] %vm3677, %v3579
      %3691 = vst.msk [vmem:[%s145 + $0x68] sm:$0xff] %vm3677, %v3584
      %3692 = vst.msk [vmem:[%s145 + $0x70] sm:$0xff] %vm3677, %v3589
      %3693 = vst.msk [vmem:[%s145 + $0x78] sm:$0xff] %vm3677, %v3594
      %3694 = vst.msk [vmem:[%s145 + $0x80] sm:$0xff] %vm3677, %v3599
      %3695 = vst.msk [vmem:[%s145 + $0x88] sm:$0xff] %vm3677, %v3604
      %3696 = vst.msk [vmem:[%s145 + $0x90] sm:$0xff] %vm3677, %v3609
      %3697 = vst.msk [vmem:[%s145 + $0x98] sm:$0xff] %vm3677, %v3614
      %3698 = vst.msk [vmem:[%s145 + $0xa0] sm:$0xff] %vm3677, %v3619
      %3699 = vst.msk [vmem:[%s145 + $0xa8] sm:$0xff] %vm3677, %v3624
      %3700 = vst.msk [vmem:[%s145 + $0xb0] sm:$0xff] %vm3677, %v3629
      %3701 = vst.msk [vmem:[%s145 + $0xb8] sm:$0xff] %vm3677, %v3634
      %3702 = vst.msk [vmem:[%s145 + $0xc0] sm:$0xff] %vm3677, %v3639
      %3703 = vst.msk [vmem:[%s145 + $0xc8] sm:$0xff] %vm3677, %v3644
      %3704 = vst.msk [vmem:[%s145 + $0xd0] sm:$0xff] %vm3677, %v3649
      %3705 = vst.msk [vmem:[%s145 + $0xd8] sm:$0xff] %vm3677, %v3654
      %3706 = vst.msk [vmem:[%s145 + $0xe0] sm:$0xff] %vm3677, %v3659
      %3707 = vst.msk [vmem:[%s145 + $0xe8] sm:$0xff] %vm3677, %v3664
      %3708 = vst.msk [vmem:[%s145 + $0xf0] sm:$0xff] %vm3677, %v3669
      %3709 = vst.msk [vmem:[%s145 + $0xf8] sm:$0xff] %vm3677, %v3674
      %s3710 = smul.u32 32, %s13
      %p3711 = scmp.lt.s32.totalorder %s3710, 63
      %s3712 = scalar_select %p3711, %s3710, 63
      %s3713 = smul.addr %s3712, 8
      %s3714 = scalar_lea.vmem %s2, %s3713
      // Predicated region
      $region29: #{linear_kan.1} parent=27 // pred_check
        %p3715 = pneg %p78
      $region30: #{linear_kan.1} parent=27 // pred_check_branch
        %3717 = sbr.rel (%p3715) target = $region32
      $region31: #{linear_kan.1} parent=27 // pred_region
        %s3718 = smul.u32 32, %s13
      $region32: #{linear_kan.1} parent=27 // pred_fallthru
        _
    $region28: #{linear_kan.1} parent=5 // pred_fallthru
      _
    %p3719 = scmp.le.s32.totalorder 2, %s8
    // Predicated region
    $region33: #{linear_kan.1} parent=5 // pred_check
      %p3720 = pneg %p3719
    $region34: #{linear_kan.1} parent=5 // pred_check_branch
      %3722 = sbr.rel (%p3720) target = $region36
    $region35: #{linear_kan.1} parent=5 // pred_region
      %s3723 = ssub.s32 %s8, 2
      // Predicated region
      $region37: #{linear_kan.1} parent=35 // pred_check
        %p3724 = pneg %p84
      $region38: #{linear_kan.1} parent=35 // pred_check_branch
        %3726 = sbr.rel (%p3724) target = $region40
      $region39: #{linear_kan.1} parent=35 // pred_region
        %s3727 = smul.u32 32, %s14
        %p3728 = scmp.lt.s32.totalorder %s3727, 63
        %s3729 = scalar_select %p3728, %s3727, 63
        %s3730 = smul.addr %s3729, 8
        %s3731 = scalar_lea.vmem %s2, %s3730
      $region40: #{linear_kan.1} parent=35 // pred_fallthru
        _
    $region36: #{linear_kan.1} parent=5 // pred_fallthru
      _
  $region6: #{linear_kan.1} parent=0 // loop_footer
    %s12 = sadd.s32 1, %s8
  $region7: #{linear_kan.1} parent=0 // loop_footer_branch
    %7 = sbr.rel target = $region3
  $region8: #{linear_kan.1} parent=0 // loop_exit
    _

</llo_original>
